<compile_context>
chip_gen: v5e
topology: v5e:2x2
jax: 0.10.0
libtpu: 0.0.40
codegen_flags: <defaults>
</compile_context>

<pallas_src>
import functools

import jax
import jax.numpy as jnp
from jax.experimental import pallas as pl
from jax.experimental.pallas import tpu as pltpu

# ---------------- small synthetic config (scaled-down TransformerPose) ----------------
IMG = 16          # image size (256 in reference)
PATCH = 4         # patch size (32 in reference)
IN_CH = 3
DIM = 32          # transformer dim == self.inplanes (1024 in reference)
DEPTH = 2         # 6 in reference
HEADS = 4         # 16 in reference
DIM_HEAD = DIM // HEADS
INNER = HEADS * DIM_HEAD
MLP_DIM = 64      # 2048 in reference
GRID = IMG // PATCH
NUM_PATCHES = GRID * GRID
TOKENS = NUM_PATCHES + 1
DECONV_FILTERS = [32, 32]     # extra.NUM_DECONV_FILTERS
DECONV_KERNELS = [4, 4]       # extra.NUM_DECONV_KERNELS
NUM_JOINTS = 8                # cfg.MODEL.NUM_JOINTS
FINAL_CONV_KERNEL = 1         # -> 1x1 conv, padding 0
DECONV_WITH_BIAS = False
PATCH_DIM = PATCH * PATCH * IN_CH

LN_EPS = 1e-5
BN_EPS = 1e-5
MXU_DTYPE = jnp.bfloat16      # MXU operand dtype; accumulation stays f32

# TODO(synk): polyphase decomposition below is specific to deconv kernel=4, stride=2, pad=1
#             (the config used here); kernel 3 / 2 cfgs would need their own tap tables.
assert all(k == 4 for k in DECONV_KERNELS)
assert FINAL_CONV_KERNEL == 1


# ------------------------------- in-kernel math helpers --------------------------------
def _layernorm(x, g, b):
    mu = jnp.mean(x, axis=-1, keepdims=True)
    var = jnp.mean(jnp.square(x - mu), axis=-1, keepdims=True)
    return (x - mu) * jax.lax.rsqrt(var + LN_EPS) * g + b


def _erf(z):
    # Abramowitz & Stegun 7.1.26, max abs error ~1.5e-7 -> matches exact-erf GELU at f32.
    a1, a2, a3, a4, a5 = 0.254829592, -0.284496736, 1.421413741, -1.453152027, 1.061405429
    p = 0.3275911
    az = jnp.abs(z)
    t = 1.0 / (1.0 + p * az)
    poly = ((((a5 * t + a4) * t + a3) * t + a2) * t + a1) * t
    y = 1.0 - poly * jnp.exp(-az * az)
    return jnp.where(z >= 0, y, -y)


def _gelu(x):
    return 0.5 * x * (1.0 + _erf(x * 0.7071067811865476))


# ---------------------------------- Pallas kernels --------------------------------------
def _patch_embed_kernel(x_ref, w_ref, b_ref, pos_ref, o_ref):
    """Patch embedding linear + bias + positional embedding, one batch element per step."""
    y = jnp.dot(x_ref[0].astype(MXU_DTYPE), w_ref[...],
                preferred_element_type=jnp.float32)
    o_ref[0] = y + b_ref[...] + pos_ref[...]


def _attn_block_kernel(h_ref, g_ref, b_ref, wqkv_ref, wo_ref, bo_ref, o_ref):
    """Fused pre-norm attention block for one batch element:
       LN1 -> QKV proj -> per-head softmax attention -> output proj -> residual."""
    x = h_ref[0]                                             # (T, DIM) f32
    xn = _layernorm(x, g_ref[...], b_ref[...])
    qkv = jnp.dot(xn.astype(MXU_DTYPE), wqkv_ref[...],
                  preferred_element_type=jnp.float32)        # (T, 3*INNER) f32
    scale = DIM_HEAD ** -0.5
    acc = x + bo_ref[...]                                    # residual + out-proj bias
    for hd in range(HEADS):                                  # static unroll over heads
        lo = hd * DIM_HEAD
        q = qkv[:, lo:lo + DIM_HEAD]
        k = qkv[:, INNER + lo:INNER + lo + DIM_HEAD]
        v = qkv[:, 2 * INNER + lo:2 * INNER + lo + DIM_HEAD]
        s = jnp.dot(q, k.T, preferred_element_type=jnp.float32) * scale   # (T, T)
        s = s - jnp.max(s, axis=-1, keepdims=True)
        p = jnp.exp(s)
        p = p * pl.reciprocal(jnp.sum(p, axis=-1, keepdims=True), approx=True)
        oh = jnp.dot(p, v, preferred_element_type=jnp.float32)            # (T, dh)
        # output projection decomposed per head: concat(oh) @ Wo == sum_h oh @ Wo[h-rows]
        acc = acc + jnp.dot(oh.astype(MXU_DTYPE), wo_ref[lo:lo + DIM_HEAD, :],
                            preferred_element_type=jnp.float32)
    o_ref[0] = acc


def _ff_block_kernel(h_ref, g_ref, b_ref, w1_ref, b1_ref, w2_ref, b2_ref, o_ref):
    """Fused pre-norm MLP block: LN2 -> FF1 -> GELU -> FF2 -> residual."""
    x = h_ref[0]
    xn = _layernorm(x, g_ref[...], b_ref[...])
    f = jnp.dot(xn.astype(MXU_DTYPE), w1_ref[...],
                preferred_element_type=jnp.float32) + b1_ref[...]
    f = _gelu(f)
    y = jnp.dot(f.astype(MXU_DTYPE), w2_ref[...],
                preferred_element_type=jnp.float32) + b2_ref[...]
    o_ref[0] = x + y


def _layernorm_kernel(x_ref, g_ref, b_ref, o_ref):
    o_ref[...] = _layernorm(x_ref[...], g_ref[...], b_ref[...])


def _deconv_bn_relu_kernel(p_ref, w_ref, b_ref, o_ref):
    """Polyphase deconv matmul with BatchNorm folded into (w, b) and fused ReLU."""
    y = jnp.dot(p_ref[0].astype(MXU_DTYPE), w_ref[0], preferred_element_type=jnp.float32)
    o_ref[0] = jnp.maximum(y + b_ref[0], 0.0)


def _deconv_bn_relu_final_kernel(p_ref, w_ref, b_ref, wf_ref, bf_ref, o_ref):
    """Last deconv stage with the final 1x1 conv fused into the epilogue."""
    y = jnp.dot(p_ref[0].astype(MXU_DTYPE), w_ref[0], preferred_element_type=jnp.float32)
    y = jnp.maximum(y + b_ref[0], 0.0)
    o_ref[0] = jnp.dot(y, wf_ref[...], preferred_element_type=jnp.float32) + bf_ref[...]


# ----------------------------------- wrappers -------------------------------------------
_PAR1 = pltpu.CompilerParams(dimension_semantics=("parallel",))
_PAR2 = pltpu.CompilerParams(dimension_semantics=("parallel", "parallel"))


def patch_embed(xp, w, b, pos_patch):
    B = xp.shape[0]
    return pl.pallas_call(
        _patch_embed_kernel,
        out_shape=jax.ShapeDtypeStruct((B, NUM_PATCHES, DIM), jnp.float32),
        grid=(B,),
        in_specs=[
            pl.BlockSpec((1, NUM_PATCHES, PATCH_DIM), lambda i: (i, 0, 0)),
            pl.BlockSpec((PATCH_DIM, DIM), lambda i: (0, 0)),
            pl.BlockSpec((1, DIM), lambda i: (0, 0)),
            pl.BlockSpec((NUM_PATCHES, DIM), lambda i: (0, 0)),
        ],
        out_specs=pl.BlockSpec((1, NUM_PATCHES, DIM), lambda i: (i, 0, 0)),
        compiler_params=_PAR1,
    )(xp.astype(jnp.float32), w.astype(MXU_DTYPE),
      b.reshape(1, DIM).astype(jnp.float32), pos_patch.astype(jnp.float32))


def attn_block(h, layer):
    B = h.shape[0]
    return pl.pallas_call(
        _attn_block_kernel,
        out_shape=jax.ShapeDtypeStruct((B, TOKENS, DIM), jnp.float32),
        grid=(B,),
        in_specs=[
            pl.BlockSpec((1, TOKENS, DIM), lambda i: (i, 0, 0)),
            pl.BlockSpec((1, DIM), lambda i: (0, 0)),
            pl.BlockSpec((1, DIM), lambda i: (0, 0)),
            pl.BlockSpec((DIM, 3 * INNER), lambda i: (0, 0)),
            pl.BlockSpec((INNER, DIM), lambda i: (0, 0)),
            pl.BlockSpec((1, DIM), lambda i: (0, 0)),
        ],
        out_specs=pl.BlockSpec((1, TOKENS, DIM), lambda i: (i, 0, 0)),
        compiler_params=_PAR1,
    )(h, layer["ln1_g"].reshape(1, DIM), layer["ln1_b"].reshape(1, DIM),
      layer["qkv_w"].astype(MXU_DTYPE), layer["out_w"].astype(MXU_DTYPE),
      layer["out_b"].reshape(1, DIM))


def ff_block(h, layer):
    B = h.shape[0]
    return pl.pallas_call(
        _ff_block_kernel,
        out_shape=jax.ShapeDtypeStruct((B, TOKENS, DIM), jnp.float32),
        grid=(B,),
        in_specs=[
            pl.BlockSpec((1, TOKENS, DIM), lambda i: (i, 0, 0)),
            pl.BlockSpec((1, DIM), lambda i: (0, 0)),
            pl.BlockSpec((1, DIM), lambda i: (0, 0)),
            pl.BlockSpec((DIM, MLP_DIM), lambda i: (0, 0)),
            pl.BlockSpec((1, MLP_DIM), lambda i: (0, 0)),
            pl.BlockSpec((MLP_DIM, DIM), lambda i: (0, 0)),
            pl.BlockSpec((1, DIM), lambda i: (0, 0)),
        ],
        out_specs=pl.BlockSpec((1, TOKENS, DIM), lambda i: (i, 0, 0)),
        compiler_params=_PAR1,
    )(h, layer["ln2_g"].reshape(1, DIM), layer["ln2_b"].reshape(1, DIM),
      layer["ff1_w"].astype(MXU_DTYPE), layer["ff1_b"].reshape(1, MLP_DIM),
      layer["ff2_w"].astype(MXU_DTYPE), layer["ff2_b"].reshape(1, DIM))


def final_layernorm(h2d, g, b):
    M, D = h2d.shape
    return pl.pallas_call(
        _layernorm_kernel,
        out_shape=jax.ShapeDtypeStruct((M, D), jnp.float32),
        grid=(1,),
        in_specs=[pl.BlockSpec((M, D), lambda i: (0, 0)),
                  pl.BlockSpec((1, D), lambda i: (0, 0)),
                  pl.BlockSpec((1, D), lambda i: (0, 0))],
        out_specs=pl.BlockSpec((M, D), lambda i: (0, 0)),
    )(h2d, g.reshape(1, D), b.reshape(1, D))


def _row_tile(m):
    if m <= 512:
        return m
    for t in (512, 256, 128, 64, 32, 16, 8):
        if m % t == 0:
            return t
    return m


def _polyphase_patches_and_weights(x_nhwc, w_deconv):
    """ConvTranspose2d(k=4, s=2, p=1) as 4 output-parity stride-1 convs with 2x2 taps.
    Output parity (py, px): y[2u+py, 2v+px] uses padded-input rows u+py+dy, cols v+px+dx
    (dy, dx in {0,1}) with kernel taps (ky, kx) = (3-py-2dy, 3-px-2dx).
    Skips the 75% structurally-zero taps of the zero-dilated formulation."""
    B, H, W, C = x_nhwc.shape
    xp = jnp.pad(x_nhwc, ((0, 0), (1, 1), (1, 1), (0, 0)))
    patches, weights = [], []
    for py in (0, 1):
        for px in (0, 1):
            cols, taps = [], []
            for dy in (0, 1):
                for dx in (0, 1):
                    cols.append(xp[:, dy + py:dy + py + H, dx + px:dx + px + W, :])
                    taps.append(w_deconv[:, :, 3 - py - 2 * dy, 3 - px - 2 * dx])
            patches.append(jnp.concatenate(cols, axis=-1).reshape(B * H * W, 4 * C))
            weights.append(jnp.concatenate(taps, axis=0))          # (4*C, Cout)
    # TODO(synk): at reference scale, generate patch columns in-kernel from a VMEM tile of
    #             the padded input instead of materializing the im2col slab in HBM.
    return jnp.stack(patches, 0), jnp.stack(weights, 0)


def deconv_bn_relu(x_nhwc, dec, final=None):
    """One [ConvTranspose2d(s=2,k=4,p=1) -> BN(eval) -> ReLU] stage (NHWC in/out).
    If `final` is given, the final 1x1 conv is fused into the kernel epilogue."""
    B, H, W, C = x_nhwc.shape
    Cout = dec["w"].shape[1]
    patches, wmat = _polyphase_patches_and_weights(x_nhwc, dec["w"])
    # fold eval-mode BatchNorm into the matmul:  bn(p @ W) == p @ (W * s) + t
    s = dec["bn_g"] * jax.lax.rsqrt(dec["bn_var"] + BN_EPS)
    t = dec["bn_b"] - dec["bn_mean"] * s
    wmat = (wmat * s[None, None, :]).astype(MXU_DTYPE)
    bias = jnp.tile(t.reshape(1, 1, Cout).astype(jnp.float32), (4, 1, 1))

    M = B * H * W
    Kdim = 4 * C
    tm = _row_tile(M)
    grid = (4, M // tm)
    base_specs = [
        pl.BlockSpec((1, tm, Kdim), lambda g, i: (g, i, 0)),
        pl.BlockSpec((1, Kdim, Cout), lambda g, i: (g, 0, 0)),
        pl.BlockSpec((1, 1, Cout), lambda g, i: (g, 0, 0)),
    ]

    if final is None:
        y = pl.pallas_call(
            _deconv_bn_relu_kernel,
            out_shape=jax.ShapeDtypeStruct((4, M, Cout), jnp.float32),
            grid=grid,
            in_specs=base_specs,
            out_specs=pl.BlockSpec((1, tm, Cout), lambda g, i: (g, i, 0)),
            compiler_params=_PAR2,
        )(patches, wmat, bias)
        Cy = Cout
    else:
        wf, bf = final
        J = wf.shape[1]
        y = pl.pallas_call(
            _deconv_bn_relu_final_kernel,
            out_shape=jax.ShapeDtypeStruct((4, M, J), jnp.float32),
            grid=grid,
            in_specs=base_specs + [
                pl.BlockSpec((Cout, J), lambda g, i: (0, 0)),
                pl.BlockSpec((1, J), lambda g, i: (0, 0)),
            ],
            out_specs=pl.BlockSpec((1, tm, J), lambda g, i: (g, i, 0)),
            compiler_params=_PAR2,
        )(patches, wmat, bias, wf.astype(jnp.float32), bf.reshape(1, J).astype(jnp.float32))
        Cy = J

    # scatter the 4 output parities back onto the (B, 2H, 2W, Cy) grid
    out = jnp.zeros((B, 2 * H, 2 * W, Cy), jnp.float32)
    idx = 0
    for py in (0, 1):
        for px in (0, 1):
            out = out.at[:, py::2, px::2, :].set(y[idx].reshape(B, H, W, Cy))
            idx += 1
    return out


# ----------------------------------- forward --------------------------------------------
def transformer_pose_forward(params, x):
    """x: (B, 3, IMG, IMG) NCHW -> heatmaps (B, NUM_JOINTS, 4*GRID, 4*GRID) NCHW."""
    B = x.shape[0]
    x = x.astype(jnp.float32)

    # ---- ViT patch embedding: 'b c (h p1) (w p2) -> b (h w) (p1 p2 c)' + Linear (+pos) ----
    xp = x.reshape(B, IN_CH, GRID, PATCH, GRID, PATCH)
    xp = xp.transpose(0, 2, 4, 3, 5, 1).reshape(B, NUM_PATCHES, PATCH_DIM)
    tok = patch_embed(xp, params["patch_w"], params["patch_b"], params["pos"][0, 1:, :])
    cls = params["cls"] + params["pos"][:, 0:1, :]                  # (1, 1, DIM)
    h = jnp.concatenate([jnp.broadcast_to(cls, (B, 1, DIM)), tok], axis=1)  # emb dropout: id

    # ---- Transformer: 2 fused pallas_calls per layer ----
    for layer in params["layers"]:
        h = attn_block(h, layer)
        h = ff_block(h, layer)

    # final transformer LayerNorm
    h = final_layernorm(h.reshape(B * TOKENS, DIM), params["lnf_g"], params["lnf_b"])
    h = h.reshape(B, TOKENS, DIM)

    # patch tokens -> NHWC feature map (B, GRID, GRID, DIM)
    feat = h[:, 1:, :].reshape(B, GRID, GRID, DIM)

    # ---- deconv stack; final 1x1 conv fused into the last stage ----
    cur = feat
    n_dec = len(params["deconv"])
    for i, dec in enumerate(params["deconv"]):
        fin = (params["final_w"], params["final_b"]) if i == n_dec - 1 else None
        cur = deconv_bn_relu(cur, dec, final=fin)

    return cur.transpose(0, 3, 1, 2)     # NHWC -> NCHW


# ------------------------------ deterministic parameters --------------------------------
def init_params(key):
    keys = iter(jax.random.split(key, 128))
    nrm = lambda shape, std=0.02: (std * jax.random.normal(next(keys), shape)).astype(jnp.float32)
    params = {
        "patch_w": nrm((PATCH_DIM, DIM)),
        "patch_b": jnp.zeros((DIM,), jnp.float32),
        "cls": nrm((1, 1, DIM)),
        "pos": nrm((1, TOKENS, DIM)),
        "lnf_g": jnp.ones((DIM,), jnp.float32),
        "lnf_b": jnp.zeros((DIM,), jnp.float32),
        "layers": [],
        "deconv": [],
    }
    for _ in range(DEPTH):
        params["layers"].append({
            "ln1_g": jnp.ones((DIM,), jnp.float32), "ln1_b": jnp.zeros((DIM,), jnp.float32),
            "qkv_w": nrm((DIM, 3 * INNER)),
            "out_w": nrm((INNER, DIM)), "out_b": jnp.zeros((DIM,), jnp.float32),
            "ln2_g": jnp.ones((DIM,), jnp.float32), "ln2_b": jnp.zeros((DIM,), jnp.float32),
            "ff1_w": nrm((DIM, MLP_DIM)), "ff1_b": jnp.zeros((MLP_DIM,), jnp.float32),
            "ff2_w": nrm((MLP_DIM, DIM)), "ff2_b": jnp.zeros((DIM,), jnp.float32),
        })
    cin = DIM
    for cout, kk in zip(DECONV_FILTERS, DECONV_KERNELS):
        params["deconv"].append({
            "w": nrm((cin, cout, kk, kk), std=0.001),   # ConvTranspose2d layout (Cin,Cout,kH,kW)
            "bn_g": jnp.ones((cout,), jnp.float32),
            "bn_b": jnp.zeros((cout,), jnp.float32),
            "bn_mean": jnp.zeros((cout,), jnp.float32),  # running stats (eval mode)
            "bn_var": jnp.ones((cout,), jnp.float32),
        })
        cin = cout
    params["final_w"] = nrm((cin, NUM_JOINTS), std=0.001)
    params["final_b"] = jnp.zeros((NUM_JOINTS,), jnp.float32)
    return params


if __name__ == "__main__":
    key = jax.random.PRNGKey(0)
    kx, kp = jax.random.split(key)
    x = jax.random.normal(kx, (2, IN_CH, IMG, IMG), dtype=jnp.float32)
    params = init_params(kp)

    fwd = jax.jit(functools.partial(transformer_pose_forward, params))
    y = fwd(x)
    jax.block_until_ready(y)

    expected = (2, NUM_JOINTS, GRID * 4, GRID * 4)   # two stride-2 deconvs: 4x4 -> 16x16
    assert y.shape == expected, (y.shape, expected)
    assert bool(jnp.all(jnp.isfinite(y)))
    print("KERNEL_OK")
</pallas_src>

<mosaic_0001>
module attributes {stable_mosaic.version = 11 : i64} {
  func.func @_patch_embed_kernel(%arg0: i32, %arg1: memref<1x16x48xf32, #tpu.memory_space<vmem>>, %arg2: memref<48x32xbf16, #tpu.memory_space<vmem>>, %arg3: memref<1x32xf32, #tpu.memory_space<vmem>>, %arg4: memref<16x32xf32, #tpu.memory_space<vmem>>, %arg5: memref<1x16x32xf32, #tpu.memory_space<vmem>>) attributes {dimension_semantics = [#tpu.dimension_semantics<parallel>], iteration_bounds = array<i64: 2>, scalar_prefetch = 0 : i64, scratch_operands = 0 : i64, tpu.core_type = #tpu.core_type<tc>, window_params = [{transform_indices = @transform_0, window_bounds = array<i64: 1, 16, 48>}, {pipeline_mode = #tpu.pipeline_mode<synchronous>, transform_indices = @transform_1, window_bounds = array<i64: 48, 32>}, {pipeline_mode = #tpu.pipeline_mode<synchronous>, transform_indices = @transform_2, window_bounds = array<i64: 1, 32>}, {pipeline_mode = #tpu.pipeline_mode<synchronous>, transform_indices = @transform_3, window_bounds = array<i64: 16, 32>}, {transform_indices = @transform_4, window_bounds = array<i64: 1, 16, 32>}]} {
    %c0 = arith.constant 0 : index
    %c0_0 = arith.constant 0 : index
    %c0_1 = arith.constant 0 : index
    %0 = vector.load %arg1[%c0, %c0_0, %c0_1] : memref<1x16x48xf32, #tpu.memory_space<vmem>>, vector<1x16x48xf32>
    %1 = vector.shape_cast %0 : vector<1x16x48xf32> to vector<16x48xf32>
    %2 = arith.truncf %1 : vector<16x48xf32> to vector<16x48xbf16>
    %c0_2 = arith.constant 0 : index
    %c0_3 = arith.constant 0 : index
    %3 = vector.load %arg2[%c0_2, %c0_3] : memref<48x32xbf16, #tpu.memory_space<vmem>>, vector<48x32xbf16>
    %cst = arith.constant dense<0.000000e+00> : vector<16x32xf32>
    %4 = tpu.matmul %2, %3, %cst {dimension_numbers = #tpu.dot_dimension_numbers<[1], [0], [0], [1], [0, 0, 1, 1], [], []>} : vector<16x48xbf16>, vector<48x32xbf16>, vector<16x32xf32> -> vector<16x32xf32>
    %c0_4 = arith.constant 0 : index
    %c0_5 = arith.constant 0 : index
    %5 = vector.load %arg3[%c0_4, %c0_5] : memref<1x32xf32, #tpu.memory_space<vmem>>, vector<1x32xf32>
    %6 = vector.broadcast %5 : vector<1x32xf32> to vector<16x32xf32>
    %7 = arith.addf %4, %6 : vector<16x32xf32>
    %c0_6 = arith.constant 0 : index
    %c0_7 = arith.constant 0 : index
    %8 = vector.load %arg4[%c0_6, %c0_7] : memref<16x32xf32, #tpu.memory_space<vmem>>, vector<16x32xf32>
    %9 = arith.addf %7, %8 : vector<16x32xf32>
    %c0_8 = arith.constant 0 : index
    %c0_9 = arith.constant 0 : index
    %c0_10 = arith.constant 0 : index
    %10 = vector.load %arg5[%c0_8, %c0_9, %c0_10] : memref<1x16x32xf32, #tpu.memory_space<vmem>>, vector<1x16x32xf32>
    %11 = vector.shape_cast %10 : vector<1x16x32xf32> to vector<16x32xf32>
    %12 = vector.shape_cast %9 : vector<16x32xf32> to vector<1x16x32xf32>
    tpu.vector_store %arg5[%c0_8, %c0_9, %c0_10], %12 {strides = array<i32>} : memref<1x16x32xf32, #tpu.memory_space<vmem>>, vector<1x16x32xf32>,
    return
  }
  func.func @transform_0(%arg0: i32) -> (i32, i32, i32) {
    %c0_i32 = arith.constant 0 : i32
    %c0_i32_0 = arith.constant 0 : i32
    %c0_i32_1 = arith.constant 0 : i32
    return %arg0, %c0_i32, %c0_i32_0 : i32, i32, i32
  }
  func.func @transform_1(%arg0: i32) -> (i32, i32) {
    %c0_i32 = arith.constant 0 : i32
    %c0_i32_0 = arith.constant 0 : i32
    %c0_i32_1 = arith.constant 0 : i32
    return %c0_i32, %c0_i32_0 : i32, i32
  }
  func.func @transform_2(%arg0: i32) -> (i32, i32) {
    %c0_i32 = arith.constant 0 : i32
    %c0_i32_0 = arith.constant 0 : i32
    %c0_i32_1 = arith.constant 0 : i32
    return %c0_i32, %c0_i32_0 : i32, i32
  }
  func.func @transform_3(%arg0: i32) -> (i32, i32) {
    %c0_i32 = arith.constant 0 : i32
    %c0_i32_0 = arith.constant 0 : i32
    %c0_i32_1 = arith.constant 0 : i32
    return %c0_i32, %c0_i32_0 : i32, i32
  }
  func.func @transform_4(%arg0: i32) -> (i32, i32, i32) {
    %c0_i32 = arith.constant 0 : i32
    %c0_i32_0 = arith.constant 0 : i32
    %c0_i32_1 = arith.constant 0 : i32
    return %arg0, %c0_i32, %c0_i32_0 : i32, i32, i32
  }
}

module attributes {stable_mosaic.version = 11 : i64} {
  func.func @_attn_block_kernel(%arg0: i32, %arg1: memref<1x17x32xf32, #tpu.memory_space<vmem>>, %arg2: memref<1x32xf32, #tpu.memory_space<vmem>>, %arg3: memref<1x32xf32, #tpu.memory_space<vmem>>, %arg4: memref<32x96xbf16, #tpu.memory_space<vmem>>, %arg5: memref<32x32xbf16, #tpu.memory_space<vmem>>, %arg6: memref<1x32xf32, #tpu.memory_space<vmem>>, %arg7: memref<1x17x32xf32, #tpu.memory_space<vmem>>) attributes {dimension_semantics = [#tpu.dimension_semantics<parallel>], iteration_bounds = array<i64: 2>, scalar_prefetch = 0 : i64, scratch_operands = 0 : i64, tpu.core_type = #tpu.core_type<tc>, window_params = [{transform_indices = @transform_0, window_bounds = array<i64: 1, 17, 32>}, {pipeline_mode = #tpu.pipeline_mode<synchronous>, transform_indices = @transform_1, window_bounds = array<i64: 1, 32>}, {pipeline_mode = #tpu.pipeline_mode<synchronous>, transform_indices = @transform_2, window_bounds = array<i64: 1, 32>}, {pipeline_mode = #tpu.pipeline_mode<synchronous>, transform_indices = @transform_3, window_bounds = array<i64: 32, 96>}, {pipeline_mode = #tpu.pipeline_mode<synchronous>, transform_indices = @transform_4, window_bounds = array<i64: 32, 32>}, {pipeline_mode = #tpu.pipeline_mode<synchronous>, transform_indices = @transform_5, window_bounds = array<i64: 1, 32>}, {transform_indices = @transform_6, window_bounds = array<i64: 1, 17, 32>}]} {
    %c0 = arith.constant 0 : index
    %c0_0 = arith.constant 0 : index
    %c0_1 = arith.constant 0 : index
    %0 = vector.load %arg1[%c0, %c0_0, %c0_1] : memref<1x17x32xf32, #tpu.memory_space<vmem>>, vector<1x17x32xf32>
    %1 = vector.shape_cast %0 : vector<1x17x32xf32> to vector<17x32xf32>
    %c0_2 = arith.constant 0 : index
    %c0_3 = arith.constant 0 : index
    %2 = vector.load %arg2[%c0_2, %c0_3] : memref<1x32xf32, #tpu.memory_space<vmem>>, vector<1x32xf32>
    %c0_4 = arith.constant 0 : index
    %c0_5 = arith.constant 0 : index
    %3 = vector.load %arg3[%c0_4, %c0_5] : memref<1x32xf32, #tpu.memory_space<vmem>>, vector<1x32xf32>
    %cst = arith.constant dense<0.000000e+00> : vector<17xf32>
    %4 = vector.multi_reduction <add>, %1, %cst [1] : vector<17x32xf32> to vector<17xf32>
    %5 = vector.shape_cast %4 : vector<17xf32> to vector<17x1xf32>
    %cst_6 = arith.constant 3.200000e+01 : f32
    %6 = vector.broadcast %cst_6 : f32 to vector<17x1xf32>
    %7 = arith.divf %5, %6 : vector<17x1xf32>
    %8 = vector.broadcast %7 : vector<17x1xf32> to vector<17x32xf32>
    %9 = arith.subf %1, %8 : vector<17x32xf32>
    %10 = arith.mulf %9, %9 : vector<17x32xf32>
    %cst_7 = arith.constant dense<0.000000e+00> : vector<17xf32>
    %11 = vector.multi_reduction <add>, %10, %cst_7 [1] : vector<17x32xf32> to vector<17xf32>
    %12 = vector.shape_cast %11 : vector<17xf32> to vector<17x1xf32>
    %cst_8 = arith.constant 3.200000e+01 : f32
    %13 = vector.broadcast %cst_8 : f32 to vector<17x1xf32>
    %14 = arith.divf %12, %13 : vector<17x1xf32>
    %15 = vector.broadcast %7 : vector<17x1xf32> to vector<17x32xf32>
    %16 = arith.subf %1, %15 : vector<17x32xf32>
    %cst_9 = arith.constant 9.99999974E-6 : f32
    %17 = vector.broadcast %cst_9 : f32 to vector<17x1xf32>
    %18 = arith.addf %14, %17 : vector<17x1xf32>
    %19 = math.rsqrt %18 : vector<17x1xf32>
    %20 = vector.broadcast %19 : vector<17x1xf32> to vector<17x32xf32>
    %21 = arith.mulf %16, %20 : vector<17x32xf32>
    %22 = vector.broadcast %2 : vector<1x32xf32> to vector<17x32xf32>
    %23 = arith.mulf %21, %22 : vector<17x32xf32>
    %24 = vector.broadcast %3 : vector<1x32xf32> to vector<17x32xf32>
    %25 = arith.addf %23, %24 : vector<17x32xf32>
    %26 = arith.truncf %25 : vector<17x32xf32> to vector<17x32xbf16>
    %c0_10 = arith.constant 0 : index
    %c0_11 = arith.constant 0 : index
    %27 = vector.load %arg4[%c0_10, %c0_11] : memref<32x96xbf16, #tpu.memory_space<vmem>>, vector<32x96xbf16>
    %cst_12 = arith.constant dense<0.000000e+00> : vector<17x96xf32>
    %28 = tpu.matmul %26, %27, %cst_12 {dimension_numbers = #tpu.dot_dimension_numbers<[1], [0], [0], [1], [0, 0, 1, 1], [], []>} : vector<17x32xbf16>, vector<32x96xbf16>, vector<17x96xf32> -> vector<17x96xf32>
    %c0_13 = arith.constant 0 : index
    %c0_14 = arith.constant 0 : index
    %29 = vector.load %arg6[%c0_13, %c0_14] : memref<1x32xf32, #tpu.memory_space<vmem>>, vector<1x32xf32>
    %30 = vector.broadcast %29 : vector<1x32xf32> to vector<17x32xf32>
    %31 = arith.addf %1, %30 : vector<17x32xf32>
    %32 = vector.extract_strided_slice %28 {offsets = [0, 0], sizes = [17, 8], strides = [1, 1]} : vector<17x96xf32> to vector<17x8xf32>
    %33 = vector.extract_strided_slice %28 {offsets = [0, 32], sizes = [17, 8], strides = [1, 1]} : vector<17x96xf32> to vector<17x8xf32>
    %34 = vector.extract_strided_slice %28 {offsets = [0, 64], sizes = [17, 8], strides = [1, 1]} : vector<17x96xf32> to vector<17x8xf32>
    %35 = tpu.transpose %33, [1, 0] : vector<17x8xf32> -> vector<8x17xf32>
    %cst_15 = arith.constant dense<0.000000e+00> : vector<17x17xf32>
    %36 = tpu.matmul %32, %35, %cst_15 {dimension_numbers = #tpu.dot_dimension_numbers<[1], [0], [0], [1], [0, 0, 1, 1], [], []>} : vector<17x8xf32>, vector<8x17xf32>, vector<17x17xf32> -> vector<17x17xf32>
    %cst_16 = arith.constant 0.353553385 : f32
    %37 = vector.broadcast %cst_16 : f32 to vector<17x17xf32>
    %38 = arith.mulf %36, %37 : vector<17x17xf32>
    %cst_17 = arith.constant dense<0xFF800000> : vector<17xf32>
    %39 = vector.multi_reduction <maximumf>, %38, %cst_17 [1] : vector<17x17xf32> to vector<17xf32>
    %40 = vector.shape_cast %39 : vector<17xf32> to vector<17x1xf32>
    %41 = vector.broadcast %40 : vector<17x1xf32> to vector<17x17xf32>
    %42 = arith.subf %38, %41 : vector<17x17xf32>
    %43 = math.exp %42 : vector<17x17xf32>
    %cst_18 = arith.constant dense<0.000000e+00> : vector<17xf32>
    %44 = vector.multi_reduction <add>, %43, %cst_18 [1] : vector<17x17xf32> to vector<17xf32>
    %45 = vector.shape_cast %44 : vector<17xf32> to vector<17x1xf32>
    %46 = tpu.reciprocal %45 {approx = true} : vector<17x1xf32> -> vector<17x1xf32>
    %47 = vector.broadcast %46 : vector<17x1xf32> to vector<17x17xf32>
    %48 = arith.mulf %43, %47 : vector<17x17xf32>
    %cst_19 = arith.constant dense<0.000000e+00> : vector<17x8xf32>
    %49 = tpu.matmul %48, %34, %cst_19 {dimension_numbers = #tpu.dot_dimension_numbers<[1], [0], [0], [1], [0, 0, 1, 1], [], []>} : vector<17x17xf32>, vector<17x8xf32>, vector<17x8xf32> -> vector<17x8xf32>
    %50 = arith.truncf %49 : vector<17x8xf32> to vector<17x8xbf16>
    %c0_20 = arith.constant 0 : index
    %c0_21 = arith.constant 0 : index
    %51 = vector.load %arg5[%c0_20, %c0_21] : memref<32x32xbf16, #tpu.memory_space<vmem>>, vector<8x32xbf16>
    %cst_22 = arith.constant dense<0.000000e+00> : vector<17x32xf32>
    %52 = tpu.matmul %50, %51, %cst_22 {dimension_numbers = #tpu.dot_dimension_numbers<[1], [0], [0], [1], [0, 0, 1, 1], [], []>} : vector<17x8xbf16>, vector<8x32xbf16>, vector<17x32xf32> -> vector<17x32xf32>
    %53 = arith.addf %31, %52 : vector<17x32xf32>
    %54 = vector.extract_strided_slice %28 {offsets = [0, 8], sizes = [17, 8], strides = [1, 1]} : vector<17x96xf32> to vector<17x8xf32>
    %55 = vector.extract_strided_slice %28 {offsets = [0, 40], sizes = [17, 8], strides = [1, 1]} : vector<17x96xf32> to vector<17x8xf32>
    %56 = vector.extract_strided_slice %28 {offsets = [0, 72], sizes = [17, 8], strides = [1, 1]} : vector<17x96xf32> to vector<17x8xf32>
    %57 = tpu.transpose %55, [1, 0] : vector<17x8xf32> -> vector<8x17xf32>
    %cst_23 = arith.constant dense<0.000000e+00> : vector<17x17xf32>
    %58 = tpu.matmul %54, %57, %cst_23 {dimension_numbers = #tpu.dot_dimension_numbers<[1], [0], [0], [1], [0, 0, 1, 1], [], []>} : vector<17x8xf32>, vector<8x17xf32>, vector<17x17xf32> -> vector<17x17xf32>
    %cst_24 = arith.constant 0.353553385 : f32
    %59 = vector.broadcast %cst_24 : f32 to vector<17x17xf32>
    %60 = arith.mulf %58, %59 : vector<17x17xf32>
    %cst_25 = arith.constant dense<0xFF800000> : vector<17xf32>
    %61 = vector.multi_reduction <maximumf>, %60, %cst_25 [1] : vector<17x17xf32> to vector<17xf32>
    %62 = vector.shape_cast %61 : vector<17xf32> to vector<17x1xf32>
    %63 = vector.broadcast %62 : vector<17x1xf32> to vector<17x17xf32>
    %64 = arith.subf %60, %63 : vector<17x17xf32>
    %65 = math.exp %64 : vector<17x17xf32>
    %cst_26 = arith.constant dense<0.000000e+00> : vector<17xf32>
    %66 = vector.multi_reduction <add>, %65, %cst_26 [1] : vector<17x17xf32> to vector<17xf32>
    %67 = vector.shape_cast %66 : vector<17xf32> to vector<17x1xf32>
    %68 = tpu.reciprocal %67 {approx = true} : vector<17x1xf32> -> vector<17x1xf32>
    %69 = vector.broadcast %68 : vector<17x1xf32> to vector<17x17xf32>
    %70 = arith.mulf %65, %69 : vector<17x17xf32>
    %cst_27 = arith.constant dense<0.000000e+00> : vector<17x8xf32>
    %71 = tpu.matmul %70, %56, %cst_27 {dimension_numbers = #tpu.dot_dimension_numbers<[1], [0], [0], [1], [0, 0, 1, 1], [], []>} : vector<17x17xf32>, vector<17x8xf32>, vector<17x8xf32> -> vector<17x8xf32>
    %72 = arith.truncf %71 : vector<17x8xf32> to vector<17x8xbf16>
    %c8 = arith.constant 8 : index
    %c0_28 = arith.constant 0 : index
    %73 = vector.load %arg5[%c8, %c0_28] : memref<32x32xbf16, #tpu.memory_space<vmem>>, vector<8x32xbf16>
    %cst_29 = arith.constant dense<0.000000e+00> : vector<17x32xf32>
    %74 = tpu.matmul %72, %73, %cst_29 {dimension_numbers = #tpu.dot_dimension_numbers<[1], [0], [0], [1], [0, 0, 1, 1], [], []>} : vector<17x8xbf16>, vector<8x32xbf16>, vector<17x32xf32> -> vector<17x32xf32>
    %75 = arith.addf %53, %74 : vector<17x32xf32>
    %76 = vector.extract_strided_slice %28 {offsets = [0, 16], sizes = [17, 8], strides = [1, 1]} : vector<17x96xf32> to vector<17x8xf32>
    %77 = vector.extract_strided_slice %28 {offsets = [0, 48], sizes = [17, 8], strides = [1, 1]} : vector<17x96xf32> to vector<17x8xf32>
    %78 = vector.extract_strided_slice %28 {offsets = [0, 80], sizes = [17, 8], strides = [1, 1]} : vector<17x96xf32> to vector<17x8xf32>
    %79 = tpu.transpose %77, [1, 0] : vector<17x8xf32> -> vector<8x17xf32>
    %cst_30 = arith.constant dense<0.000000e+00> : vector<17x17xf32>
    %80 = tpu.matmul %76, %79, %cst_30 {dimension_numbers = #tpu.dot_dimension_numbers<[1], [0], [0], [1], [0, 0, 1, 1], [], []>} : vector<17x8xf32>, vector<8x17xf32>, vector<17x17xf32> -> vector<17x17xf32>
    %cst_31 = arith.constant 0.353553385 : f32
    %81 = vector.broadcast %cst_31 : f32 to vector<17x17xf32>
    %82 = arith.mulf %80, %81 : vector<17x17xf32>
    %cst_32 = arith.constant dense<0xFF800000> : vector<17xf32>
    %83 = vector.multi_reduction <maximumf>, %82, %cst_32 [1] : vector<17x17xf32> to vector<17xf32>
    %84 = vector.shape_cast %83 : vector<17xf32> to vector<17x1xf32>
    %85 = vector.broadcast %84 : vector<17x1xf32> to vector<17x17xf32>
    %86 = arith.subf %82, %85 : vector<17x17xf32>
    %87 = math.exp %86 : vector<17x17xf32>
    %cst_33 = arith.constant dense<0.000000e+00> : vector<17xf32>
    %88 = vector.multi_reduction <add>, %87, %cst_33 [1] : vector<17x17xf32> to vector<17xf32>
    %89 = vector.shape_cast %88 : vector<17xf32> to vector<17x1xf32>
    %90 = tpu.reciprocal %89 {approx = true} : vector<17x1xf32> -> vector<17x1xf32>
    %91 = vector.broadcast %90 : vector<17x1xf32> to vector<17x17xf32>
    %92 = arith.mulf %87, %91 : vector<17x17xf32>
    %cst_34 = arith.constant dense<0.000000e+00> : vector<17x8xf32>
    %93 = tpu.matmul %92, %78, %cst_34 {dimension_numbers = #tpu.dot_dimension_numbers<[1], [0], [0], [1], [0, 0, 1, 1], [], []>} : vector<17x17xf32>, vector<17x8xf32>, vector<17x8xf32> -> vector<17x8xf32>
    %94 = arith.truncf %93 : vector<17x8xf32> to vector<17x8xbf16>
    %c16 = arith.constant 16 : index
    %c0_35 = arith.constant 0 : index
    %95 = vector.load %arg5[%c16, %c0_35] : memref<32x32xbf16, #tpu.memory_space<vmem>>, vector<8x32xbf16>
    %cst_36 = arith.constant dense<0.000000e+00> : vector<17x32xf32>
    %96 = tpu.matmul %94, %95, %cst_36 {dimension_numbers = #tpu.dot_dimension_numbers<[1], [0], [0], [1], [0, 0, 1, 1], [], []>} : vector<17x8xbf16>, vector<8x32xbf16>, vector<17x32xf32> -> vector<17x32xf32>
    %97 = arith.addf %75, %96 : vector<17x32xf32>
    %98 = vector.extract_strided_slice %28 {offsets = [0, 24], sizes = [17, 8], strides = [1, 1]} : vector<17x96xf32> to vector<17x8xf32>
    %99 = vector.extract_strided_slice %28 {offsets = [0, 56], sizes = [17, 8], strides = [1, 1]} : vector<17x96xf32> to vector<17x8xf32>
    %100 = vector.extract_strided_slice %28 {offsets = [0, 88], sizes = [17, 8], strides = [1, 1]} : vector<17x96xf32> to vector<17x8xf32>
    %101 = tpu.transpose %99, [1, 0] : vector<17x8xf32> -> vector<8x17xf32>
    %cst_37 = arith.constant dense<0.000000e+00> : vector<17x17xf32>
    %102 = tpu.matmul %98, %101, %cst_37 {dimension_numbers = #tpu.dot_dimension_numbers<[1], [0], [0], [1], [0, 0, 1, 1], [], []>} : vector<17x8xf32>, vector<8x17xf32>, vector<17x17xf32> -> vector<17x17xf32>
    %cst_38 = arith.constant 0.353553385 : f32
    %103 = vector.broadcast %cst_38 : f32 to vector<17x17xf32>
    %104 = arith.mulf %102, %103 : vector<17x17xf32>
    %cst_39 = arith.constant dense<0xFF800000> : vector<17xf32>
    %105 = vector.multi_reduction <maximumf>, %104, %cst_39 [1] : vector<17x17xf32> to vector<17xf32>
    %106 = vector.shape_cast %105 : vector<17xf32> to vector<17x1xf32>
    %107 = vector.broadcast %106 : vector<17x1xf32> to vector<17x17xf32>
    %108 = arith.subf %104, %107 : vector<17x17xf32>
    %109 = math.exp %108 : vector<17x17xf32>
    %cst_40 = arith.constant dense<0.000000e+00> : vector<17xf32>
    %110 = vector.multi_reduction <add>, %109, %cst_40 [1] : vector<17x17xf32> to vector<17xf32>
    %111 = vector.shape_cast %110 : vector<17xf32> to vector<17x1xf32>
    %112 = tpu.reciprocal %111 {approx = true} : vector<17x1xf32> -> vector<17x1xf32>
    %113 = vector.broadcast %112 : vector<17x1xf32> to vector<17x17xf32>
    %114 = arith.mulf %109, %113 : vector<17x17xf32>
    %cst_41 = arith.constant dense<0.000000e+00> : vector<17x8xf32>
    %115 = tpu.matmul %114, %100, %cst_41 {dimension_numbers = #tpu.dot_dimension_numbers<[1], [0], [0], [1], [0, 0, 1, 1], [], []>} : vector<17x17xf32>, vector<17x8xf32>, vector<17x8xf32> -> vector<17x8xf32>
    %116 = arith.truncf %115 : vector<17x8xf32> to vector<17x8xbf16>
    %c24 = arith.constant 24 : index
    %c0_42 = arith.constant 0 : index
    %117 = vector.load %arg5[%c24, %c0_42] : memref<32x32xbf16, #tpu.memory_space<vmem>>, vector<8x32xbf16>
    %cst_43 = arith.constant dense<0.000000e+00> : vector<17x32xf32>
    %118 = tpu.matmul %116, %117, %cst_43 {dimension_numbers = #tpu.dot_dimension_numbers<[1], [0], [0], [1], [0, 0, 1, 1], [], []>} : vector<17x8xbf16>, vector<8x32xbf16>, vector<17x32xf32> -> vector<17x32xf32>
    %119 = arith.addf %97, %118 : vector<17x32xf32>
    %c0_44 = arith.constant 0 : index
    %c0_45 = arith.constant 0 : index
    %c0_46 = arith.constant 0 : index
    %120 = vector.load %arg7[%c0_44, %c0_45, %c0_46] : memref<1x17x32xf32, #tpu.memory_space<vmem>>, vector<1x17x32xf32>
    %121 = vector.shape_cast %120 : vector<1x17x32xf32> to vector<17x32xf32>
    %122 = vector.shape_cast %119 : vector<17x32xf32> to vector<1x17x32xf32>
    tpu.vector_store %arg7[%c0_44, %c0_45, %c0_46], %122 {strides = array<i32>} : memref<1x17x32xf32, #tpu.memory_space<vmem>>, vector<1x17x32xf32>,
    return
  }
  func.func @transform_0(%arg0: i32) -> (i32, i32, i32) {
    %c0_i32 = arith.constant 0 : i32
    %c0_i32_0 = arith.constant 0 : i32
    %c0_i32_1 = arith.constant 0 : i32
    return %arg0, %c0_i32, %c0_i32_0 : i32, i32, i32
  }
  func.func @transform_1(%arg0: i32) -> (i32, i32) {
    %c0_i32 = arith.constant 0 : i32
    %c0_i32_0 = arith.constant 0 : i32
    %c0_i32_1 = arith.constant 0 : i32
    return %c0_i32, %c0_i32_0 : i32, i32
  }
  func.func @transform_2(%arg0: i32) -> (i32, i32) {
    %c0_i32 = arith.constant 0 : i32
    %c0_i32_0 = arith.constant 0 : i32
    %c0_i32_1 = arith.constant 0 : i32
    return %c0_i32, %c0_i32_0 : i32, i32
  }
  func.func @transform_3(%arg0: i32) -> (i32, i32) {
    %c0_i32 = arith.constant 0 : i32
    %c0_i32_0 = arith.constant 0 : i32
    %c0_i32_1 = arith.constant 0 : i32
    return %c0_i32, %c0_i32_0 : i32, i32
  }
  func.func @transform_4(%arg0: i32) -> (i32, i32) {
    %c0_i32 = arith.constant 0 : i32
    %c0_i32_0 = arith.constant 0 : i32
    %c0_i32_1 = arith.constant 0 : i32
    return %c0_i32, %c0_i32_0 : i32, i32
  }
  func.func @transform_5(%arg0: i32) -> (i32, i32) {
    %c0_i32 = arith.constant 0 : i32
    %c0_i32_0 = arith.constant 0 : i32
    %c0_i32_1 = arith.constant 0 : i32
    return %c0_i32, %c0_i32_0 : i32, i32
  }
  func.func @transform_6(%arg0: i32) -> (i32, i32, i32) {
    %c0_i32 = arith.constant 0 : i32
    %c0_i32_0 = arith.constant 0 : i32
    %c0_i32_1 = arith.constant 0 : i32
    return %arg0, %c0_i32, %c0_i32_0 : i32, i32, i32
  }
}

module attributes {stable_mosaic.version = 11 : i64} {
  func.func @_ff_block_kernel(%arg0: i32, %arg1: memref<1x17x32xf32, #tpu.memory_space<vmem>>, %arg2: memref<1x32xf32, #tpu.memory_space<vmem>>, %arg3: memref<1x32xf32, #tpu.memory_space<vmem>>, %arg4: memref<32x64xbf16, #tpu.memory_space<vmem>>, %arg5: memref<1x64xf32, #tpu.memory_space<vmem>>, %arg6: memref<64x32xbf16, #tpu.memory_space<vmem>>, %arg7: memref<1x32xf32, #tpu.memory_space<vmem>>, %arg8: memref<1x17x32xf32, #tpu.memory_space<vmem>>) attributes {dimension_semantics = [#tpu.dimension_semantics<parallel>], iteration_bounds = array<i64: 2>, scalar_prefetch = 0 : i64, scratch_operands = 0 : i64, tpu.core_type = #tpu.core_type<tc>, window_params = [{transform_indices = @transform_0, window_bounds = array<i64: 1, 17, 32>}, {pipeline_mode = #tpu.pipeline_mode<synchronous>, transform_indices = @transform_1, window_bounds = array<i64: 1, 32>}, {pipeline_mode = #tpu.pipeline_mode<synchronous>, transform_indices = @transform_2, window_bounds = array<i64: 1, 32>}, {pipeline_mode = #tpu.pipeline_mode<synchronous>, transform_indices = @transform_3, window_bounds = array<i64: 32, 64>}, {pipeline_mode = #tpu.pipeline_mode<synchronous>, transform_indices = @transform_4, window_bounds = array<i64: 1, 64>}, {pipeline_mode = #tpu.pipeline_mode<synchronous>, transform_indices = @transform_5, window_bounds = array<i64: 64, 32>}, {pipeline_mode = #tpu.pipeline_mode<synchronous>, transform_indices = @transform_6, window_bounds = array<i64: 1, 32>}, {transform_indices = @transform_7, window_bounds = array<i64: 1, 17, 32>}]} {
    %c0 = arith.constant 0 : index
    %c0_0 = arith.constant 0 : index
    %c0_1 = arith.constant 0 : index
    %0 = vector.load %arg1[%c0, %c0_0, %c0_1] : memref<1x17x32xf32, #tpu.memory_space<vmem>>, vector<1x17x32xf32>
    %1 = vector.shape_cast %0 : vector<1x17x32xf32> to vector<17x32xf32>
    %c0_2 = arith.constant 0 : index
    %c0_3 = arith.constant 0 : index
    %2 = vector.load %arg2[%c0_2, %c0_3] : memref<1x32xf32, #tpu.memory_space<vmem>>, vector<1x32xf32>
    %c0_4 = arith.constant 0 : index
    %c0_5 = arith.constant 0 : index
    %3 = vector.load %arg3[%c0_4, %c0_5] : memref<1x32xf32, #tpu.memory_space<vmem>>, vector<1x32xf32>
    %cst = arith.constant dense<0.000000e+00> : vector<17xf32>
    %4 = vector.multi_reduction <add>, %1, %cst [1] : vector<17x32xf32> to vector<17xf32>
    %5 = vector.shape_cast %4 : vector<17xf32> to vector<17x1xf32>
    %cst_6 = arith.constant 3.200000e+01 : f32
    %6 = vector.broadcast %cst_6 : f32 to vector<17x1xf32>
    %7 = arith.divf %5, %6 : vector<17x1xf32>
    %8 = vector.broadcast %7 : vector<17x1xf32> to vector<17x32xf32>
    %9 = arith.subf %1, %8 : vector<17x32xf32>
    %10 = arith.mulf %9, %9 : vector<17x32xf32>
    %cst_7 = arith.constant dense<0.000000e+00> : vector<17xf32>
    %11 = vector.multi_reduction <add>, %10, %cst_7 [1] : vector<17x32xf32> to vector<17xf32>
    %12 = vector.shape_cast %11 : vector<17xf32> to vector<17x1xf32>
    %cst_8 = arith.constant 3.200000e+01 : f32
    %13 = vector.broadcast %cst_8 : f32 to vector<17x1xf32>
    %14 = arith.divf %12, %13 : vector<17x1xf32>
    %15 = vector.broadcast %7 : vector<17x1xf32> to vector<17x32xf32>
    %16 = arith.subf %1, %15 : vector<17x32xf32>
    %cst_9 = arith.constant 9.99999974E-6 : f32
    %17 = vector.broadcast %cst_9 : f32 to vector<17x1xf32>
    %18 = arith.addf %14, %17 : vector<17x1xf32>
    %19 = math.rsqrt %18 : vector<17x1xf32>
    %20 = vector.broadcast %19 : vector<17x1xf32> to vector<17x32xf32>
    %21 = arith.mulf %16, %20 : vector<17x32xf32>
    %22 = vector.broadcast %2 : vector<1x32xf32> to vector<17x32xf32>
    %23 = arith.mulf %21, %22 : vector<17x32xf32>
    %24 = vector.broadcast %3 : vector<1x32xf32> to vector<17x32xf32>
    %25 = arith.addf %23, %24 : vector<17x32xf32>
    %26 = arith.truncf %25 : vector<17x32xf32> to vector<17x32xbf16>
    %c0_10 = arith.constant 0 : index
    %c0_11 = arith.constant 0 : index
    %27 = vector.load %arg4[%c0_10, %c0_11] : memref<32x64xbf16, #tpu.memory_space<vmem>>, vector<32x64xbf16>
    %cst_12 = arith.constant dense<0.000000e+00> : vector<17x64xf32>
    %28 = tpu.matmul %26, %27, %cst_12 {dimension_numbers = #tpu.dot_dimension_numbers<[1], [0], [0], [1], [0, 0, 1, 1], [], []>} : vector<17x32xbf16>, vector<32x64xbf16>, vector<17x64xf32> -> vector<17x64xf32>
    %c0_13 = arith.constant 0 : index
    %c0_14 = arith.constant 0 : index
    %29 = vector.load %arg5[%c0_13, %c0_14] : memref<1x64xf32, #tpu.memory_space<vmem>>, vector<1x64xf32>
    %30 = vector.broadcast %29 : vector<1x64xf32> to vector<17x64xf32>
    %31 = arith.addf %28, %30 : vector<17x64xf32>
    %cst_15 = arith.constant 5.000000e-01 : f32
    %32 = vector.broadcast %cst_15 : f32 to vector<17x64xf32>
    %33 = arith.mulf %32, %31 : vector<17x64xf32>
    %cst_16 = arith.constant 0.707106769 : f32
    %34 = vector.broadcast %cst_16 : f32 to vector<17x64xf32>
    %35 = arith.mulf %31, %34 : vector<17x64xf32>
    %36 = math.absf %35 : vector<17x64xf32>
    %cst_17 = arith.constant 0.327591091 : f32
    %37 = vector.broadcast %cst_17 : f32 to vector<17x64xf32>
    %38 = arith.mulf %37, %36 : vector<17x64xf32>
    %cst_18 = arith.constant 1.000000e+00 : f32
    %39 = vector.broadcast %cst_18 : f32 to vector<17x64xf32>
    %40 = arith.addf %39, %38 : vector<17x64xf32>
    %cst_19 = arith.constant 1.000000e+00 : f32
    %41 = vector.broadcast %cst_19 : f32 to vector<17x64xf32>
    %42 = arith.divf %41, %40 : vector<17x64xf32>
    %cst_20 = arith.constant 1.06140542 : f32
    %43 = vector.broadcast %cst_20 : f32 to vector<17x64xf32>
    %44 = arith.mulf %43, %42 : vector<17x64xf32>
    %cst_21 = arith.constant -1.45315206 : f32
    %45 = vector.broadcast %cst_21 : f32 to vector<17x64xf32>
    %46 = arith.addf %44, %45 : vector<17x64xf32>
    %47 = arith.mulf %46, %42 : vector<17x64xf32>
    %cst_22 = arith.constant 1.42141378 : f32
    %48 = vector.broadcast %cst_22 : f32 to vector<17x64xf32>
    %49 = arith.addf %47, %48 : vector<17x64xf32>
    %50 = arith.mulf %49, %42 : vector<17x64xf32>
    %cst_23 = arith.constant -0.284496725 : f32
    %51 = vector.broadcast %cst_23 : f32 to vector<17x64xf32>
    %52 = arith.addf %50, %51 : vector<17x64xf32>
    %53 = arith.mulf %52, %42 : vector<17x64xf32>
    %cst_24 = arith.constant 0.254829586 : f32
    %54 = vector.broadcast %cst_24 : f32 to vector<17x64xf32>
    %55 = arith.addf %53, %54 : vector<17x64xf32>
    %56 = arith.mulf %55, %42 : vector<17x64xf32>
    %cst_25 = arith.constant 0.000000e+00 : f32
    %57 = vector.broadcast %cst_25 : f32 to vector<17x64xf32>
    %58 = arith.subf %57, %36 : vector<17x64xf32>
    %59 = arith.mulf %58, %36 : vector<17x64xf32>
    %60 = math.exp %59 : vector<17x64xf32>
    %61 = arith.mulf %56, %60 : vector<17x64xf32>
    %cst_26 = arith.constant 1.000000e+00 : f32
    %62 = vector.broadcast %cst_26 : f32 to vector<17x64xf32>
    %63 = arith.subf %62, %61 : vector<17x64xf32>
    %cst_27 = arith.constant 0.000000e+00 : f32
    %64 = vector.broadcast %cst_27 : f32 to vector<17x64xf32>
    %65 = arith.cmpf oge, %35, %64 : vector<17x64xf32>
    %cst_28 = arith.constant 0.000000e+00 : f32
    %66 = vector.broadcast %cst_28 : f32 to vector<17x64xf32>
    %67 = arith.subf %66, %63 : vector<17x64xf32>
    %68 = arith.select %65, %63, %67 : vector<17x64xi1>, vector<17x64xf32>
    %cst_29 = arith.constant 1.000000e+00 : f32
    %69 = vector.broadcast %cst_29 : f32 to vector<17x64xf32>
    %70 = arith.addf %69, %68 : vector<17x64xf32>
    %71 = arith.mulf %33, %70 : vector<17x64xf32>
    %72 = arith.truncf %71 : vector<17x64xf32> to vector<17x64xbf16>
    %c0_30 = arith.constant 0 : index
    %c0_31 = arith.constant 0 : index
    %73 = vector.load %arg6[%c0_30, %c0_31] : memref<64x32xbf16, #tpu.memory_space<vmem>>, vector<64x32xbf16>
    %cst_32 = arith.constant dense<0.000000e+00> : vector<17x32xf32>
    %74 = tpu.matmul %72, %73, %cst_32 {dimension_numbers = #tpu.dot_dimension_numbers<[1], [0], [0], [1], [0, 0, 1, 1], [], []>} : vector<17x64xbf16>, vector<64x32xbf16>, vector<17x32xf32> -> vector<17x32xf32>
    %c0_33 = arith.constant 0 : index
    %c0_34 = arith.constant 0 : index
    %75 = vector.load %arg7[%c0_33, %c0_34] : memref<1x32xf32, #tpu.memory_space<vmem>>, vector<1x32xf32>
    %76 = vector.broadcast %75 : vector<1x32xf32> to vector<17x32xf32>
    %77 = arith.addf %74, %76 : vector<17x32xf32>
    %78 = arith.addf %1, %77 : vector<17x32xf32>
    %c0_35 = arith.constant 0 : index
    %c0_36 = arith.constant 0 : index
    %c0_37 = arith.constant 0 : index
    %79 = vector.load %arg8[%c0_35, %c0_36, %c0_37] : memref<1x17x32xf32, #tpu.memory_space<vmem>>, vector<1x17x32xf32>
    %80 = vector.shape_cast %79 : vector<1x17x32xf32> to vector<17x32xf32>
    %81 = vector.shape_cast %78 : vector<17x32xf32> to vector<1x17x32xf32>
    tpu.vector_store %arg8[%c0_35, %c0_36, %c0_37], %81 {strides = array<i32>} : memref<1x17x32xf32, #tpu.memory_space<vmem>>, vector<1x17x32xf32>,
    return
  }
  func.func @transform_0(%arg0: i32) -> (i32, i32, i32) {
    %c0_i32 = arith.constant 0 : i32
    %c0_i32_0 = arith.constant 0 : i32
    %c0_i32_1 = arith.constant 0 : i32
    return %arg0, %c0_i32, %c0_i32_0 : i32, i32, i32
  }
  func.func @transform_1(%arg0: i32) -> (i32, i32) {
    %c0_i32 = arith.constant 0 : i32
    %c0_i32_0 = arith.constant 0 : i32
    %c0_i32_1 = arith.constant 0 : i32
    return %c0_i32, %c0_i32_0 : i32, i32
  }
  func.func @transform_2(%arg0: i32) -> (i32, i32) {
    %c0_i32 = arith.constant 0 : i32
    %c0_i32_0 = arith.constant 0 : i32
    %c0_i32_1 = arith.constant 0 : i32
    return %c0_i32, %c0_i32_0 : i32, i32
  }
  func.func @transform_3(%arg0: i32) -> (i32, i32) {
    %c0_i32 = arith.constant 0 : i32
    %c0_i32_0 = arith.constant 0 : i32
    %c0_i32_1 = arith.constant 0 : i32
    return %c0_i32, %c0_i32_0 : i32, i32
  }
  func.func @transform_4(%arg0: i32) -> (i32, i32) {
    %c0_i32 = arith.constant 0 : i32
    %c0_i32_0 = arith.constant 0 : i32
    %c0_i32_1 = arith.constant 0 : i32
    return %c0_i32, %c0_i32_0 : i32, i32
  }
  func.func @transform_5(%arg0: i32) -> (i32, i32) {
    %c0_i32 = arith.constant 0 : i32
    %c0_i32_0 = arith.constant 0 : i32
    %c0_i32_1 = arith.constant 0 : i32
    return %c0_i32, %c0_i32_0 : i32, i32
  }
  func.func @transform_6(%arg0: i32) -> (i32, i32) {
    %c0_i32 = arith.constant 0 : i32
    %c0_i32_0 = arith.constant 0 : i32
    %c0_i32_1 = arith.constant 0 : i32
    return %c0_i32, %c0_i32_0 : i32, i32
  }
  func.func @transform_7(%arg0: i32) -> (i32, i32, i32) {
    %c0_i32 = arith.constant 0 : i32
    %c0_i32_0 = arith.constant 0 : i32
    %c0_i32_1 = arith.constant 0 : i32
    return %arg0, %c0_i32, %c0_i32_0 : i32, i32, i32
  }
}

module attributes {stable_mosaic.version = 11 : i64} {
  func.func @_layernorm_kernel(%arg0: i32, %arg1: memref<34x32xf32, #tpu.memory_space<vmem>>, %arg2: memref<1x32xf32, #tpu.memory_space<vmem>>, %arg3: memref<1x32xf32, #tpu.memory_space<vmem>>, %arg4: memref<34x32xf32, #tpu.memory_space<vmem>>) attributes {dimension_semantics = [#tpu.dimension_semantics<arbitrary>], iteration_bounds = array<i64: 1>, scalar_prefetch = 0 : i64, scratch_operands = 0 : i64, tpu.core_type = #tpu.core_type<tc>, window_params = [{pipeline_mode = #tpu.pipeline_mode<synchronous>, transform_indices = @transform_0, window_bounds = array<i64: 34, 32>}, {pipeline_mode = #tpu.pipeline_mode<synchronous>, transform_indices = @transform_1, window_bounds = array<i64: 1, 32>}, {pipeline_mode = #tpu.pipeline_mode<synchronous>, transform_indices = @transform_2, window_bounds = array<i64: 1, 32>}, {pipeline_mode = #tpu.pipeline_mode<synchronous>, transform_indices = @transform_3, window_bounds = array<i64: 34, 32>}]} {
    %c0 = arith.constant 0 : index
    %c0_0 = arith.constant 0 : index
    %0 = vector.load %arg1[%c0, %c0_0] : memref<34x32xf32, #tpu.memory_space<vmem>>, vector<34x32xf32>
    %c0_1 = arith.constant 0 : index
    %c0_2 = arith.constant 0 : index
    %1 = vector.load %arg2[%c0_1, %c0_2] : memref<1x32xf32, #tpu.memory_space<vmem>>, vector<1x32xf32>
    %c0_3 = arith.constant 0 : index
    %c0_4 = arith.constant 0 : index
    %2 = vector.load %arg3[%c0_3, %c0_4] : memref<1x32xf32, #tpu.memory_space<vmem>>, vector<1x32xf32>
    %cst = arith.constant dense<0.000000e+00> : vector<34xf32>
    %3 = vector.multi_reduction <add>, %0, %cst [1] : vector<34x32xf32> to vector<34xf32>
    %4 = vector.shape_cast %3 : vector<34xf32> to vector<34x1xf32>
    %cst_5 = arith.constant 3.200000e+01 : f32
    %5 = vector.broadcast %cst_5 : f32 to vector<34x1xf32>
    %6 = arith.divf %4, %5 : vector<34x1xf32>
    %7 = vector.broadcast %6 : vector<34x1xf32> to vector<34x32xf32>
    %8 = arith.subf %0, %7 : vector<34x32xf32>
    %9 = arith.mulf %8, %8 : vector<34x32xf32>
    %cst_6 = arith.constant dense<0.000000e+00> : vector<34xf32>
    %10 = vector.multi_reduction <add>, %9, %cst_6 [1] : vector<34x32xf32> to vector<34xf32>
    %11 = vector.shape_cast %10 : vector<34xf32> to vector<34x1xf32>
    %cst_7 = arith.constant 3.200000e+01 : f32
    %12 = vector.broadcast %cst_7 : f32 to vector<34x1xf32>
    %13 = arith.divf %11, %12 : vector<34x1xf32>
    %14 = vector.broadcast %6 : vector<34x1xf32> to vector<34x32xf32>
    %15 = arith.subf %0, %14 : vector<34x32xf32>
    %cst_8 = arith.constant 9.99999974E-6 : f32
    %16 = vector.broadcast %cst_8 : f32 to vector<34x1xf32>
    %17 = arith.addf %13, %16 : vector<34x1xf32>
    %18 = math.rsqrt %17 : vector<34x1xf32>
    %19 = vector.broadcast %18 : vector<34x1xf32> to vector<34x32xf32>
    %20 = arith.mulf %15, %19 : vector<34x32xf32>
    %21 = vector.broadcast %1 : vector<1x32xf32> to vector<34x32xf32>
    %22 = arith.mulf %20, %21 : vector<34x32xf32>
    %23 = vector.broadcast %2 : vector<1x32xf32> to vector<34x32xf32>
    %24 = arith.addf %22, %23 : vector<34x32xf32>
    %c0_9 = arith.constant 0 : index
    %c0_10 = arith.constant 0 : index
    %25 = vector.load %arg4[%c0_9, %c0_10] : memref<34x32xf32, #tpu.memory_space<vmem>>, vector<34x32xf32>
    tpu.vector_store %arg4[%c0_9, %c0_10], %24 {strides = array<i32>} : memref<34x32xf32, #tpu.memory_space<vmem>>, vector<34x32xf32>,
    return
  }
  func.func @transform_0(%arg0: i32) -> (i32, i32) {
    %c0_i32 = arith.constant 0 : i32
    %c0_i32_0 = arith.constant 0 : i32
    %c0_i32_1 = arith.constant 0 : i32
    return %c0_i32, %c0_i32_0 : i32, i32
  }
  func.func @transform_1(%arg0: i32) -> (i32, i32) {
    %c0_i32 = arith.constant 0 : i32
    %c0_i32_0 = arith.constant 0 : i32
    %c0_i32_1 = arith.constant 0 : i32
    return %c0_i32, %c0_i32_0 : i32, i32
  }
  func.func @transform_2(%arg0: i32) -> (i32, i32) {
    %c0_i32 = arith.constant 0 : i32
    %c0_i32_0 = arith.constant 0 : i32
    %c0_i32_1 = arith.constant 0 : i32
    return %c0_i32, %c0_i32_0 : i32, i32
  }
  func.func @transform_3(%arg0: i32) -> (i32, i32) {
    %c0_i32 = arith.constant 0 : i32
    %c0_i32_0 = arith.constant 0 : i32
    %c0_i32_1 = arith.constant 0 : i32
    return %c0_i32, %c0_i32_0 : i32, i32
  }
}

module attributes {stable_mosaic.version = 11 : i64} {
  func.func @_deconv_bn_relu_kernel(%arg0: i32, %arg1: i32, %arg2: memref<1x32x128xf32, #tpu.memory_space<vmem>>, %arg3: memref<1x128x32xbf16, #tpu.memory_space<vmem>>, %arg4: memref<1x1x32xf32, #tpu.memory_space<vmem>>, %arg5: memref<1x32x32xf32, #tpu.memory_space<vmem>>) attributes {dimension_semantics = [#tpu.dimension_semantics<parallel>, #tpu.dimension_semantics<parallel>], iteration_bounds = array<i64: 4, 1>, scalar_prefetch = 0 : i64, scratch_operands = 0 : i64, tpu.core_type = #tpu.core_type<tc>, window_params = [{transform_indices = @transform_0, window_bounds = array<i64: 1, 32, 128>}, {transform_indices = @transform_1, window_bounds = array<i64: 1, 128, 32>}, {transform_indices = @transform_2, window_bounds = array<i64: 1, 1, 32>}, {transform_indices = @transform_3, window_bounds = array<i64: 1, 32, 32>}]} {
    %c0 = arith.constant 0 : index
    %c0_0 = arith.constant 0 : index
    %c0_1 = arith.constant 0 : index
    %0 = vector.load %arg2[%c0, %c0_0, %c0_1] : memref<1x32x128xf32, #tpu.memory_space<vmem>>, vector<1x32x128xf32>
    %1 = vector.shape_cast %0 : vector<1x32x128xf32> to vector<32x128xf32>
    %2 = arith.truncf %1 : vector<32x128xf32> to vector<32x128xbf16>
    %c0_2 = arith.constant 0 : index
    %c0_3 = arith.constant 0 : index
    %c0_4 = arith.constant 0 : index
    %3 = vector.load %arg3[%c0_2, %c0_3, %c0_4] : memref<1x128x32xbf16, #tpu.memory_space<vmem>>, vector<1x128x32xbf16>
    %4 = vector.shape_cast %3 : vector<1x128x32xbf16> to vector<128x32xbf16>
    %cst = arith.constant dense<0.000000e+00> : vector<32x32xf32>
    %5 = tpu.matmul %2, %4, %cst {dimension_numbers = #tpu.dot_dimension_numbers<[1], [0], [0], [1], [0, 0, 1, 1], [], []>} : vector<32x128xbf16>, vector<128x32xbf16>, vector<32x32xf32> -> vector<32x32xf32>
    %c0_5 = arith.constant 0 : index
    %c0_6 = arith.constant 0 : index
    %c0_7 = arith.constant 0 : index
    %6 = vector.load %arg4[%c0_5, %c0_6, %c0_7] : memref<1x1x32xf32, #tpu.memory_space<vmem>>, vector<1x1x32xf32>
    %7 = vector.shape_cast %6 : vector<1x1x32xf32> to vector<1x32xf32>
    %8 = vector.broadcast %7 : vector<1x32xf32> to vector<32x32xf32>
    %9 = arith.addf %5, %8 : vector<32x32xf32>
    %cst_8 = arith.constant 0.000000e+00 : f32
    %10 = vector.broadcast %cst_8 : f32 to vector<32x32xf32>
    %11 = arith.maximumf %9, %10 : vector<32x32xf32>
    %c0_9 = arith.constant 0 : index
    %c0_10 = arith.constant 0 : index
    %c0_11 = arith.constant 0 : index
    %12 = vector.load %arg5[%c0_9, %c0_10, %c0_11] : memref<1x32x32xf32, #tpu.memory_space<vmem>>, vector<1x32x32xf32>
    %13 = vector.shape_cast %12 : vector<1x32x32xf32> to vector<32x32xf32>
    %14 = vector.shape_cast %11 : vector<32x32xf32> to vector<1x32x32xf32>
    tpu.vector_store %arg5[%c0_9, %c0_10, %c0_11], %14 {strides = array<i32>} : memref<1x32x32xf32, #tpu.memory_space<vmem>>, vector<1x32x32xf32>,
    return
  }
  func.func @transform_0(%arg0: i32, %arg1: i32) -> (i32, i32, i32) {
    %c0_i32 = arith.constant 0 : i32
    %c0_i32_0 = arith.constant 0 : i32
    return %arg0, %arg1, %c0_i32 : i32, i32, i32
  }
  func.func @transform_1(%arg0: i32, %arg1: i32) -> (i32, i32, i32) {
    %c0_i32 = arith.constant 0 : i32
    %c0_i32_0 = arith.constant 0 : i32
    %c0_i32_1 = arith.constant 0 : i32
    return %arg0, %c0_i32, %c0_i32_0 : i32, i32, i32
  }
  func.func @transform_2(%arg0: i32, %arg1: i32) -> (i32, i32, i32) {
    %c0_i32 = arith.constant 0 : i32
    %c0_i32_0 = arith.constant 0 : i32
    %c0_i32_1 = arith.constant 0 : i32
    return %arg0, %c0_i32, %c0_i32_0 : i32, i32, i32
  }
  func.func @transform_3(%arg0: i32, %arg1: i32) -> (i32, i32, i32) {
    %c0_i32 = arith.constant 0 : i32
    %c0_i32_0 = arith.constant 0 : i32
    return %arg0, %arg1, %c0_i32 : i32, i32, i32
  }
}

module attributes {stable_mosaic.version = 11 : i64} {
  func.func @_deconv_bn_relu_final_kernel(%arg0: i32, %arg1: i32, %arg2: memref<1x128x128xf32, #tpu.memory_space<vmem>>, %arg3: memref<1x128x32xbf16, #tpu.memory_space<vmem>>, %arg4: memref<1x1x32xf32, #tpu.memory_space<vmem>>, %arg5: memref<32x8xf32, #tpu.memory_space<vmem>>, %arg6: memref<1x8xf32, #tpu.memory_space<vmem>>, %arg7: memref<1x128x8xf32, #tpu.memory_space<vmem>>) attributes {dimension_semantics = [#tpu.dimension_semantics<parallel>, #tpu.dimension_semantics<parallel>], iteration_bounds = array<i64: 4, 1>, scalar_prefetch = 0 : i64, scratch_operands = 0 : i64, tpu.core_type = #tpu.core_type<tc>, window_params = [{transform_indices = @transform_0, window_bounds = array<i64: 1, 128, 128>}, {transform_indices = @transform_1, window_bounds = array<i64: 1, 128, 32>}, {transform_indices = @transform_2, window_bounds = array<i64: 1, 1, 32>}, {pipeline_mode = #tpu.pipeline_mode<synchronous>, transform_indices = @transform_3, window_bounds = array<i64: 32, 8>}, {pipeline_mode = #tpu.pipeline_mode<synchronous>, transform_indices = @transform_4, window_bounds = array<i64: 1, 8>}, {transform_indices = @transform_5, window_bounds = array<i64: 1, 128, 8>}]} {
    %c0 = arith.constant 0 : index
    %c0_0 = arith.constant 0 : index
    %c0_1 = arith.constant 0 : index
    %0 = vector.load %arg2[%c0, %c0_0, %c0_1] : memref<1x128x128xf32, #tpu.memory_space<vmem>>, vector<1x128x128xf32>
    %1 = vector.shape_cast %0 : vector<1x128x128xf32> to vector<128x128xf32>
    %2 = arith.truncf %1 : vector<128x128xf32> to vector<128x128xbf16>
    %c0_2 = arith.constant 0 : index
    %c0_3 = arith.constant 0 : index
    %c0_4 = arith.constant 0 : index
    %3 = vector.load %arg3[%c0_2, %c0_3, %c0_4] : memref<1x128x32xbf16, #tpu.memory_space<vmem>>, vector<1x128x32xbf16>
    %4 = vector.shape_cast %3 : vector<1x128x32xbf16> to vector<128x32xbf16>
    %cst = arith.constant dense<0.000000e+00> : vector<128x32xf32>
    %5 = tpu.matmul %2, %4, %cst {dimension_numbers = #tpu.dot_dimension_numbers<[1], [0], [0], [1], [0, 0, 1, 1], [], []>} : vector<128x128xbf16>, vector<128x32xbf16>, vector<128x32xf32> -> vector<128x32xf32>
    %c0_5 = arith.constant 0 : index
    %c0_6 = arith.constant 0 : index
    %c0_7 = arith.constant 0 : index
    %6 = vector.load %arg4[%c0_5, %c0_6, %c0_7] : memref<1x1x32xf32, #tpu.memory_space<vmem>>, vector<1x1x32xf32>
    %7 = vector.shape_cast %6 : vector<1x1x32xf32> to vector<1x32xf32>
    %8 = vector.broadcast %7 : vector<1x32xf32> to vector<128x32xf32>
    %9 = arith.addf %5, %8 : vector<128x32xf32>
    %cst_8 = arith.constant 0.000000e+00 : f32
    %10 = vector.broadcast %cst_8 : f32 to vector<128x32xf32>
    %11 = arith.maximumf %9, %10 : vector<128x32xf32>
    %c0_9 = arith.constant 0 : index
    %c0_10 = arith.constant 0 : index
    %12 = vector.load %arg5[%c0_9, %c0_10] : memref<32x8xf32, #tpu.memory_space<vmem>>, vector<32x8xf32>
    %cst_11 = arith.constant dense<0.000000e+00> : vector<128x8xf32>
    %13 = tpu.matmul %11, %12, %cst_11 {dimension_numbers = #tpu.dot_dimension_numbers<[1], [0], [0], [1], [0, 0, 1, 1], [], []>} : vector<128x32xf32>, vector<32x8xf32>, vector<128x8xf32> -> vector<128x8xf32>
    %c0_12 = arith.constant 0 : index
    %c0_13 = arith.constant 0 : index
    %14 = vector.load %arg6[%c0_12, %c0_13] : memref<1x8xf32, #tpu.memory_space<vmem>>, vector<1x8xf32>
    %15 = vector.broadcast %14 : vector<1x8xf32> to vector<128x8xf32>
    %16 = arith.addf %13, %15 : vector<128x8xf32>
    %c0_14 = arith.constant 0 : index
    %c0_15 = arith.constant 0 : index
    %c0_16 = arith.constant 0 : index
    %17 = vector.load %arg7[%c0_14, %c0_15, %c0_16] : memref<1x128x8xf32, #tpu.memory_space<vmem>>, vector<1x128x8xf32>
    %18 = vector.shape_cast %17 : vector<1x128x8xf32> to vector<128x8xf32>
    %19 = vector.shape_cast %16 : vector<128x8xf32> to vector<1x128x8xf32>
    tpu.vector_store %arg7[%c0_14, %c0_15, %c0_16], %19 {strides = array<i32>} : memref<1x128x8xf32, #tpu.memory_space<vmem>>, vector<1x128x8xf32>,
    return
  }
  func.func @transform_0(%arg0: i32, %arg1: i32) -> (i32, i32, i32) {
    %c0_i32 = arith.constant 0 : i32
    %c0_i32_0 = arith.constant 0 : i32
    return %arg0, %arg1, %c0_i32 : i32, i32, i32
  }
  func.func @transform_1(%arg0: i32, %arg1: i32) -> (i32, i32, i32) {
    %c0_i32 = arith.constant 0 : i32
    %c0_i32_0 = arith.constant 0 : i32
    %c0_i32_1 = arith.constant 0 : i32
    return %arg0, %c0_i32, %c0_i32_0 : i32, i32, i32
  }
  func.func @transform_2(%arg0: i32, %arg1: i32) -> (i32, i32, i32) {
    %c0_i32 = arith.constant 0 : i32
    %c0_i32_0 = arith.constant 0 : i32
    %c0_i32_1 = arith.constant 0 : i32
    return %arg0, %c0_i32, %c0_i32_0 : i32, i32, i32
  }
  func.func @transform_3(%arg0: i32, %arg1: i32) -> (i32, i32) {
    %c0_i32 = arith.constant 0 : i32
    %c0_i32_0 = arith.constant 0 : i32
    %c0_i32_1 = arith.constant 0 : i32
    return %c0_i32, %c0_i32_0 : i32, i32
  }
  func.func @transform_4(%arg0: i32, %arg1: i32) -> (i32, i32) {
    %c0_i32 = arith.constant 0 : i32
    %c0_i32_0 = arith.constant 0 : i32
    %c0_i32_1 = arith.constant 0 : i32
    return %c0_i32, %c0_i32_0 : i32, i32
  }
  func.func @transform_5(%arg0: i32, %arg1: i32) -> (i32, i32, i32) {
    %c0_i32 = arith.constant 0 : i32
    %c0_i32_0 = arith.constant 0 : i32
    return %arg0, %arg1, %c0_i32 : i32, i32, i32
  }
}

</mosaic_0001>

<llo_original>
// kernel: transformer_pose_forward.8
$region0: #{transformer_pose_forward.8}
  #allocation0 [shape = 'u32[]', space=smem, size = 0x4, offset = 0x4, fixed_abs, tag = 'smem constant byte address 0x4 - core index']
  #allocation1 [shape = 'u32[72,128]{1,0:T(1,128)}', space=vmem, size = 0x9000, scoped, tag = 'internal scratch']
  %s0 = inlined_call_operand.vmem [shape: f32[2,16,48], index: 0, kind: input, shape index: {}]
  %s1 = inlined_call_operand.vmem [shape: bf16[48,32], index: 1, kind: input, shape index: {}]
  %s2 = inlined_call_operand.vmem [shape: f32[1,32], index: 2, kind: input, shape index: {}]
  %s3 = inlined_call_operand.vmem [shape: f32[16,32], index: 3, kind: input, shape index: {}]
  %s4 = inlined_call_operand.vmem [shape: f32[2,16,32], index: 4, kind: output, shape index: {}]
  %s5 = sld [smem:[#allocation0]]
  $region49: #{transformer_pose_forward.8} parent=0
    _
  %s7 = ssub.s32 1, %s5
  %s8 = scalar_select 0, %s7, %s5
  loop: start=0, step=1, limit=4
  $region2: #{transformer_pose_forward.8} parent=0 // loop_pre_header
    _
  $region3: #{transformer_pose_forward.8} parent=0 // loop_header
    %s10 = sphi 0, %s14
    %p11 = scmp.ge.s32.totalorder %s10, 4
    %s20 = sphi 0, %s22
    %s23 = sphi 0, %s20
    %s24 = sphi 0, %s23
    %s40 = sphi 0, %s24
    %s44 = sphi 0, %s44
    %s46 = sphi 0, %s44
    %s47 = sphi 0, %s46
    %s61 = sphi 0, %s47
    %s65 = sphi 0, %s65
    %s67 = sphi 0, %s65
    %s68 = sphi 0, %s67
    %s82 = sphi 0, %s68
    %s86 = sphi 0, %s86
    %s88 = sphi 0, %s86
    %s89 = sphi 0, %s88
    %s103 = sphi 0, %s89
    %s109 = sphi 0, %s111
    %s112 = sphi 0, %s109
    %s113 = sphi 0, %s112
    %s129 = sphi 0, %s113
  $region4: #{transformer_pose_forward.8} parent=0 // loop_header_branch
    %13 = sbr.rel (%p11) target = $region8
  $region5: #{transformer_pose_forward.8} parent=0 // loop_body
    %s15 = ssub.s32 %s10, 1
    %s16 = ssub.s32 %s10, 2
    %s17 = sadd.s32 %s10, 1
    %s18 = ssub.s32 %s10, %s17
    %p19 = scmp.eq.s32.totalorder %s18, 0
    %s21 = sadd.s32 %s20, 1
    %s22 = scalar_select %p19, %s20, %s21
    %p25 = pneg %p19
    %p26 = scmp.eq.s32.totalorder %s10, 1
    %p27 = por %p25, %p26
    %p28 = scmp.ne.s32.totalorder %s20, %s23
    %p29 = scmp.eq.s32.totalorder %s10, 0
    %p30 = por %p28, %p29
    %p31 = scmp.ne.s32.totalorder %s20, %s23
    %p32 = scmp.eq.s32.totalorder %s15, 1
    %p33 = por %p31, %p32
    %p34 = scmp.ne.s32.totalorder %s23, %s24
    %p35 = scmp.eq.s32.totalorder %s15, 0
    %p36 = por %p34, %p35
    %p37 = scmp.ne.s32.totalorder %s23, %s24
    %p38 = scmp.eq.s32.totalorder %s16, 1
    %p39 = por %p37, %p38
    %p41 = scmp.ne.s32.totalorder %s24, %s40
    %p42 = scmp.eq.s32.totalorder %s16, 0
    %p43 = por %p41, %p42
    %s45 = sadd.s32 %s44, 1
    %p48 = scmp.eq.s32.totalorder %s10, 1
    %p49 = scmp.ne.s32.totalorder %s44, %s46
    %p50 = scmp.eq.s32.totalorder %s10, 0
    %p51 = por %p49, %p50
    %p52 = scmp.ne.s32.totalorder %s44, %s46
    %p53 = scmp.eq.s32.totalorder %s15, 1
    %p54 = por %p52, %p53
    %p55 = scmp.ne.s32.totalorder %s46, %s47
    %p56 = scmp.eq.s32.totalorder %s15, 0
    %p57 = por %p55, %p56
    %p58 = scmp.ne.s32.totalorder %s46, %s47
    %p59 = scmp.eq.s32.totalorder %s16, 1
    %p60 = por %p58, %p59
    %p62 = scmp.ne.s32.totalorder %s47, %s61
    %p63 = scmp.eq.s32.totalorder %s16, 0
    %p64 = por %p62, %p63
    %s66 = sadd.s32 %s65, 1
    %p69 = scmp.eq.s32.totalorder %s10, 1
    %p70 = scmp.ne.s32.totalorder %s65, %s67
    %p71 = scmp.eq.s32.totalorder %s10, 0
    %p72 = por %p70, %p71
    %p73 = scmp.ne.s32.totalorder %s65, %s67
    %p74 = scmp.eq.s32.totalorder %s15, 1
    %p75 = por %p73, %p74
    %p76 = scmp.ne.s32.totalorder %s67, %s68
    %p77 = scmp.eq.s32.totalorder %s15, 0
    %p78 = por %p76, %p77
    %p79 = scmp.ne.s32.totalorder %s67, %s68
    %p80 = scmp.eq.s32.totalorder %s16, 1
    %p81 = por %p79, %p80
    %p83 = scmp.ne.s32.totalorder %s68, %s82
    %p84 = scmp.eq.s32.totalorder %s16, 0
    %p85 = por %p83, %p84
    %s87 = sadd.s32 %s86, 1
    %p90 = scmp.eq.s32.totalorder %s10, 1
    %p91 = scmp.ne.s32.totalorder %s86, %s88
    %p92 = scmp.eq.s32.totalorder %s10, 0
    %p93 = por %p91, %p92
    %p94 = scmp.ne.s32.totalorder %s86, %s88
    %p95 = scmp.eq.s32.totalorder %s15, 1
    %p96 = por %p94, %p95
    %p97 = scmp.ne.s32.totalorder %s88, %s89
    %p98 = scmp.eq.s32.totalorder %s15, 0
    %p99 = por %p97, %p98
    %p100 = scmp.ne.s32.totalorder %s88, %s89
    %p101 = scmp.eq.s32.totalorder %s16, 1
    %p102 = por %p100, %p101
    %p104 = scmp.ne.s32.totalorder %s89, %s103
    %p105 = scmp.eq.s32.totalorder %s16, 0
    %p106 = por %p104, %p105
    %s107 = ssub.s32 %s10, %s17
    %p108 = scmp.eq.s32.totalorder %s107, 0
    %s110 = sadd.s32 %s109, 1
    %s111 = scalar_select %p108, %s109, %s110
    %p114 = pneg %p108
    %p115 = scmp.eq.s32.totalorder %s10, 1
    %p116 = por %p114, %p115
    %p117 = scmp.ne.s32.totalorder %s109, %s112
    %p118 = scmp.eq.s32.totalorder %s10, 0
    %p119 = por %p117, %p118
    %p120 = scmp.ne.s32.totalorder %s109, %s112
    %p121 = scmp.eq.s32.totalorder %s15, 1
    %p122 = por %p120, %p121
    %p123 = scmp.ne.s32.totalorder %s112, %s113
    %p124 = scmp.eq.s32.totalorder %s15, 0
    %p125 = por %p123, %p124
    %p126 = scmp.ne.s32.totalorder %s112, %s113
    %p127 = scmp.eq.s32.totalorder %s16, 1
    %p128 = por %p126, %p127
    %p130 = scmp.ne.s32.totalorder %s113, %s129
    %p131 = scmp.eq.s32.totalorder %s16, 0
    %p132 = por %p130, %p131
    %p133 = scmp.le.s32.totalorder 1, %s10
    %p134 = scmp.lt.s32.totalorder %s10, 3
    %p135 = pnand %p133, %p134
    %p136 = pneg %p135
    // Predicated region
    $region9: #{transformer_pose_forward.8} parent=5 // pred_check
      _
    $region10: #{transformer_pose_forward.8} parent=5 // pred_check_branch
      %138 = sbr.rel (%p135) target = $region12
    $region11: #{transformer_pose_forward.8} parent=5 // pred_region
      %s139 = ssub.s32 %s10, 1
      // Predicated region
      $region13: #{transformer_pose_forward.8} parent=11 // pred_check
        %p140 = pneg %p57
      $region14: #{transformer_pose_forward.8} parent=11 // pred_check_branch
        %142 = sbr.rel (%p140) target = $region16
      $region15: #{transformer_pose_forward.8} parent=11 // pred_region
        _
      $region16: #{transformer_pose_forward.8} parent=11 // pred_fallthru
        _
      // Predicated region
      $region17: #{transformer_pose_forward.8} parent=11 // pred_check
        %p143 = pneg %p78
      $region18: #{transformer_pose_forward.8} parent=11 // pred_check_branch
        %145 = sbr.rel (%p143) target = $region20
      $region19: #{transformer_pose_forward.8} parent=11 // pred_region
        _
      $region20: #{transformer_pose_forward.8} parent=11 // pred_fallthru
        _
      // Predicated region
      $region21: #{transformer_pose_forward.8} parent=11 // pred_check
        %p146 = pneg %p99
      $region22: #{transformer_pose_forward.8} parent=11 // pred_check_branch
        %148 = sbr.rel (%p146) target = $region24
      $region23: #{transformer_pose_forward.8} parent=11 // pred_region
        _
      $region24: #{transformer_pose_forward.8} parent=11 // pred_fallthru
        _
    $region12: #{transformer_pose_forward.8} parent=5 // pred_fallthru
      _
    %p149 = scmp.lt.s32.totalorder %s10, 2
    // Predicated region
    $region25: #{transformer_pose_forward.8} parent=5 // pred_check
      %p150 = pneg %p149
    $region26: #{transformer_pose_forward.8} parent=5 // pred_check_branch
      %152 = sbr.rel (%p150) target = $region28
    $region27: #{transformer_pose_forward.8} parent=5 // pred_region
      // Predicated region
      $region29: #{transformer_pose_forward.8} parent=27 // pred_check
        %p153 = pneg %p30
      $region30: #{transformer_pose_forward.8} parent=27 // pred_check_branch
        %155 = sbr.rel (%p153) target = $region32
      $region31: #{transformer_pose_forward.8} parent=27 // pred_region
        %p156 = scmp.lt.s32.totalorder %s10, 1
        %s157 = scalar_select %p156, %s10, 1
        %s158 = smul.addr %s157, 2
        %s159 = smul.addr %s158, 8
        %s160 = scalar_lea.vmem %s0, %s159
      $region32: #{transformer_pose_forward.8} parent=27 // pred_fallthru
        _
    $region28: #{transformer_pose_forward.8} parent=5 // pred_fallthru
      _
    %p161 = scmp.le.s32.totalorder 1, %s10
    %p162 = scmp.lt.s32.totalorder %s10, 3
    %p163 = pnand %p161, %p162
    %p164 = pneg %p163
    // Predicated region
    $region33: #{transformer_pose_forward.8} parent=5 // pred_check
      _
    $region34: #{transformer_pose_forward.8} parent=5 // pred_check_branch
      %166 = sbr.rel (%p163) target = $region36
    $region35: #{transformer_pose_forward.8} parent=5 // pred_region
      %s167 = ssub.s32 %s10, 1
      %p168 = scmp.lt.s32.totalorder %s15, 1
      %s169 = scalar_select %p168, %s15, 1
      %s170 = smul.addr %s169, 2
      %s171 = smul.addr %s170, 8
      %s172 = scalar_lea.vmem %s0, %s171
      %p173 = pneg %p36
      %p174 = pneg %p33
      %p175 = pneg %p57
      %p176 = pneg %p54
      %p177 = pneg %p78
      %p178 = pneg %p75
      %p179 = pneg %p99
      %p180 = pneg %p96
      %p181 = pneg %p125
      %p182 = pneg %p122
      %p183 = scmp.lt.s32.totalorder %s15, 1
      %s184 = scalar_select %p183, %s15, 1
      %s185 = smul.addr %s184, 2
      %s186 = smul.addr %s185, 8
      %s187 = scalar_lea.vmem %s4, %s186
      %p188 = scmp.lt.s32.totalorder %s15, 1
      %s189 = scalar_select %p188, %s15, 1
      %s190 = smul.addr %s189, 2
      %s191 = smul.addr %s190, 8
      %s192 = scalar_lea.vmem %s0, %s191
      %p193 = scmp.lt.s32.totalorder %s15, 1
      %s194 = scalar_select %p193, %s15, 1
      %s195 = smul.addr %s194, 2
      %s196 = smul.addr %s195, 8
      %s197 = scalar_lea.vmem %s4, %s196
      %v199 = vld [vmem:[%s192] sm:$0xff]
      %v200 = vld [vmem:[%s192 + $0x8] sm:$0xff]
      %v201 = vpack.c.bf16 %v200, %v199
      %v202 = vld [vmem:[%s1] sm:$0xf]
      %v203 = vld [vmem:[%s1 + $0x4] sm:$0xf]
      %v204 = vld [vmem:[%s1 + $0x8] sm:$0xf]
      %v205 = vld [vmem:[%s1 + $0xc] sm:$0xf]
      %v206 = vld [vmem:[%s1 + $0x10] sm:$0xf]
      %v207 = vld [vmem:[%s1 + $0x14] sm:$0xf]
      %v208 = vld [vmem:[%s2] sm:$0x1]
      %v210 = vperm.slane %v208, 0
      %v218 = vunpack.c.l.b16 %v202
      %v219 = vunpack.c.l.b16 %v203
      %v220 = vunpack.c.l.b16 %v204
      %v221 = vunpack.c.l.b16 %v205
      %v222 = vunpack.c.l.b16 %v206
      %v223 = vunpack.c.l.b16 %v207
      %v224 = vpack.c.b16 %v219, %v218
      %v225 = vpack.c.b16 %v221, %v220
      %v226 = vpack.c.b16 %v223, %v222
      %vm230 = vcmask 392192
      %v232 = vsel %vm230, %v201, 0
      %234 = vmatpush.bf16.msra.mxu0 0
      %235 = vmatpush.bf16.msra.mxu0 0
      %236 = vmatpush.bf16.msra.mxu0 0
      %237 = vmatpush.bf16.msra.mxu0 0
      %238 = vmatpush.bf16.msra.mxu0 0
      %239 = vmatpush.bf16.msra.mxu0 %v226
      %240 = vmatpush.bf16.msra.mxu0 %v225
      %241 = vmatpush.bf16.msra.mxu0 %v224
      %242 = vmatmul.bf16.gmra.mxu0 %v232
      %v243 = vpop.f32.mrf.mxu0
      %v244 = vadd.f32 %v210, %v243
      %v245 = vpop.f32.mrf.mxu0
      %v246 = vadd.f32 %v210, %v245
      %247 = vdwg.mxu0
      %v248 = vld [vmem:[%s3] sm:$0xff]
      %v249 = vld [vmem:[%s3 + $0x8] sm:$0xff]
      %v250 = vadd.f32 %v244, %v248
      %v251 = vadd.f32 %v246, %v249
      %vm252 = vcmask 261120
      %253 = vst.msk [vmem:[%s197] sm:$0xff] %vm252, %v250
      %254 = vst.msk [vmem:[%s197 + $0x8] sm:$0xff] %vm252, %v251
      %p255 = scmp.lt.s32.totalorder %s15, 1
      %s256 = scalar_select %p255, %s15, 1
      %s257 = smul.addr %s256, 2
      %s258 = smul.addr %s257, 8
      %s259 = scalar_lea.vmem %s4, %s258
      // Predicated region
      $region37: #{transformer_pose_forward.8} parent=35 // pred_check
        %p260 = pneg %p122
      $region38: #{transformer_pose_forward.8} parent=35 // pred_check_branch
        %262 = sbr.rel (%p260) target = $region40
      $region39: #{transformer_pose_forward.8} parent=35 // pred_region
        _
      $region40: #{transformer_pose_forward.8} parent=35 // pred_fallthru
        _
    $region36: #{transformer_pose_forward.8} parent=5 // pred_fallthru
      _
    %p263 = scmp.le.s32.totalorder 2, %s10
    // Predicated region
    $region41: #{transformer_pose_forward.8} parent=5 // pred_check
      %p264 = pneg %p263
    $region42: #{transformer_pose_forward.8} parent=5 // pred_check_branch
      %266 = sbr.rel (%p264) target = $region44
    $region43: #{transformer_pose_forward.8} parent=5 // pred_region
      %s267 = ssub.s32 %s10, 2
      // Predicated region
      $region45: #{transformer_pose_forward.8} parent=43 // pred_check
        %p268 = pneg %p128
      $region46: #{transformer_pose_forward.8} parent=43 // pred_check_branch
        %270 = sbr.rel (%p268) target = $region48
      $region47: #{transformer_pose_forward.8} parent=43 // pred_region
        %p271 = scmp.lt.s32.totalorder %s16, 1
        %s272 = scalar_select %p271, %s16, 1
        %s273 = smul.addr %s272, 2
        %s274 = smul.addr %s273, 8
        %s275 = scalar_lea.vmem %s4, %s274
      $region48: #{transformer_pose_forward.8} parent=43 // pred_fallthru
        _
    $region44: #{transformer_pose_forward.8} parent=5 // pred_fallthru
      _
  $region6: #{transformer_pose_forward.8} parent=0 // loop_footer
    %s14 = sadd.s32 1, %s10
  $region7: #{transformer_pose_forward.8} parent=0 // loop_footer_branch
    %9 = sbr.rel target = $region3
  $region8: #{transformer_pose_forward.8} parent=0 // loop_exit
    _

// kernel: transformer_pose_forward.10
$region0: #{transformer_pose_forward.10}
  #allocation0 [shape = 'u32[]', space=smem, size = 0x4, offset = 0x4, fixed_abs, tag = 'smem constant byte address 0x4 - core index']
  #allocation1 [shape = 'u32[72,128]{1,0:T(1,128)}', space=vmem, size = 0x9000, scoped, tag = 'internal scratch']
  %s0 = inlined_call_operand.vmem [shape: f32[2,17,32], index: 0, kind: input, shape index: {}]
  %s1 = inlined_call_operand.vmem [shape: f32[1,32], index: 1, kind: input, shape index: {}]
  %s2 = inlined_call_operand.vmem [shape: f32[1,32], index: 2, kind: input, shape index: {}, may-alias: {2,6}]
  %s3 = inlined_call_operand.vmem [shape: bf16[32,64], index: 3, kind: input, shape index: {}]
  %s4 = inlined_call_operand.vmem [shape: f32[1,64], index: 4, kind: input, shape index: {}]
  %s5 = inlined_call_operand.vmem [shape: bf16[64,32], index: 5, kind: input, shape index: {}]
  %s6 = inlined_call_operand.vmem [shape: f32[1,32], index: 6, kind: input, shape index: {}, may-alias: {2,6}]
  %s7 = inlined_call_operand.vmem [shape: f32[2,17,32], index: 7, kind: output, shape index: {}]
  %s8 = sld [smem:[#allocation0]]
  $region61: #{transformer_pose_forward.10} parent=0
    _
  %s10 = ssub.s32 1, %s8
  %s11 = scalar_select 0, %s10, %s8
  loop: start=0, step=1, limit=4
  $region2: #{transformer_pose_forward.10} parent=0 // loop_pre_header
    _
  $region3: #{transformer_pose_forward.10} parent=0 // loop_header
    %s13 = sphi 0, %s17
    %p14 = scmp.ge.s32.totalorder %s13, 4
    %s23 = sphi 0, %s25
    %s26 = sphi 0, %s23
    %s27 = sphi 0, %s26
    %s43 = sphi 0, %s27
    %s47 = sphi 0, %s47
    %s49 = sphi 0, %s47
    %s50 = sphi 0, %s49
    %s64 = sphi 0, %s50
    %s68 = sphi 0, %s68
    %s70 = sphi 0, %s68
    %s71 = sphi 0, %s70
    %s85 = sphi 0, %s71
    %s89 = sphi 0, %s89
    %s91 = sphi 0, %s89
    %s92 = sphi 0, %s91
    %s106 = sphi 0, %s92
    %s110 = sphi 0, %s110
    %s112 = sphi 0, %s110
    %s113 = sphi 0, %s112
    %s127 = sphi 0, %s113
    %s131 = sphi 0, %s131
    %s133 = sphi 0, %s131
    %s134 = sphi 0, %s133
    %s148 = sphi 0, %s134
    %s152 = sphi 0, %s152
    %s154 = sphi 0, %s152
    %s155 = sphi 0, %s154
    %s169 = sphi 0, %s155
    %s175 = sphi 0, %s177
    %s178 = sphi 0, %s175
    %s179 = sphi 0, %s178
    %s195 = sphi 0, %s179
  $region4: #{transformer_pose_forward.10} parent=0 // loop_header_branch
    %16 = sbr.rel (%p14) target = $region8
  $region5: #{transformer_pose_forward.10} parent=0 // loop_body
    %s18 = ssub.s32 %s13, 1
    %s19 = ssub.s32 %s13, 2
    %s20 = sadd.s32 %s13, 1
    %s21 = ssub.s32 %s13, %s20
    %p22 = scmp.eq.s32.totalorder %s21, 0
    %s24 = sadd.s32 %s23, 1
    %s25 = scalar_select %p22, %s23, %s24
    %p28 = pneg %p22
    %p29 = scmp.eq.s32.totalorder %s13, 1
    %p30 = por %p28, %p29
    %p31 = scmp.ne.s32.totalorder %s23, %s26
    %p32 = scmp.eq.s32.totalorder %s13, 0
    %p33 = por %p31, %p32
    %p34 = scmp.ne.s32.totalorder %s23, %s26
    %p35 = scmp.eq.s32.totalorder %s18, 1
    %p36 = por %p34, %p35
    %p37 = scmp.ne.s32.totalorder %s26, %s27
    %p38 = scmp.eq.s32.totalorder %s18, 0
    %p39 = por %p37, %p38
    %p40 = scmp.ne.s32.totalorder %s26, %s27
    %p41 = scmp.eq.s32.totalorder %s19, 1
    %p42 = por %p40, %p41
    %p44 = scmp.ne.s32.totalorder %s27, %s43
    %p45 = scmp.eq.s32.totalorder %s19, 0
    %p46 = por %p44, %p45
    %s48 = sadd.s32 %s47, 1
    %p51 = scmp.eq.s32.totalorder %s13, 1
    %p52 = scmp.ne.s32.totalorder %s47, %s49
    %p53 = scmp.eq.s32.totalorder %s13, 0
    %p54 = por %p52, %p53
    %p55 = scmp.ne.s32.totalorder %s47, %s49
    %p56 = scmp.eq.s32.totalorder %s18, 1
    %p57 = por %p55, %p56
    %p58 = scmp.ne.s32.totalorder %s49, %s50
    %p59 = scmp.eq.s32.totalorder %s18, 0
    %p60 = por %p58, %p59
    %p61 = scmp.ne.s32.totalorder %s49, %s50
    %p62 = scmp.eq.s32.totalorder %s19, 1
    %p63 = por %p61, %p62
    %p65 = scmp.ne.s32.totalorder %s50, %s64
    %p66 = scmp.eq.s32.totalorder %s19, 0
    %p67 = por %p65, %p66
    %s69 = sadd.s32 %s68, 1
    %p72 = scmp.eq.s32.totalorder %s13, 1
    %p73 = scmp.ne.s32.totalorder %s68, %s70
    %p74 = scmp.eq.s32.totalorder %s13, 0
    %p75 = por %p73, %p74
    %p76 = scmp.ne.s32.totalorder %s68, %s70
    %p77 = scmp.eq.s32.totalorder %s18, 1
    %p78 = por %p76, %p77
    %p79 = scmp.ne.s32.totalorder %s70, %s71
    %p80 = scmp.eq.s32.totalorder %s18, 0
    %p81 = por %p79, %p80
    %p82 = scmp.ne.s32.totalorder %s70, %s71
    %p83 = scmp.eq.s32.totalorder %s19, 1
    %p84 = por %p82, %p83
    %p86 = scmp.ne.s32.totalorder %s71, %s85
    %p87 = scmp.eq.s32.totalorder %s19, 0
    %p88 = por %p86, %p87
    %s90 = sadd.s32 %s89, 1
    %p93 = scmp.eq.s32.totalorder %s13, 1
    %p94 = scmp.ne.s32.totalorder %s89, %s91
    %p95 = scmp.eq.s32.totalorder %s13, 0
    %p96 = por %p94, %p95
    %p97 = scmp.ne.s32.totalorder %s89, %s91
    %p98 = scmp.eq.s32.totalorder %s18, 1
    %p99 = por %p97, %p98
    %p100 = scmp.ne.s32.totalorder %s91, %s92
    %p101 = scmp.eq.s32.totalorder %s18, 0
    %p102 = por %p100, %p101
    %p103 = scmp.ne.s32.totalorder %s91, %s92
    %p104 = scmp.eq.s32.totalorder %s19, 1
    %p105 = por %p103, %p104
    %p107 = scmp.ne.s32.totalorder %s92, %s106
    %p108 = scmp.eq.s32.totalorder %s19, 0
    %p109 = por %p107, %p108
    %s111 = sadd.s32 %s110, 1
    %p114 = scmp.eq.s32.totalorder %s13, 1
    %p115 = scmp.ne.s32.totalorder %s110, %s112
    %p116 = scmp.eq.s32.totalorder %s13, 0
    %p117 = por %p115, %p116
    %p118 = scmp.ne.s32.totalorder %s110, %s112
    %p119 = scmp.eq.s32.totalorder %s18, 1
    %p120 = por %p118, %p119
    %p121 = scmp.ne.s32.totalorder %s112, %s113
    %p122 = scmp.eq.s32.totalorder %s18, 0
    %p123 = por %p121, %p122
    %p124 = scmp.ne.s32.totalorder %s112, %s113
    %p125 = scmp.eq.s32.totalorder %s19, 1
    %p126 = por %p124, %p125
    %p128 = scmp.ne.s32.totalorder %s113, %s127
    %p129 = scmp.eq.s32.totalorder %s19, 0
    %p130 = por %p128, %p129
    %s132 = sadd.s32 %s131, 1
    %p135 = scmp.eq.s32.totalorder %s13, 1
    %p136 = scmp.ne.s32.totalorder %s131, %s133
    %p137 = scmp.eq.s32.totalorder %s13, 0
    %p138 = por %p136, %p137
    %p139 = scmp.ne.s32.totalorder %s131, %s133
    %p140 = scmp.eq.s32.totalorder %s18, 1
    %p141 = por %p139, %p140
    %p142 = scmp.ne.s32.totalorder %s133, %s134
    %p143 = scmp.eq.s32.totalorder %s18, 0
    %p144 = por %p142, %p143
    %p145 = scmp.ne.s32.totalorder %s133, %s134
    %p146 = scmp.eq.s32.totalorder %s19, 1
    %p147 = por %p145, %p146
    %p149 = scmp.ne.s32.totalorder %s134, %s148
    %p150 = scmp.eq.s32.totalorder %s19, 0
    %p151 = por %p149, %p150
    %s153 = sadd.s32 %s152, 1
    %p156 = scmp.eq.s32.totalorder %s13, 1
    %p157 = scmp.ne.s32.totalorder %s152, %s154
    %p158 = scmp.eq.s32.totalorder %s13, 0
    %p159 = por %p157, %p158
    %p160 = scmp.ne.s32.totalorder %s152, %s154
    %p161 = scmp.eq.s32.totalorder %s18, 1
    %p162 = por %p160, %p161
    %p163 = scmp.ne.s32.totalorder %s154, %s155
    %p164 = scmp.eq.s32.totalorder %s18, 0
    %p165 = por %p163, %p164
    %p166 = scmp.ne.s32.totalorder %s154, %s155
    %p167 = scmp.eq.s32.totalorder %s19, 1
    %p168 = por %p166, %p167
    %p170 = scmp.ne.s32.totalorder %s155, %s169
    %p171 = scmp.eq.s32.totalorder %s19, 0
    %p172 = por %p170, %p171
    %s173 = ssub.s32 %s13, %s20
    %p174 = scmp.eq.s32.totalorder %s173, 0
    %s176 = sadd.s32 %s175, 1
    %s177 = scalar_select %p174, %s175, %s176
    %p180 = pneg %p174
    %p181 = scmp.eq.s32.totalorder %s13, 1
    %p182 = por %p180, %p181
    %p183 = scmp.ne.s32.totalorder %s175, %s178
    %p184 = scmp.eq.s32.totalorder %s13, 0
    %p185 = por %p183, %p184
    %p186 = scmp.ne.s32.totalorder %s175, %s178
    %p187 = scmp.eq.s32.totalorder %s18, 1
    %p188 = por %p186, %p187
    %p189 = scmp.ne.s32.totalorder %s178, %s179
    %p190 = scmp.eq.s32.totalorder %s18, 0
    %p191 = por %p189, %p190
    %p192 = scmp.ne.s32.totalorder %s178, %s179
    %p193 = scmp.eq.s32.totalorder %s19, 1
    %p194 = por %p192, %p193
    %p196 = scmp.ne.s32.totalorder %s179, %s195
    %p197 = scmp.eq.s32.totalorder %s19, 0
    %p198 = por %p196, %p197
    %p199 = scmp.le.s32.totalorder 1, %s13
    %p200 = scmp.lt.s32.totalorder %s13, 3
    %p201 = pnand %p199, %p200
    %p202 = pneg %p201
    // Predicated region
    $region9: #{transformer_pose_forward.10} parent=5 // pred_check
      _
    $region10: #{transformer_pose_forward.10} parent=5 // pred_check_branch
      %204 = sbr.rel (%p201) target = $region12
    $region11: #{transformer_pose_forward.10} parent=5 // pred_region
      %s205 = ssub.s32 %s13, 1
      // Predicated region
      $region13: #{transformer_pose_forward.10} parent=11 // pred_check
        %p206 = pneg %p60
      $region14: #{transformer_pose_forward.10} parent=11 // pred_check_branch
        %208 = sbr.rel (%p206) target = $region16
      $region15: #{transformer_pose_forward.10} parent=11 // pred_region
        _
      $region16: #{transformer_pose_forward.10} parent=11 // pred_fallthru
        _
      // Predicated region
      $region17: #{transformer_pose_forward.10} parent=11 // pred_check
        %p209 = pneg %p81
      $region18: #{transformer_pose_forward.10} parent=11 // pred_check_branch
        %211 = sbr.rel (%p209) target = $region20
      $region19: #{transformer_pose_forward.10} parent=11 // pred_region
        _
      $region20: #{transformer_pose_forward.10} parent=11 // pred_fallthru
        _
      // Predicated region
      $region21: #{transformer_pose_forward.10} parent=11 // pred_check
        %p212 = pneg %p102
      $region22: #{transformer_pose_forward.10} parent=11 // pred_check_branch
        %214 = sbr.rel (%p212) target = $region24
      $region23: #{transformer_pose_forward.10} parent=11 // pred_region
        _
      $region24: #{transformer_pose_forward.10} parent=11 // pred_fallthru
        _
      // Predicated region
      $region25: #{transformer_pose_forward.10} parent=11 // pred_check
        %p215 = pneg %p123
      $region26: #{transformer_pose_forward.10} parent=11 // pred_check_branch
        %217 = sbr.rel (%p215) target = $region28
      $region27: #{transformer_pose_forward.10} parent=11 // pred_region
        _
      $region28: #{transformer_pose_forward.10} parent=11 // pred_fallthru
        _
      // Predicated region
      $region29: #{transformer_pose_forward.10} parent=11 // pred_check
        %p218 = pneg %p144
      $region30: #{transformer_pose_forward.10} parent=11 // pred_check_branch
        %220 = sbr.rel (%p218) target = $region32
      $region31: #{transformer_pose_forward.10} parent=11 // pred_region
        _
      $region32: #{transformer_pose_forward.10} parent=11 // pred_fallthru
        _
      // Predicated region
      $region33: #{transformer_pose_forward.10} parent=11 // pred_check
        %p221 = pneg %p165
      $region34: #{transformer_pose_forward.10} parent=11 // pred_check_branch
        %223 = sbr.rel (%p221) target = $region36
      $region35: #{transformer_pose_forward.10} parent=11 // pred_region
        _
      $region36: #{transformer_pose_forward.10} parent=11 // pred_fallthru
        _
    $region12: #{transformer_pose_forward.10} parent=5 // pred_fallthru
      _
    %p224 = scmp.lt.s32.totalorder %s13, 2
    // Predicated region
    $region37: #{transformer_pose_forward.10} parent=5 // pred_check
      %p225 = pneg %p224
    $region38: #{transformer_pose_forward.10} parent=5 // pred_check_branch
      %227 = sbr.rel (%p225) target = $region40
    $region39: #{transformer_pose_forward.10} parent=5 // pred_region
      // Predicated region
      $region41: #{transformer_pose_forward.10} parent=39 // pred_check
        %p228 = pneg %p33
      $region42: #{transformer_pose_forward.10} parent=39 // pred_check_branch
        %230 = sbr.rel (%p228) target = $region44
      $region43: #{transformer_pose_forward.10} parent=39 // pred_region
        %p231 = scmp.lt.s32.totalorder %s13, 1
        %s232 = scalar_select %p231, %s13, 1
        %s233 = smul.addr %s232, 3
        %s234 = smul.addr %s233, 8
        %s235 = scalar_lea.vmem %s0, %s234
      $region44: #{transformer_pose_forward.10} parent=39 // pred_fallthru
        _
    $region40: #{transformer_pose_forward.10} parent=5 // pred_fallthru
      _
    %p236 = scmp.le.s32.totalorder 1, %s13
    %p237 = scmp.lt.s32.totalorder %s13, 3
    %p238 = pnand %p236, %p237
    %p239 = pneg %p238
    // Predicated region
    $region45: #{transformer_pose_forward.10} parent=5 // pred_check
      _
    $region46: #{transformer_pose_forward.10} parent=5 // pred_check_branch
      %241 = sbr.rel (%p238) target = $region48
    $region47: #{transformer_pose_forward.10} parent=5 // pred_region
      %s242 = ssub.s32 %s13, 1
      %p243 = scmp.lt.s32.totalorder %s18, 1
      %s244 = scalar_select %p243, %s18, 1
      %s245 = smul.addr %s244, 3
      %s246 = smul.addr %s245, 8
      %s247 = scalar_lea.vmem %s0, %s246
      %p248 = pneg %p39
      %p249 = pneg %p36
      %p250 = pneg %p60
      %p251 = pneg %p57
      %p252 = pneg %p81
      %p253 = pneg %p78
      %p254 = pneg %p102
      %p255 = pneg %p99
      %p256 = pneg %p123
      %p257 = pneg %p120
      %p258 = pneg %p144
      %p259 = pneg %p141
      %p260 = pneg %p165
      %p261 = pneg %p162
      %p262 = pneg %p191
      %p263 = pneg %p188
      %p264 = scmp.lt.s32.totalorder %s18, 1
      %s265 = scalar_select %p264, %s18, 1
      %s266 = smul.addr %s265, 3
      %s267 = smul.addr %s266, 8
      %s268 = scalar_lea.vmem %s7, %s267
      %p269 = scmp.lt.s32.totalorder %s18, 1
      %s270 = scalar_select %p269, %s18, 1
      %s271 = smul.addr %s270, 3
      %s272 = smul.addr %s271, 8
      %s273 = scalar_lea.vmem %s0, %s272
      %p274 = scmp.lt.s32.totalorder %s18, 1
      %s275 = scalar_select %p274, %s18, 1
      %s276 = smul.addr %s275, 3
      %s277 = smul.addr %s276, 8
      %s278 = scalar_lea.vmem %s7, %s277
      %v280 = vld [vmem:[%s273] sm:$0xff]
      %v281 = vld [vmem:[%s273 + $0x8] sm:$0xff]
      %v282 = vld [vmem:[%s273 + $0x10] sm:$0x1]
      %v283 = vld [vmem:[%s1] sm:$0x1]
      %v284 = vld [vmem:[%s2] sm:$0x1]
      %vm285 = vcmask 261120
      %v286 = vsel %vm285, %v280, 0.0
      %287 = vadd.xlane.f32.xlu0 %v286
      %v288 = vpop.xlane.xlu0 %287
      %v289 = vsel %vm285, %v281, 0.0
      %290 = vadd.xlane.f32.xlu0 %v289
      %v291 = vpop.xlane.xlu0 %290
      %vm292 = vcmask 253952
      %v293 = vsel %vm292, %v282, 0.0
      %294 = vadd.xlane.f32.xlu0 %v293
      %v295 = vpop.xlane.xlu0 %294
      %v296 = vrcp.pop 32.0
      %v297 = vmul.f32 32.0, %v296
      %v298 = vsub.f32 1.0, %v297
      %v299 = vmul.f32 %v296, %v298
      %v300 = vadd.f32 %v296, %v299
      %vm301 = vweird.f32 %v296
      %v302 = vsel %vm301, %v296, %v300
      %v303 = vmul.f32 %v288, %v302
      %v304 = vmul.f32 %v291, %v302
      %v305 = vmul.f32 %v295, %v302
      %v306 = vsub.f32 %v280, %v303
      %v307 = vsub.f32 %v281, %v304
      %v308 = vsub.f32 %v282, %v305
      %v309 = vmul.f32 %v306, %v306
      %v310 = vmul.f32 %v307, %v307
      %v311 = vmul.f32 %v308, %v308
      %v312 = vsel %vm285, %v309, 0.0
      %313 = vadd.xlane.f32.xlu0 %v312
      %v314 = vpop.xlane.xlu0 %313
      %v315 = vsel %vm285, %v310, 0.0
      %316 = vadd.xlane.f32.xlu0 %v315
      %v317 = vpop.xlane.xlu0 %316
      %v318 = vsel %vm292, %v311, 0.0
      %319 = vadd.xlane.f32.xlu0 %v318
      %v320 = vpop.xlane.xlu0 %319
      %v321 = vmul.f32 %v314, %v302
      %v322 = vmul.f32 %v317, %v302
      %v323 = vmul.f32 %v320, %v302
      %v324 = vadd.f32 %v321, 1e-05
      %v325 = vadd.f32 %v322, 1e-05
      %v326 = vadd.f32 %v323, 1e-05
      %v327 = vrsqrt.pop %v324
      %v328 = vmul.f32 %v327, %v324
      %v329 = vmul.f32 %v328, %v327
      %v330 = vmul.f32 0.5, %v329
      %v331 = vsub.f32 1.5, %v330
      %v332 = vmul.f32 %v327, %v331
      %vm333 = vweird.f32 %v324
      %vm334 = vweird.f32 %v327
      %vm335 = vmor %vm333, %vm334
      %v336 = vsel %vm335, %v327, %v332
      %v337 = vrsqrt.pop %v325
      %v338 = vmul.f32 %v337, %v325
      %v339 = vmul.f32 %v338, %v337
      %v340 = vmul.f32 0.5, %v339
      %v341 = vsub.f32 1.5, %v340
      %v342 = vmul.f32 %v337, %v341
      %vm343 = vweird.f32 %v325
      %vm344 = vweird.f32 %v337
      %vm345 = vmor %vm343, %vm344
      %v346 = vsel %vm345, %v337, %v342
      %v347 = vrsqrt.pop %v326
      %v348 = vmul.f32 %v347, %v326
      %v349 = vmul.f32 %v348, %v347
      %v350 = vmul.f32 0.5, %v349
      %v351 = vsub.f32 1.5, %v350
      %v352 = vmul.f32 %v347, %v351
      %vm353 = vweird.f32 %v326
      %vm354 = vweird.f32 %v347
      %vm355 = vmor %vm353, %vm354
      %v356 = vsel %vm355, %v347, %v352
      %v357 = vmul.f32 %v306, %v336
      %v358 = vmul.f32 %v307, %v346
      %v359 = vmul.f32 %v308, %v356
      %v361 = vperm.slane %v283, 0
      %v363 = vmul.f32 %v357, %v361
      %v364 = vmul.f32 %v358, %v361
      %v365 = vmul.f32 %v359, %v361
      %v367 = vperm.slane %v284, 0
      %v369 = vadd.f32 %v363, %v367
      %v370 = vadd.f32 %v364, %v367
      %v371 = vadd.f32 %v365, %v367
      %v372 = vpack.c.bf16 %v370, %v369
      %v373 = vpack.c.bf16 %v371, %v371
      %v374 = vld [vmem:[%s3] sm:$0xf]
      %v375 = vld [vmem:[%s3 + $0x4] sm:$0xf]
      %v376 = vld [vmem:[%s3 + $0x8] sm:$0xf]
      %v377 = vld [vmem:[%s3 + $0xc] sm:$0xf]
      %v378 = vld [vmem:[%s4] sm:$0x1]
      %v380 = vperm.slane %v378, 0
      %v386 = vunpack.c.l.b16 %v374
      %v387 = vunpack.c.l.b16 %v375
      %v388 = vunpack.c.l.b16 %v376
      %v389 = vunpack.c.l.b16 %v377
      %v390 = vpack.c.b16 %v387, %v386
      %v391 = vpack.c.b16 %v389, %v388
      %v395 = vsel %vm285, %v372, 0
      %v398 = vsel %vm285, %v373, 0
      %400 = vmatpush.bf16.msra.mxu0 0
      %401 = vmatpush.bf16.msra.mxu0 0
      %402 = vmatpush.bf16.msra.mxu0 0
      %403 = vmatpush.bf16.msra.mxu0 0
      %404 = vmatpush.bf16.msra.mxu0 0
      %405 = vmatpush.bf16.msra.mxu0 0
      %406 = vmatpush.bf16.msra.mxu0 %v391
      %407 = vmatpush.bf16.msra.mxu0 %v390
      %408 = vmatmul.bf16.gmra.mxu0 %v395
      %v409 = vpop.f32.mrf.mxu0
      %v410 = vadd.f32 %v380, %v409
      %v411 = vpop.f32.mrf.mxu0
      %v412 = vadd.f32 %v380, %v411
      %413 = vmatmul.bf16.gmra.mxu0 %v398
      %v414 = vpop.f32.mrf.mxu0
      %v415 = vadd.f32 %v380, %v414
      %v416 = vpop.f32.mrf.mxu0
      %417 = vdwg.mxu0
      %v418 = vmul.f32 %v410, 0.5
      %v419 = vmul.f32 %v412, 0.5
      %v420 = vmul.f32 %v415, 0.5
      %v421 = vmul.f32 %v410, 0.70710677
      %v422 = vmul.f32 %v412, 0.70710677
      %v423 = vmul.f32 %v415, 0.70710677
      %v424 = vand.u32 2147483647, %v421
      %v425 = vand.u32 2147483647, %v422
      %v426 = vand.u32 2147483647, %v423
      %v427 = vmul.f32 %v424, 0.3275911
      %v428 = vmul.f32 %v425, 0.3275911
      %v429 = vmul.f32 %v426, 0.3275911
      %v430 = vadd.f32 %v427, 1.0
      %v431 = vadd.f32 %v428, 1.0
      %v432 = vadd.f32 %v429, 1.0
      %v433 = vrcp.pop %v430
      %v434 = vmul.f32 %v430, %v433
      %v435 = vsub.f32 1.0, %v434
      %v436 = vmul.f32 %v433, %v435
      %v437 = vadd.f32 %v433, %v436
      %vm438 = vweird.f32 %v430
      %vm439 = vweird.f32 %v433
      %vm440 = vmor %vm438, %vm439
      %v441 = vsel %vm440, %v433, %v437
      %v442 = vand.u32 2147483647, %v430
      %vm443 = vcmp.eq.f32.partialorder %v442, 8.507059e+37
      %v444 = vand.u32 %v430, 2147483648
      %v445 = vor.u32 1.1754944e-38, %v444
      %v446 = vsel %vm443, %v445, %v441
      %v447 = vmul.f32 1.0, %v446
      %v448 = vrcp.pop %v431
      %v449 = vmul.f32 %v431, %v448
      %v450 = vsub.f32 1.0, %v449
      %v451 = vmul.f32 %v448, %v450
      %v452 = vadd.f32 %v448, %v451
      %vm453 = vweird.f32 %v431
      %vm454 = vweird.f32 %v448
      %vm455 = vmor %vm453, %vm454
      %v456 = vsel %vm455, %v448, %v452
      %v457 = vand.u32 2147483647, %v431
      %vm458 = vcmp.eq.f32.partialorder %v457, 8.507059e+37
      %v459 = vand.u32 %v431, 2147483648
      %v460 = vor.u32 1.1754944e-38, %v459
      %v461 = vsel %vm458, %v460, %v456
      %v462 = vmul.f32 1.0, %v461
      %v463 = vrcp.pop %v432
      %v464 = vmul.f32 %v432, %v463
      %v465 = vsub.f32 1.0, %v464
      %v466 = vmul.f32 %v463, %v465
      %v467 = vadd.f32 %v463, %v466
      %vm468 = vweird.f32 %v432
      %vm469 = vweird.f32 %v463
      %vm470 = vmor %vm468, %vm469
      %v471 = vsel %vm470, %v463, %v467
      %v472 = vand.u32 2147483647, %v432
      %vm473 = vcmp.eq.f32.partialorder %v472, 8.507059e+37
      %v474 = vand.u32 %v432, 2147483648
      %v475 = vor.u32 1.1754944e-38, %v474
      %v476 = vsel %vm473, %v475, %v471
      %v477 = vmul.f32 1.0, %v476
      %v478 = vmul.f32 %v447, 1.0614054
      %v479 = vmul.f32 %v462, 1.0614054
      %v480 = vmul.f32 %v477, 1.0614054
      %v481 = vadd.f32 %v478, -1.4531521
      %v482 = vadd.f32 %v479, -1.4531521
      %v483 = vadd.f32 %v480, -1.4531521
      %v484 = vmul.f32 %v481, %v447
      %v485 = vmul.f32 %v482, %v462
      %v486 = vmul.f32 %v483, %v477
      %v487 = vadd.f32 %v484, 1.4214138
      %v488 = vadd.f32 %v485, 1.4214138
      %v489 = vadd.f32 %v486, 1.4214138
      %v490 = vmul.f32 %v487, %v447
      %v491 = vmul.f32 %v488, %v462
      %v492 = vmul.f32 %v489, %v477
      %v493 = vadd.f32 %v490, -0.28449672
      %v494 = vadd.f32 %v491, -0.28449672
      %v495 = vadd.f32 %v492, -0.28449672
      %v496 = vmul.f32 %v493, %v447
      %v497 = vmul.f32 %v494, %v462
      %v498 = vmul.f32 %v495, %v477
      %v499 = vadd.f32 %v496, 0.2548296
      %v500 = vadd.f32 %v497, 0.2548296
      %v501 = vadd.f32 %v498, 0.2548296
      %v502 = vmul.f32 %v499, %v447
      %v503 = vmul.f32 %v500, %v462
      %v504 = vmul.f32 %v501, %v477
      %v505 = vsub.f32 0.0, %v424
      %v506 = vsub.f32 0.0, %v425
      %v507 = vsub.f32 0.0, %v426
      %v508 = vmul.f32 %v505, %v424
      %v509 = vmul.f32 %v506, %v425
      %v510 = vmul.f32 %v507, %v426
      %v511 = vmul.f32 %v508, 1.442695
      %v512 = vpow.pop %v511
      %v513 = vmul.f32 %v509, 1.442695
      %v514 = vpow.pop %v513
      %v515 = vmul.f32 %v510, 1.442695
      %v516 = vpow.pop %v515
      %v517 = vmul.f32 %v502, %v512
      %v518 = vmul.f32 %v503, %v514
      %v519 = vmul.f32 %v504, %v516
      %v520 = vsub.f32 1.0, %v517
      %v521 = vsub.f32 1.0, %v518
      %v522 = vsub.f32 1.0, %v519
      %vm523 = vcmp.ge.f32.partialorder %v421, 0.0
      %vm524 = vcmp.ge.f32.partialorder %v422, 0.0
      %vm525 = vcmp.ge.f32.partialorder %v423, 0.0
      %v526 = vsub.f32 0.0, %v520
      %v527 = vsub.f32 0.0, %v521
      %v528 = vsub.f32 0.0, %v522
      %v529 = vsel %vm523, %v520, %v526
      %v530 = vsel %vm524, %v521, %v527
      %v531 = vsel %vm525, %v522, %v528
      %v532 = vadd.f32 %v529, 1.0
      %v533 = vadd.f32 %v530, 1.0
      %v534 = vadd.f32 %v531, 1.0
      %v535 = vmul.f32 %v418, %v532
      %v536 = vmul.f32 %v419, %v533
      %v537 = vmul.f32 %v420, %v534
      %v538 = vpack.c.bf16 %v536, %v535
      %v539 = vpack.c.bf16 %v537, %v537
      %v540 = vld [vmem:[%s5] sm:$0xf]
      %v541 = vld [vmem:[%s5 + $0x4] sm:$0xf]
      %v542 = vld [vmem:[%s5 + $0x8] sm:$0xf]
      %v543 = vld [vmem:[%s5 + $0xc] sm:$0xf]
      %v544 = vld [vmem:[%s5 + $0x10] sm:$0xf]
      %v545 = vld [vmem:[%s5 + $0x14] sm:$0xf]
      %v546 = vld [vmem:[%s5 + $0x18] sm:$0xf]
      %v547 = vld [vmem:[%s5 + $0x1c] sm:$0xf]
      %v548 = vld [vmem:[%s6] sm:$0x1]
      %v550 = vperm.slane %v548, 0
      %v560 = vunpack.c.l.b16 %v540
      %v561 = vunpack.c.l.b16 %v541
      %v562 = vunpack.c.l.b16 %v542
      %v563 = vunpack.c.l.b16 %v543
      %v564 = vunpack.c.l.b16 %v544
      %v565 = vunpack.c.l.b16 %v545
      %v566 = vunpack.c.l.b16 %v546
      %v567 = vunpack.c.l.b16 %v547
      %v568 = vpack.c.b16 %v561, %v560
      %v569 = vpack.c.b16 %v563, %v562
      %v570 = vpack.c.b16 %v565, %v564
      %v571 = vpack.c.b16 %v567, %v566
      %vm576 = vcmask 523264
      %v578 = vsel %vm576, %v538, 0
      %v581 = vsel %vm576, %v539, 0
      %583 = vmatpush.bf16.msra.mxu0 0
      %584 = vmatpush.bf16.msra.mxu0 0
      %585 = vmatpush.bf16.msra.mxu0 0
      %586 = vmatpush.bf16.msra.mxu0 0
      %587 = vmatpush.bf16.msra.mxu0 %v571
      %588 = vmatpush.bf16.msra.mxu0 %v570
      %589 = vmatpush.bf16.msra.mxu0 %v569
      %590 = vmatpush.bf16.msra.mxu0 %v568
      %591 = vmatmul.bf16.gmra.mxu0 %v578
      %v592 = vpop.f32.mrf.mxu0
      %v593 = vadd.f32 %v550, %v592
      %v594 = vpop.f32.mrf.mxu0
      %v595 = vadd.f32 %v550, %v594
      %596 = vmatmul.bf16.gmra.mxu0 %v581
      %v597 = vpop.f32.mrf.mxu0
      %v598 = vadd.f32 %v550, %v597
      %v599 = vpop.f32.mrf.mxu0
      %600 = vdwg.mxu0
      %v601 = vadd.f32 %v280, %v593
      %v602 = vadd.f32 %v281, %v595
      %v603 = vadd.f32 %v282, %v598
      %604 = vst.msk [vmem:[%s278] sm:$0xff] %vm285, %v601
      %605 = vst.msk [vmem:[%s278 + $0x8] sm:$0xff] %vm285, %v602
      %606 = vst.msk [vmem:[%s278 + $0x10] sm:$0x1] %vm292, %v603
      %p607 = scmp.lt.s32.totalorder %s18, 1
      %s608 = scalar_select %p607, %s18, 1
      %s609 = smul.addr %s608, 3
      %s610 = smul.addr %s609, 8
      %s611 = scalar_lea.vmem %s7, %s610
      // Predicated region
      $region49: #{transformer_pose_forward.10} parent=47 // pred_check
        %p612 = pneg %p188
      $region50: #{transformer_pose_forward.10} parent=47 // pred_check_branch
        %614 = sbr.rel (%p612) target = $region52
      $region51: #{transformer_pose_forward.10} parent=47 // pred_region
        _
      $region52: #{transformer_pose_forward.10} parent=47 // pred_fallthru
        _
    $region48: #{transformer_pose_forward.10} parent=5 // pred_fallthru
      _
    %p615 = scmp.le.s32.totalorder 2, %s13
    // Predicated region
    $region53: #{transformer_pose_forward.10} parent=5 // pred_check
      %p616 = pneg %p615
    $region54: #{transformer_pose_forward.10} parent=5 // pred_check_branch
      %618 = sbr.rel (%p616) target = $region56
    $region55: #{transformer_pose_forward.10} parent=5 // pred_region
      %s619 = ssub.s32 %s13, 2
      // Predicated region
      $region57: #{transformer_pose_forward.10} parent=55 // pred_check
        %p620 = pneg %p194
      $region58: #{transformer_pose_forward.10} parent=55 // pred_check_branch
        %622 = sbr.rel (%p620) target = $region60
      $region59: #{transformer_pose_forward.10} parent=55 // pred_region
        %p623 = scmp.lt.s32.totalorder %s19, 1
        %s624 = scalar_select %p623, %s19, 1
        %s625 = smul.addr %s624, 3
        %s626 = smul.addr %s625, 8
        %s627 = scalar_lea.vmem %s7, %s626
      $region60: #{transformer_pose_forward.10} parent=55 // pred_fallthru
        _
    $region56: #{transformer_pose_forward.10} parent=5 // pred_fallthru
      _
  $region6: #{transformer_pose_forward.10} parent=0 // loop_footer
    %s17 = sadd.s32 1, %s13
  $region7: #{transformer_pose_forward.10} parent=0 // loop_footer_branch
    %12 = sbr.rel target = $region3
  $region8: #{transformer_pose_forward.10} parent=0 // loop_exit
    _

// kernel: transformer_pose_forward.9
$region0: #{transformer_pose_forward.9}
  #allocation0 [shape = 'u32[]', space=smem, size = 0x4, offset = 0x4, fixed_abs, tag = 'smem constant byte address 0x4 - core index']
  #allocation1 [shape = 'u32[72,128]{1,0:T(1,128)}', space=vmem, size = 0x9000, scoped, tag = 'internal scratch']
  %s0 = inlined_call_operand.vmem [shape: f32[2,17,32], index: 0, kind: input, shape index: {}]
  %s1 = inlined_call_operand.vmem [shape: f32[1,32], index: 1, kind: input, shape index: {}]
  %s2 = inlined_call_operand.vmem [shape: f32[1,32], index: 2, kind: input, shape index: {}, may-alias: {2,5}]
  %s3 = inlined_call_operand.vmem [shape: bf16[32,96], index: 3, kind: input, shape index: {}]
  %s4 = inlined_call_operand.vmem [shape: bf16[32,32], index: 4, kind: input, shape index: {}]
  %s5 = inlined_call_operand.vmem [shape: f32[1,32], index: 5, kind: input, shape index: {}, may-alias: {2,5}]
  %s6 = inlined_call_operand.vmem [shape: f32[2,17,32], index: 6, kind: output, shape index: {}]
  %s7 = sld [smem:[#allocation0]]
  $region57: #{transformer_pose_forward.9} parent=0
    _
  %s9 = ssub.s32 1, %s7
  %s10 = scalar_select 0, %s9, %s7
  loop: start=0, step=1, limit=4
  $region2: #{transformer_pose_forward.9} parent=0 // loop_pre_header
    _
  $region3: #{transformer_pose_forward.9} parent=0 // loop_header
    %s12 = sphi 0, %s16
    %p13 = scmp.ge.s32.totalorder %s12, 4
    %s22 = sphi 0, %s24
    %s25 = sphi 0, %s22
    %s26 = sphi 0, %s25
    %s42 = sphi 0, %s26
    %s46 = sphi 0, %s46
    %s48 = sphi 0, %s46
    %s49 = sphi 0, %s48
    %s63 = sphi 0, %s49
    %s67 = sphi 0, %s67
    %s69 = sphi 0, %s67
    %s70 = sphi 0, %s69
    %s84 = sphi 0, %s70
    %s88 = sphi 0, %s88
    %s90 = sphi 0, %s88
    %s91 = sphi 0, %s90
    %s105 = sphi 0, %s91
    %s109 = sphi 0, %s109
    %s111 = sphi 0, %s109
    %s112 = sphi 0, %s111
    %s126 = sphi 0, %s112
    %s130 = sphi 0, %s130
    %s132 = sphi 0, %s130
    %s133 = sphi 0, %s132
    %s147 = sphi 0, %s133
    %s153 = sphi 0, %s155
    %s156 = sphi 0, %s153
    %s157 = sphi 0, %s156
    %s173 = sphi 0, %s157
  $region4: #{transformer_pose_forward.9} parent=0 // loop_header_branch
    %15 = sbr.rel (%p13) target = $region8
  $region5: #{transformer_pose_forward.9} parent=0 // loop_body
    %s17 = ssub.s32 %s12, 1
    %s18 = ssub.s32 %s12, 2
    %s19 = sadd.s32 %s12, 1
    %s20 = ssub.s32 %s12, %s19
    %p21 = scmp.eq.s32.totalorder %s20, 0
    %s23 = sadd.s32 %s22, 1
    %s24 = scalar_select %p21, %s22, %s23
    %p27 = pneg %p21
    %p28 = scmp.eq.s32.totalorder %s12, 1
    %p29 = por %p27, %p28
    %p30 = scmp.ne.s32.totalorder %s22, %s25
    %p31 = scmp.eq.s32.totalorder %s12, 0
    %p32 = por %p30, %p31
    %p33 = scmp.ne.s32.totalorder %s22, %s25
    %p34 = scmp.eq.s32.totalorder %s17, 1
    %p35 = por %p33, %p34
    %p36 = scmp.ne.s32.totalorder %s25, %s26
    %p37 = scmp.eq.s32.totalorder %s17, 0
    %p38 = por %p36, %p37
    %p39 = scmp.ne.s32.totalorder %s25, %s26
    %p40 = scmp.eq.s32.totalorder %s18, 1
    %p41 = por %p39, %p40
    %p43 = scmp.ne.s32.totalorder %s26, %s42
    %p44 = scmp.eq.s32.totalorder %s18, 0
    %p45 = por %p43, %p44
    %s47 = sadd.s32 %s46, 1
    %p50 = scmp.eq.s32.totalorder %s12, 1
    %p51 = scmp.ne.s32.totalorder %s46, %s48
    %p52 = scmp.eq.s32.totalorder %s12, 0
    %p53 = por %p51, %p52
    %p54 = scmp.ne.s32.totalorder %s46, %s48
    %p55 = scmp.eq.s32.totalorder %s17, 1
    %p56 = por %p54, %p55
    %p57 = scmp.ne.s32.totalorder %s48, %s49
    %p58 = scmp.eq.s32.totalorder %s17, 0
    %p59 = por %p57, %p58
    %p60 = scmp.ne.s32.totalorder %s48, %s49
    %p61 = scmp.eq.s32.totalorder %s18, 1
    %p62 = por %p60, %p61
    %p64 = scmp.ne.s32.totalorder %s49, %s63
    %p65 = scmp.eq.s32.totalorder %s18, 0
    %p66 = por %p64, %p65
    %s68 = sadd.s32 %s67, 1
    %p71 = scmp.eq.s32.totalorder %s12, 1
    %p72 = scmp.ne.s32.totalorder %s67, %s69
    %p73 = scmp.eq.s32.totalorder %s12, 0
    %p74 = por %p72, %p73
    %p75 = scmp.ne.s32.totalorder %s67, %s69
    %p76 = scmp.eq.s32.totalorder %s17, 1
    %p77 = por %p75, %p76
    %p78 = scmp.ne.s32.totalorder %s69, %s70
    %p79 = scmp.eq.s32.totalorder %s17, 0
    %p80 = por %p78, %p79
    %p81 = scmp.ne.s32.totalorder %s69, %s70
    %p82 = scmp.eq.s32.totalorder %s18, 1
    %p83 = por %p81, %p82
    %p85 = scmp.ne.s32.totalorder %s70, %s84
    %p86 = scmp.eq.s32.totalorder %s18, 0
    %p87 = por %p85, %p86
    %s89 = sadd.s32 %s88, 1
    %p92 = scmp.eq.s32.totalorder %s12, 1
    %p93 = scmp.ne.s32.totalorder %s88, %s90
    %p94 = scmp.eq.s32.totalorder %s12, 0
    %p95 = por %p93, %p94
    %p96 = scmp.ne.s32.totalorder %s88, %s90
    %p97 = scmp.eq.s32.totalorder %s17, 1
    %p98 = por %p96, %p97
    %p99 = scmp.ne.s32.totalorder %s90, %s91
    %p100 = scmp.eq.s32.totalorder %s17, 0
    %p101 = por %p99, %p100
    %p102 = scmp.ne.s32.totalorder %s90, %s91
    %p103 = scmp.eq.s32.totalorder %s18, 1
    %p104 = por %p102, %p103
    %p106 = scmp.ne.s32.totalorder %s91, %s105
    %p107 = scmp.eq.s32.totalorder %s18, 0
    %p108 = por %p106, %p107
    %s110 = sadd.s32 %s109, 1
    %p113 = scmp.eq.s32.totalorder %s12, 1
    %p114 = scmp.ne.s32.totalorder %s109, %s111
    %p115 = scmp.eq.s32.totalorder %s12, 0
    %p116 = por %p114, %p115
    %p117 = scmp.ne.s32.totalorder %s109, %s111
    %p118 = scmp.eq.s32.totalorder %s17, 1
    %p119 = por %p117, %p118
    %p120 = scmp.ne.s32.totalorder %s111, %s112
    %p121 = scmp.eq.s32.totalorder %s17, 0
    %p122 = por %p120, %p121
    %p123 = scmp.ne.s32.totalorder %s111, %s112
    %p124 = scmp.eq.s32.totalorder %s18, 1
    %p125 = por %p123, %p124
    %p127 = scmp.ne.s32.totalorder %s112, %s126
    %p128 = scmp.eq.s32.totalorder %s18, 0
    %p129 = por %p127, %p128
    %s131 = sadd.s32 %s130, 1
    %p134 = scmp.eq.s32.totalorder %s12, 1
    %p135 = scmp.ne.s32.totalorder %s130, %s132
    %p136 = scmp.eq.s32.totalorder %s12, 0
    %p137 = por %p135, %p136
    %p138 = scmp.ne.s32.totalorder %s130, %s132
    %p139 = scmp.eq.s32.totalorder %s17, 1
    %p140 = por %p138, %p139
    %p141 = scmp.ne.s32.totalorder %s132, %s133
    %p142 = scmp.eq.s32.totalorder %s17, 0
    %p143 = por %p141, %p142
    %p144 = scmp.ne.s32.totalorder %s132, %s133
    %p145 = scmp.eq.s32.totalorder %s18, 1
    %p146 = por %p144, %p145
    %p148 = scmp.ne.s32.totalorder %s133, %s147
    %p149 = scmp.eq.s32.totalorder %s18, 0
    %p150 = por %p148, %p149
    %s151 = ssub.s32 %s12, %s19
    %p152 = scmp.eq.s32.totalorder %s151, 0
    %s154 = sadd.s32 %s153, 1
    %s155 = scalar_select %p152, %s153, %s154
    %p158 = pneg %p152
    %p159 = scmp.eq.s32.totalorder %s12, 1
    %p160 = por %p158, %p159
    %p161 = scmp.ne.s32.totalorder %s153, %s156
    %p162 = scmp.eq.s32.totalorder %s12, 0
    %p163 = por %p161, %p162
    %p164 = scmp.ne.s32.totalorder %s153, %s156
    %p165 = scmp.eq.s32.totalorder %s17, 1
    %p166 = por %p164, %p165
    %p167 = scmp.ne.s32.totalorder %s156, %s157
    %p168 = scmp.eq.s32.totalorder %s17, 0
    %p169 = por %p167, %p168
    %p170 = scmp.ne.s32.totalorder %s156, %s157
    %p171 = scmp.eq.s32.totalorder %s18, 1
    %p172 = por %p170, %p171
    %p174 = scmp.ne.s32.totalorder %s157, %s173
    %p175 = scmp.eq.s32.totalorder %s18, 0
    %p176 = por %p174, %p175
    %p177 = scmp.le.s32.totalorder 1, %s12
    %p178 = scmp.lt.s32.totalorder %s12, 3
    %p179 = pnand %p177, %p178
    %p180 = pneg %p179
    // Predicated region
    $region9: #{transformer_pose_forward.9} parent=5 // pred_check
      _
    $region10: #{transformer_pose_forward.9} parent=5 // pred_check_branch
      %182 = sbr.rel (%p179) target = $region12
    $region11: #{transformer_pose_forward.9} parent=5 // pred_region
      %s183 = ssub.s32 %s12, 1
      // Predicated region
      $region13: #{transformer_pose_forward.9} parent=11 // pred_check
        %p184 = pneg %p59
      $region14: #{transformer_pose_forward.9} parent=11 // pred_check_branch
        %186 = sbr.rel (%p184) target = $region16
      $region15: #{transformer_pose_forward.9} parent=11 // pred_region
        _
      $region16: #{transformer_pose_forward.9} parent=11 // pred_fallthru
        _
      // Predicated region
      $region17: #{transformer_pose_forward.9} parent=11 // pred_check
        %p187 = pneg %p80
      $region18: #{transformer_pose_forward.9} parent=11 // pred_check_branch
        %189 = sbr.rel (%p187) target = $region20
      $region19: #{transformer_pose_forward.9} parent=11 // pred_region
        _
      $region20: #{transformer_pose_forward.9} parent=11 // pred_fallthru
        _
      // Predicated region
      $region21: #{transformer_pose_forward.9} parent=11 // pred_check
        %p190 = pneg %p101
      $region22: #{transformer_pose_forward.9} parent=11 // pred_check_branch
        %192 = sbr.rel (%p190) target = $region24
      $region23: #{transformer_pose_forward.9} parent=11 // pred_region
        _
      $region24: #{transformer_pose_forward.9} parent=11 // pred_fallthru
        _
      // Predicated region
      $region25: #{transformer_pose_forward.9} parent=11 // pred_check
        %p193 = pneg %p122
      $region26: #{transformer_pose_forward.9} parent=11 // pred_check_branch
        %195 = sbr.rel (%p193) target = $region28
      $region27: #{transformer_pose_forward.9} parent=11 // pred_region
        _
      $region28: #{transformer_pose_forward.9} parent=11 // pred_fallthru
        _
      // Predicated region
      $region29: #{transformer_pose_forward.9} parent=11 // pred_check
        %p196 = pneg %p143
      $region30: #{transformer_pose_forward.9} parent=11 // pred_check_branch
        %198 = sbr.rel (%p196) target = $region32
      $region31: #{transformer_pose_forward.9} parent=11 // pred_region
        _
      $region32: #{transformer_pose_forward.9} parent=11 // pred_fallthru
        _
    $region12: #{transformer_pose_forward.9} parent=5 // pred_fallthru
      _
    %p199 = scmp.lt.s32.totalorder %s12, 2
    // Predicated region
    $region33: #{transformer_pose_forward.9} parent=5 // pred_check
      %p200 = pneg %p199
    $region34: #{transformer_pose_forward.9} parent=5 // pred_check_branch
      %202 = sbr.rel (%p200) target = $region36
    $region35: #{transformer_pose_forward.9} parent=5 // pred_region
      // Predicated region
      $region37: #{transformer_pose_forward.9} parent=35 // pred_check
        %p203 = pneg %p32
      $region38: #{transformer_pose_forward.9} parent=35 // pred_check_branch
        %205 = sbr.rel (%p203) target = $region40
      $region39: #{transformer_pose_forward.9} parent=35 // pred_region
        %p206 = scmp.lt.s32.totalorder %s12, 1
        %s207 = scalar_select %p206, %s12, 1
        %s208 = smul.addr %s207, 3
        %s209 = smul.addr %s208, 8
        %s210 = scalar_lea.vmem %s0, %s209
      $region40: #{transformer_pose_forward.9} parent=35 // pred_fallthru
        _
    $region36: #{transformer_pose_forward.9} parent=5 // pred_fallthru
      _
    %p211 = scmp.le.s32.totalorder 1, %s12
    %p212 = scmp.lt.s32.totalorder %s12, 3
    %p213 = pnand %p211, %p212
    %p214 = pneg %p213
    // Predicated region
    $region41: #{transformer_pose_forward.9} parent=5 // pred_check
      _
    $region42: #{transformer_pose_forward.9} parent=5 // pred_check_branch
      %216 = sbr.rel (%p213) target = $region44
    $region43: #{transformer_pose_forward.9} parent=5 // pred_region
      %s217 = ssub.s32 %s12, 1
      %p218 = scmp.lt.s32.totalorder %s17, 1
      %s219 = scalar_select %p218, %s17, 1
      %s220 = smul.addr %s219, 3
      %s221 = smul.addr %s220, 8
      %s222 = scalar_lea.vmem %s0, %s221
      %p223 = pneg %p38
      %p224 = pneg %p35
      %p225 = pneg %p59
      %p226 = pneg %p56
      %p227 = pneg %p80
      %p228 = pneg %p77
      %p229 = pneg %p101
      %p230 = pneg %p98
      %p231 = pneg %p122
      %p232 = pneg %p119
      %p233 = pneg %p143
      %p234 = pneg %p140
      %p235 = pneg %p169
      %p236 = pneg %p166
      %p237 = scmp.lt.s32.totalorder %s17, 1
      %s238 = scalar_select %p237, %s17, 1
      %s239 = smul.addr %s238, 3
      %s240 = smul.addr %s239, 8
      %s241 = scalar_lea.vmem %s6, %s240
      %p242 = scmp.lt.s32.totalorder %s17, 1
      %s243 = scalar_select %p242, %s17, 1
      %s244 = smul.addr %s243, 3
      %s245 = smul.addr %s244, 8
      %s246 = scalar_lea.vmem %s0, %s245
      %p247 = scmp.lt.s32.totalorder %s17, 1
      %s248 = scalar_select %p247, %s17, 1
      %s249 = smul.addr %s248, 3
      %s250 = smul.addr %s249, 8
      %s251 = scalar_lea.vmem %s6, %s250
      %v253 = vld [vmem:[%s246] sm:$0xff]
      %v254 = vld [vmem:[%s246 + $0x8] sm:$0xff]
      %v255 = vld [vmem:[%s246 + $0x10] sm:$0x1]
      %v256 = vld [vmem:[%s1] sm:$0x1]
      %v257 = vld [vmem:[%s2] sm:$0x1]
      %vm258 = vcmask 261120
      %v259 = vsel %vm258, %v253, 0.0
      %260 = vadd.xlane.f32.xlu0 %v259
      %v261 = vpop.xlane.xlu0 %260
      %v262 = vsel %vm258, %v254, 0.0
      %263 = vadd.xlane.f32.xlu0 %v262
      %v264 = vpop.xlane.xlu0 %263
      %vm265 = vcmask 253952
      %v266 = vsel %vm265, %v255, 0.0
      %267 = vadd.xlane.f32.xlu0 %v266
      %v268 = vpop.xlane.xlu0 %267
      %v269 = vrcp.pop 32.0
      %v270 = vmul.f32 32.0, %v269
      %v271 = vsub.f32 1.0, %v270
      %v272 = vmul.f32 %v269, %v271
      %v273 = vadd.f32 %v269, %v272
      %vm274 = vweird.f32 %v269
      %v275 = vsel %vm274, %v269, %v273
      %v276 = vmul.f32 %v261, %v275
      %v277 = vmul.f32 %v264, %v275
      %v278 = vmul.f32 %v268, %v275
      %v279 = vsub.f32 %v253, %v276
      %v280 = vsub.f32 %v254, %v277
      %v281 = vsub.f32 %v255, %v278
      %v282 = vmul.f32 %v279, %v279
      %v283 = vmul.f32 %v280, %v280
      %v284 = vmul.f32 %v281, %v281
      %v285 = vsel %vm258, %v282, 0.0
      %286 = vadd.xlane.f32.xlu0 %v285
      %v287 = vpop.xlane.xlu0 %286
      %v288 = vsel %vm258, %v283, 0.0
      %289 = vadd.xlane.f32.xlu0 %v288
      %v290 = vpop.xlane.xlu0 %289
      %v291 = vsel %vm265, %v284, 0.0
      %292 = vadd.xlane.f32.xlu0 %v291
      %v293 = vpop.xlane.xlu0 %292
      %v294 = vmul.f32 %v287, %v275
      %v295 = vmul.f32 %v290, %v275
      %v296 = vmul.f32 %v293, %v275
      %v297 = vadd.f32 %v294, 1e-05
      %v298 = vadd.f32 %v295, 1e-05
      %v299 = vadd.f32 %v296, 1e-05
      %v300 = vrsqrt.pop %v297
      %v301 = vmul.f32 %v300, %v297
      %v302 = vmul.f32 %v301, %v300
      %v303 = vmul.f32 0.5, %v302
      %v304 = vsub.f32 1.5, %v303
      %v305 = vmul.f32 %v300, %v304
      %vm306 = vweird.f32 %v297
      %vm307 = vweird.f32 %v300
      %vm308 = vmor %vm306, %vm307
      %v309 = vsel %vm308, %v300, %v305
      %v310 = vrsqrt.pop %v298
      %v311 = vmul.f32 %v310, %v298
      %v312 = vmul.f32 %v311, %v310
      %v313 = vmul.f32 0.5, %v312
      %v314 = vsub.f32 1.5, %v313
      %v315 = vmul.f32 %v310, %v314
      %vm316 = vweird.f32 %v298
      %vm317 = vweird.f32 %v310
      %vm318 = vmor %vm316, %vm317
      %v319 = vsel %vm318, %v310, %v315
      %v320 = vrsqrt.pop %v299
      %v321 = vmul.f32 %v320, %v299
      %v322 = vmul.f32 %v321, %v320
      %v323 = vmul.f32 0.5, %v322
      %v324 = vsub.f32 1.5, %v323
      %v325 = vmul.f32 %v320, %v324
      %vm326 = vweird.f32 %v299
      %vm327 = vweird.f32 %v320
      %vm328 = vmor %vm326, %vm327
      %v329 = vsel %vm328, %v320, %v325
      %v330 = vmul.f32 %v279, %v309
      %v331 = vmul.f32 %v280, %v319
      %v332 = vmul.f32 %v281, %v329
      %v334 = vperm.slane %v256, 0
      %v336 = vmul.f32 %v330, %v334
      %v337 = vmul.f32 %v331, %v334
      %v338 = vmul.f32 %v332, %v334
      %v340 = vperm.slane %v257, 0
      %v342 = vadd.f32 %v336, %v340
      %v343 = vadd.f32 %v337, %v340
      %v344 = vadd.f32 %v338, %v340
      %v345 = vpack.c.bf16 %v343, %v342
      %v346 = vpack.c.bf16 %v344, %v344
      %v347 = vld [vmem:[%s3] sm:$0xf]
      %v348 = vld [vmem:[%s3 + $0x4] sm:$0xf]
      %v349 = vld [vmem:[%s3 + $0x8] sm:$0xf]
      %v350 = vld [vmem:[%s3 + $0xc] sm:$0xf]
      %v355 = vunpack.c.l.b16 %v347
      %v356 = vunpack.c.l.b16 %v348
      %v357 = vunpack.c.l.b16 %v349
      %v358 = vunpack.c.l.b16 %v350
      %v359 = vpack.c.b16 %v356, %v355
      %v360 = vpack.c.b16 %v358, %v357
      %v364 = vsel %vm258, %v345, 0
      %v367 = vsel %vm258, %v346, 0
      %369 = vmatpush.bf16.msra.mxu0 0
      %370 = vmatpush.bf16.msra.mxu0 0
      %371 = vmatpush.bf16.msra.mxu0 0
      %372 = vmatpush.bf16.msra.mxu0 0
      %373 = vmatpush.bf16.msra.mxu0 0
      %374 = vmatpush.bf16.msra.mxu0 0
      %375 = vmatpush.bf16.msra.mxu0 %v360
      %376 = vmatpush.bf16.msra.mxu0 %v359
      %377 = vmatmul.bf16.gmra.mxu0 %v364
      %v378 = vpop.f32.mrf.mxu0
      %v379 = vadd.f32 0.0, %v378
      %v380 = vpop.f32.mrf.mxu0
      %v381 = vadd.f32 0.0, %v380
      %382 = vmatmul.bf16.gmra.mxu0 %v367
      %v383 = vpop.f32.mrf.mxu0
      %v384 = vadd.f32 0.0, %v383
      %v385 = vpop.f32.mrf.mxu0
      %386 = vdwg.mxu0
      %v387 = vld [vmem:[%s5] sm:$0x1]
      %v389 = vperm.slane %v387, 0
      %v391 = vadd.f32 %v253, %v389
      %v392 = vadd.f32 %v254, %v389
      %v393 = vadd.f32 %v255, %v389
      %397 = vrot.lane.b32.xlu0 %v379, 96
      %v398 = vpop.permute.xlu0 %397
      %399 = vrot.lane.b32.xlu0 %v381, 96
      %v400 = vpop.permute.xlu0 %399
      %401 = vrot.lane.b32.xlu0 %v384, 96
      %v402 = vpop.permute.xlu0 %401
      %vm403 = vcmask 64512
      %v404 = vsel %vm403, %v379, 0
      %v406 = vsel %vm403, %v381, 0
      %v408 = vsel %vm403, %v384, 0
      %v410 = vsel %vm403, %v398, 0
      %v412 = vsel %vm403, %v400, 0
      %v414 = vsel %vm403, %v402, 0
      %416 = vmatpush.xpose.msra.mxu0 0.0
      %417 = vmatpush.xpose.msra.mxu0 0.0
      %418 = vmatpush.xpose.msra.mxu0 0.0
      %419 = vmatpush.xpose.msra.mxu0 0.0
      %420 = vmatpush.xpose.msra.mxu0 0.0
      %421 = vmatpush.xpose.msra.mxu0 0.0
      %422 = vmatpush.xpose.msra.mxu0 0.0
      %423 = vmatpush.xpose.msra.mxu0 0.0
      %424 = vmatpush.xpose.msra.mxu0 0.0
      %425 = vmatpush.xpose.msra.mxu0 0.0
      %426 = vmatpush.xpose.msra.mxu0 0.0
      %427 = vmatpush.xpose.msra.mxu0 0.0
      %428 = vmatpush.xpose.msra.mxu0 0.0
      %429 = vmatpush.xpose.msra.mxu0 %v414
      %430 = vmatpush.xpose.msra.mxu0 %v412
      %431 = vmatpush.xpose.msra.mxu0 %v410
      %432 = vmatmul.f32.gmra.mxu0 %v404
      %v433 = vpop.f32.mrf.mxu0
      %v434 = vadd.f32 0.0, %v433
      %435 = vmatmul.f32.gmra.mxu0 %v406
      %v436 = vpop.f32.mrf.mxu0
      %v437 = vadd.f32 0.0, %v436
      %438 = vmatmul.f32.gmra.mxu0 %v408
      %v439 = vpop.f32.mrf.mxu0
      %v440 = vadd.f32 0.0, %v439
      %441 = vdwg.mxu0
      %v442 = vmul.f32 %v434, 0.35355338
      %v443 = vmul.f32 %v437, 0.35355338
      %v444 = vmul.f32 %v440, 0.35355338
      %vm445 = vcmask 138240
      %v446 = vsel %vm445, %v442, -inf
      %447 = vmax.xlane.f32.xlu0 %v446
      %v448 = vpop.xlane.xlu0 %447
      %v449 = vsel %vm445, %v443, -inf
      %450 = vmax.xlane.f32.xlu0 %v449
      %v451 = vpop.xlane.xlu0 %450
      %vm452 = vcmask 131072
      %v453 = vsel %vm452, %v444, -inf
      %454 = vmax.xlane.f32.xlu0 %v453
      %v455 = vpop.xlane.xlu0 %454
      %v456 = vsub.f32 %v442, %v448
      %v457 = vsub.f32 %v443, %v451
      %v458 = vsub.f32 %v444, %v455
      %v459 = vmul.f32 %v456, 1.442695
      %v460 = vpow.pop %v459
      %v461 = vmul.f32 %v457, 1.442695
      %v462 = vpow.pop %v461
      %v463 = vmul.f32 %v458, 1.442695
      %v464 = vpow.pop %v463
      %v465 = vsel %vm445, %v460, 0.0
      %466 = vadd.xlane.f32.xlu0 %v465
      %v467 = vpop.xlane.xlu0 %466
      %v468 = vsel %vm445, %v462, 0.0
      %469 = vadd.xlane.f32.xlu0 %v468
      %v470 = vpop.xlane.xlu0 %469
      %v471 = vsel %vm452, %v464, 0.0
      %472 = vadd.xlane.f32.xlu0 %v471
      %v473 = vpop.xlane.xlu0 %472
      %v474 = vrcp.pop %v467
      %v475 = vrcp.pop %v470
      %v476 = vrcp.pop %v473
      %v477 = vmul.f32 %v460, %v474
      %v478 = vmul.f32 %v462, %v475
      %v479 = vmul.f32 %v464, %v476
      %480 = vrot.lane.b32.xlu0 %v379, 64
      %v481 = vpop.permute.xlu0 %480
      %482 = vrot.lane.b32.xlu0 %v381, 64
      %v483 = vpop.permute.xlu0 %482
      %484 = vrot.lane.b32.xlu0 %v384, 64
      %v485 = vpop.permute.xlu0 %484
      %v489 = vsel %vm445, %v477, 0
      %v492 = vsel %vm445, %v478, 0
      %v495 = vsel %vm445, %v479, 0
      %vm497 = vcmask 1040384
      %v498 = vsel %vm497, %v485, 0
      %500 = vmatpush.msra.mxu0 0.0
      %501 = vmatpush.msra.mxu0 0.0
      %502 = vmatpush.msra.mxu0 0.0
      %503 = vmatpush.msra.mxu0 0.0
      %504 = vmatpush.msra.mxu0 0.0
      %505 = vmatpush.msra.mxu0 0.0
      %506 = vmatpush.msra.mxu0 0.0
      %507 = vmatpush.msra.mxu0 0.0
      %508 = vmatpush.msra.mxu0 0.0
      %509 = vmatpush.msra.mxu0 0.0
      %510 = vmatpush.msra.mxu0 0.0
      %511 = vmatpush.msra.mxu0 0.0
      %512 = vmatpush.msra.mxu0 0.0
      %513 = vmatpush.msra.mxu0 %v498
      %514 = vmatpush.msra.mxu0 %v483
      %515 = vmatpush.msra.mxu0 %v481
      %516 = vmatmul.f32.gmra.mxu0 %v489
      %v517 = vpop.f32.mrf.mxu0
      %v518 = vadd.f32 0.0, %v517
      %519 = vmatmul.f32.gmra.mxu0 %v492
      %v520 = vpop.f32.mrf.mxu0
      %v521 = vadd.f32 0.0, %v520
      %522 = vmatmul.f32.gmra.mxu0 %v495
      %v523 = vpop.f32.mrf.mxu0
      %v524 = vadd.f32 0.0, %v523
      %525 = vdwg.mxu0
      %v526 = vpack.c.bf16 %v521, %v518
      %v527 = vpack.c.bf16 %v524, %v524
      %v528 = vld [vmem:[%s4] sm:$0xf]
      %v530 = vsel %vm403, %v526, 0
      %v533 = vsel %vm403, %v527, 0
      %vm535 = vcmask 1043456
      %v537 = vsel %vm535, %v528, 0
      %539 = vmatpush.bf16.msra.mxu0 0
      %540 = vmatpush.bf16.msra.mxu0 0
      %541 = vmatpush.bf16.msra.mxu0 0
      %542 = vmatpush.bf16.msra.mxu0 0
      %543 = vmatpush.bf16.msra.mxu0 0
      %544 = vmatpush.bf16.msra.mxu0 0
      %545 = vmatpush.bf16.msra.mxu0 0
      %546 = vmatpush.bf16.msra.mxu0 %v537
      %547 = vmatmul.bf16.gmra.mxu0 %v530
      %v548 = vpop.f32.mrf.mxu0
      %v549 = vadd.f32 0.0, %v548
      %v550 = vpop.f32.mrf.mxu0
      %v551 = vadd.f32 0.0, %v550
      %552 = vmatmul.bf16.gmra.mxu0 %v533
      %v553 = vpop.f32.mrf.mxu0
      %v554 = vadd.f32 0.0, %v553
      %v555 = vpop.f32.mrf.mxu0
      %556 = vdwg.mxu0
      %v557 = vadd.f32 %v391, %v549
      %v558 = vadd.f32 %v392, %v551
      %v559 = vadd.f32 %v393, %v554
      %560 = vrot.lane.b32.xlu0 %v379, 120
      %v561 = vpop.permute.xlu0 %560
      %562 = vrot.lane.b32.xlu0 %v381, 120
      %v563 = vpop.permute.xlu0 %562
      %564 = vrot.lane.b32.xlu0 %v384, 120
      %v565 = vpop.permute.xlu0 %564
      %566 = vrot.lane.b32.xlu0 %v379, 88
      %v567 = vpop.permute.xlu0 %566
      %568 = vrot.lane.b32.xlu0 %v381, 88
      %v569 = vpop.permute.xlu0 %568
      %570 = vrot.lane.b32.xlu0 %v384, 88
      %v571 = vpop.permute.xlu0 %570
      %v572 = vsel %vm403, %v561, 0
      %v574 = vsel %vm403, %v563, 0
      %v576 = vsel %vm403, %v565, 0
      %v578 = vsel %vm403, %v567, 0
      %v580 = vsel %vm403, %v569, 0
      %v582 = vsel %vm403, %v571, 0
      %584 = vmatpush.xpose.msra.mxu0 0.0
      %585 = vmatpush.xpose.msra.mxu0 0.0
      %586 = vmatpush.xpose.msra.mxu0 0.0
      %587 = vmatpush.xpose.msra.mxu0 0.0
      %588 = vmatpush.xpose.msra.mxu0 0.0
      %589 = vmatpush.xpose.msra.mxu0 0.0
      %590 = vmatpush.xpose.msra.mxu0 0.0
      %591 = vmatpush.xpose.msra.mxu0 0.0
      %592 = vmatpush.xpose.msra.mxu0 0.0
      %593 = vmatpush.xpose.msra.mxu0 0.0
      %594 = vmatpush.xpose.msra.mxu0 0.0
      %595 = vmatpush.xpose.msra.mxu0 0.0
      %596 = vmatpush.xpose.msra.mxu0 0.0
      %597 = vmatpush.xpose.msra.mxu0 %v582
      %598 = vmatpush.xpose.msra.mxu0 %v580
      %599 = vmatpush.xpose.msra.mxu0 %v578
      %600 = vmatmul.f32.gmra.mxu0 %v572
      %v601 = vpop.f32.mrf.mxu0
      %v602 = vadd.f32 0.0, %v601
      %603 = vmatmul.f32.gmra.mxu0 %v574
      %v604 = vpop.f32.mrf.mxu0
      %v605 = vadd.f32 0.0, %v604
      %606 = vmatmul.f32.gmra.mxu0 %v576
      %v607 = vpop.f32.mrf.mxu0
      %v608 = vadd.f32 0.0, %v607
      %609 = vdwg.mxu0
      %v610 = vmul.f32 %v602, 0.35355338
      %v611 = vmul.f32 %v605, 0.35355338
      %v612 = vmul.f32 %v608, 0.35355338
      %v613 = vsel %vm445, %v610, -inf
      %614 = vmax.xlane.f32.xlu0 %v613
      %v615 = vpop.xlane.xlu0 %614
      %v616 = vsel %vm445, %v611, -inf
      %617 = vmax.xlane.f32.xlu0 %v616
      %v618 = vpop.xlane.xlu0 %617
      %v619 = vsel %vm452, %v612, -inf
      %620 = vmax.xlane.f32.xlu0 %v619
      %v621 = vpop.xlane.xlu0 %620
      %v622 = vsub.f32 %v610, %v615
      %v623 = vsub.f32 %v611, %v618
      %v624 = vsub.f32 %v612, %v621
      %v625 = vmul.f32 %v622, 1.442695
      %v626 = vpow.pop %v625
      %v627 = vmul.f32 %v623, 1.442695
      %v628 = vpow.pop %v627
      %v629 = vmul.f32 %v624, 1.442695
      %v630 = vpow.pop %v629
      %v631 = vsel %vm445, %v626, 0.0
      %632 = vadd.xlane.f32.xlu0 %v631
      %v633 = vpop.xlane.xlu0 %632
      %v634 = vsel %vm445, %v628, 0.0
      %635 = vadd.xlane.f32.xlu0 %v634
      %v636 = vpop.xlane.xlu0 %635
      %v637 = vsel %vm452, %v630, 0.0
      %638 = vadd.xlane.f32.xlu0 %v637
      %v639 = vpop.xlane.xlu0 %638
      %v640 = vrcp.pop %v633
      %v641 = vrcp.pop %v636
      %v642 = vrcp.pop %v639
      %v643 = vmul.f32 %v626, %v640
      %v644 = vmul.f32 %v628, %v641
      %v645 = vmul.f32 %v630, %v642
      %646 = vrot.lane.b32.xlu0 %v379, 56
      %v647 = vpop.permute.xlu0 %646
      %648 = vrot.lane.b32.xlu0 %v381, 56
      %v649 = vpop.permute.xlu0 %648
      %650 = vrot.lane.b32.xlu0 %v384, 56
      %v651 = vpop.permute.xlu0 %650
      %v655 = vsel %vm445, %v643, 0
      %v658 = vsel %vm445, %v644, 0
      %v661 = vsel %vm445, %v645, 0
      %v663 = vsel %vm497, %v651, 0
      %665 = vmatpush.msra.mxu0 0.0
      %666 = vmatpush.msra.mxu0 0.0
      %667 = vmatpush.msra.mxu0 0.0
      %668 = vmatpush.msra.mxu0 0.0
      %669 = vmatpush.msra.mxu0 0.0
      %670 = vmatpush.msra.mxu0 0.0
      %671 = vmatpush.msra.mxu0 0.0
      %672 = vmatpush.msra.mxu0 0.0
      %673 = vmatpush.msra.mxu0 0.0
      %674 = vmatpush.msra.mxu0 0.0
      %675 = vmatpush.msra.mxu0 0.0
      %676 = vmatpush.msra.mxu0 0.0
      %677 = vmatpush.msra.mxu0 0.0
      %678 = vmatpush.msra.mxu0 %v663
      %679 = vmatpush.msra.mxu0 %v649
      %680 = vmatpush.msra.mxu0 %v647
      %681 = vmatmul.f32.gmra.mxu0 %v655
      %v682 = vpop.f32.mrf.mxu0
      %v683 = vadd.f32 0.0, %v682
      %684 = vmatmul.f32.gmra.mxu0 %v658
      %v685 = vpop.f32.mrf.mxu0
      %v686 = vadd.f32 0.0, %v685
      %687 = vmatmul.f32.gmra.mxu0 %v661
      %v688 = vpop.f32.mrf.mxu0
      %v689 = vadd.f32 0.0, %v688
      %690 = vdwg.mxu0
      %v691 = vpack.c.bf16 %v686, %v683
      %v692 = vpack.c.bf16 %v689, %v689
      %v693 = vld [vmem:[%s4 + $0x4] sm:$0xf]
      %v695 = vsel %vm403, %v691, 0
      %v698 = vsel %vm403, %v692, 0
      %v701 = vsel %vm535, %v693, 0
      %703 = vmatpush.bf16.msra.mxu0 0
      %704 = vmatpush.bf16.msra.mxu0 0
      %705 = vmatpush.bf16.msra.mxu0 0
      %706 = vmatpush.bf16.msra.mxu0 0
      %707 = vmatpush.bf16.msra.mxu0 0
      %708 = vmatpush.bf16.msra.mxu0 0
      %709 = vmatpush.bf16.msra.mxu0 0
      %710 = vmatpush.bf16.msra.mxu0 %v701
      %711 = vmatmul.bf16.gmra.mxu0 %v695
      %v712 = vpop.f32.mrf.mxu0
      %v713 = vadd.f32 0.0, %v712
      %v714 = vpop.f32.mrf.mxu0
      %v715 = vadd.f32 0.0, %v714
      %716 = vmatmul.bf16.gmra.mxu0 %v698
      %v717 = vpop.f32.mrf.mxu0
      %v718 = vadd.f32 0.0, %v717
      %v719 = vpop.f32.mrf.mxu0
      %720 = vdwg.mxu0
      %v721 = vadd.f32 %v557, %v713
      %v722 = vadd.f32 %v558, %v715
      %v723 = vadd.f32 %v559, %v718
      %724 = vrot.lane.b32.xlu0 %v379, 112
      %v725 = vpop.permute.xlu0 %724
      %726 = vrot.lane.b32.xlu0 %v381, 112
      %v727 = vpop.permute.xlu0 %726
      %728 = vrot.lane.b32.xlu0 %v384, 112
      %v729 = vpop.permute.xlu0 %728
      %730 = vrot.lane.b32.xlu0 %v379, 80
      %v731 = vpop.permute.xlu0 %730
      %732 = vrot.lane.b32.xlu0 %v381, 80
      %v733 = vpop.permute.xlu0 %732
      %734 = vrot.lane.b32.xlu0 %v384, 80
      %v735 = vpop.permute.xlu0 %734
      %v736 = vsel %vm403, %v725, 0
      %v738 = vsel %vm403, %v727, 0
      %v740 = vsel %vm403, %v729, 0
      %v742 = vsel %vm403, %v731, 0
      %v744 = vsel %vm403, %v733, 0
      %v746 = vsel %vm403, %v735, 0
      %748 = vmatpush.xpose.msra.mxu0 0.0
      %749 = vmatpush.xpose.msra.mxu0 0.0
      %750 = vmatpush.xpose.msra.mxu0 0.0
      %751 = vmatpush.xpose.msra.mxu0 0.0
      %752 = vmatpush.xpose.msra.mxu0 0.0
      %753 = vmatpush.xpose.msra.mxu0 0.0
      %754 = vmatpush.xpose.msra.mxu0 0.0
      %755 = vmatpush.xpose.msra.mxu0 0.0
      %756 = vmatpush.xpose.msra.mxu0 0.0
      %757 = vmatpush.xpose.msra.mxu0 0.0
      %758 = vmatpush.xpose.msra.mxu0 0.0
      %759 = vmatpush.xpose.msra.mxu0 0.0
      %760 = vmatpush.xpose.msra.mxu0 0.0
      %761 = vmatpush.xpose.msra.mxu0 %v746
      %762 = vmatpush.xpose.msra.mxu0 %v744
      %763 = vmatpush.xpose.msra.mxu0 %v742
      %764 = vmatmul.f32.gmra.mxu0 %v736
      %v765 = vpop.f32.mrf.mxu0
      %v766 = vadd.f32 0.0, %v765
      %767 = vmatmul.f32.gmra.mxu0 %v738
      %v768 = vpop.f32.mrf.mxu0
      %v769 = vadd.f32 0.0, %v768
      %770 = vmatmul.f32.gmra.mxu0 %v740
      %v771 = vpop.f32.mrf.mxu0
      %v772 = vadd.f32 0.0, %v771
      %773 = vdwg.mxu0
      %v774 = vmul.f32 %v766, 0.35355338
      %v775 = vmul.f32 %v769, 0.35355338
      %v776 = vmul.f32 %v772, 0.35355338
      %v777 = vsel %vm445, %v774, -inf
      %778 = vmax.xlane.f32.xlu0 %v777
      %v779 = vpop.xlane.xlu0 %778
      %v780 = vsel %vm445, %v775, -inf
      %781 = vmax.xlane.f32.xlu0 %v780
      %v782 = vpop.xlane.xlu0 %781
      %v783 = vsel %vm452, %v776, -inf
      %784 = vmax.xlane.f32.xlu0 %v783
      %v785 = vpop.xlane.xlu0 %784
      %v786 = vsub.f32 %v774, %v779
      %v787 = vsub.f32 %v775, %v782
      %v788 = vsub.f32 %v776, %v785
      %v789 = vmul.f32 %v786, 1.442695
      %v790 = vpow.pop %v789
      %v791 = vmul.f32 %v787, 1.442695
      %v792 = vpow.pop %v791
      %v793 = vmul.f32 %v788, 1.442695
      %v794 = vpow.pop %v793
      %v795 = vsel %vm445, %v790, 0.0
      %796 = vadd.xlane.f32.xlu0 %v795
      %v797 = vpop.xlane.xlu0 %796
      %v798 = vsel %vm445, %v792, 0.0
      %799 = vadd.xlane.f32.xlu0 %v798
      %v800 = vpop.xlane.xlu0 %799
      %v801 = vsel %vm452, %v794, 0.0
      %802 = vadd.xlane.f32.xlu0 %v801
      %v803 = vpop.xlane.xlu0 %802
      %v804 = vrcp.pop %v797
      %v805 = vrcp.pop %v800
      %v806 = vrcp.pop %v803
      %v807 = vmul.f32 %v790, %v804
      %v808 = vmul.f32 %v792, %v805
      %v809 = vmul.f32 %v794, %v806
      %810 = vrot.lane.b32.xlu0 %v379, 48
      %v811 = vpop.permute.xlu0 %810
      %812 = vrot.lane.b32.xlu0 %v381, 48
      %v813 = vpop.permute.xlu0 %812
      %814 = vrot.lane.b32.xlu0 %v384, 48
      %v815 = vpop.permute.xlu0 %814
      %v819 = vsel %vm445, %v807, 0
      %v822 = vsel %vm445, %v808, 0
      %v825 = vsel %vm445, %v809, 0
      %v827 = vsel %vm497, %v815, 0
      %829 = vmatpush.msra.mxu0 0.0
      %830 = vmatpush.msra.mxu0 0.0
      %831 = vmatpush.msra.mxu0 0.0
      %832 = vmatpush.msra.mxu0 0.0
      %833 = vmatpush.msra.mxu0 0.0
      %834 = vmatpush.msra.mxu0 0.0
      %835 = vmatpush.msra.mxu0 0.0
      %836 = vmatpush.msra.mxu0 0.0
      %837 = vmatpush.msra.mxu0 0.0
      %838 = vmatpush.msra.mxu0 0.0
      %839 = vmatpush.msra.mxu0 0.0
      %840 = vmatpush.msra.mxu0 0.0
      %841 = vmatpush.msra.mxu0 0.0
      %842 = vmatpush.msra.mxu0 %v827
      %843 = vmatpush.msra.mxu0 %v813
      %844 = vmatpush.msra.mxu0 %v811
      %845 = vmatmul.f32.gmra.mxu0 %v819
      %v846 = vpop.f32.mrf.mxu0
      %v847 = vadd.f32 0.0, %v846
      %848 = vmatmul.f32.gmra.mxu0 %v822
      %v849 = vpop.f32.mrf.mxu0
      %v850 = vadd.f32 0.0, %v849
      %851 = vmatmul.f32.gmra.mxu0 %v825
      %v852 = vpop.f32.mrf.mxu0
      %v853 = vadd.f32 0.0, %v852
      %854 = vdwg.mxu0
      %v855 = vpack.c.bf16 %v850, %v847
      %v856 = vpack.c.bf16 %v853, %v853
      %v857 = vld [vmem:[%s4 + $0x8] sm:$0xf]
      %v859 = vsel %vm403, %v855, 0
      %v862 = vsel %vm403, %v856, 0
      %v865 = vsel %vm535, %v857, 0
      %867 = vmatpush.bf16.msra.mxu0 0
      %868 = vmatpush.bf16.msra.mxu0 0
      %869 = vmatpush.bf16.msra.mxu0 0
      %870 = vmatpush.bf16.msra.mxu0 0
      %871 = vmatpush.bf16.msra.mxu0 0
      %872 = vmatpush.bf16.msra.mxu0 0
      %873 = vmatpush.bf16.msra.mxu0 0
      %874 = vmatpush.bf16.msra.mxu0 %v865
      %875 = vmatmul.bf16.gmra.mxu0 %v859
      %v876 = vpop.f32.mrf.mxu0
      %v877 = vadd.f32 0.0, %v876
      %v878 = vpop.f32.mrf.mxu0
      %v879 = vadd.f32 0.0, %v878
      %880 = vmatmul.bf16.gmra.mxu0 %v862
      %v881 = vpop.f32.mrf.mxu0
      %v882 = vadd.f32 0.0, %v881
      %v883 = vpop.f32.mrf.mxu0
      %884 = vdwg.mxu0
      %v885 = vadd.f32 %v721, %v877
      %v886 = vadd.f32 %v722, %v879
      %v887 = vadd.f32 %v723, %v882
      %888 = vrot.lane.b32.xlu0 %v379, 104
      %v889 = vpop.permute.xlu0 %888
      %890 = vrot.lane.b32.xlu0 %v381, 104
      %v891 = vpop.permute.xlu0 %890
      %892 = vrot.lane.b32.xlu0 %v384, 104
      %v893 = vpop.permute.xlu0 %892
      %894 = vrot.lane.b32.xlu0 %v379, 72
      %v895 = vpop.permute.xlu0 %894
      %896 = vrot.lane.b32.xlu0 %v381, 72
      %v897 = vpop.permute.xlu0 %896
      %898 = vrot.lane.b32.xlu0 %v384, 72
      %v899 = vpop.permute.xlu0 %898
      %v900 = vsel %vm403, %v889, 0
      %v902 = vsel %vm403, %v891, 0
      %v904 = vsel %vm403, %v893, 0
      %v906 = vsel %vm403, %v895, 0
      %v908 = vsel %vm403, %v897, 0
      %v910 = vsel %vm403, %v899, 0
      %912 = vmatpush.xpose.msra.mxu0 0.0
      %913 = vmatpush.xpose.msra.mxu0 0.0
      %914 = vmatpush.xpose.msra.mxu0 0.0
      %915 = vmatpush.xpose.msra.mxu0 0.0
      %916 = vmatpush.xpose.msra.mxu0 0.0
      %917 = vmatpush.xpose.msra.mxu0 0.0
      %918 = vmatpush.xpose.msra.mxu0 0.0
      %919 = vmatpush.xpose.msra.mxu0 0.0
      %920 = vmatpush.xpose.msra.mxu0 0.0
      %921 = vmatpush.xpose.msra.mxu0 0.0
      %922 = vmatpush.xpose.msra.mxu0 0.0
      %923 = vmatpush.xpose.msra.mxu0 0.0
      %924 = vmatpush.xpose.msra.mxu0 0.0
      %925 = vmatpush.xpose.msra.mxu0 %v910
      %926 = vmatpush.xpose.msra.mxu0 %v908
      %927 = vmatpush.xpose.msra.mxu0 %v906
      %928 = vmatmul.f32.gmra.mxu0 %v900
      %v929 = vpop.f32.mrf.mxu0
      %v930 = vadd.f32 0.0, %v929
      %931 = vmatmul.f32.gmra.mxu0 %v902
      %v932 = vpop.f32.mrf.mxu0
      %v933 = vadd.f32 0.0, %v932
      %934 = vmatmul.f32.gmra.mxu0 %v904
      %v935 = vpop.f32.mrf.mxu0
      %v936 = vadd.f32 0.0, %v935
      %937 = vdwg.mxu0
      %v938 = vmul.f32 %v930, 0.35355338
      %v939 = vmul.f32 %v933, 0.35355338
      %v940 = vmul.f32 %v936, 0.35355338
      %v941 = vsel %vm445, %v938, -inf
      %942 = vmax.xlane.f32.xlu0 %v941
      %v943 = vpop.xlane.xlu0 %942
      %v944 = vsel %vm445, %v939, -inf
      %945 = vmax.xlane.f32.xlu0 %v944
      %v946 = vpop.xlane.xlu0 %945
      %v947 = vsel %vm452, %v940, -inf
      %948 = vmax.xlane.f32.xlu0 %v947
      %v949 = vpop.xlane.xlu0 %948
      %v950 = vsub.f32 %v938, %v943
      %v951 = vsub.f32 %v939, %v946
      %v952 = vsub.f32 %v940, %v949
      %v953 = vmul.f32 %v950, 1.442695
      %v954 = vpow.pop %v953
      %v955 = vmul.f32 %v951, 1.442695
      %v956 = vpow.pop %v955
      %v957 = vmul.f32 %v952, 1.442695
      %v958 = vpow.pop %v957
      %v959 = vsel %vm445, %v954, 0.0
      %960 = vadd.xlane.f32.xlu0 %v959
      %v961 = vpop.xlane.xlu0 %960
      %v962 = vsel %vm445, %v956, 0.0
      %963 = vadd.xlane.f32.xlu0 %v962
      %v964 = vpop.xlane.xlu0 %963
      %v965 = vsel %vm452, %v958, 0.0
      %966 = vadd.xlane.f32.xlu0 %v965
      %v967 = vpop.xlane.xlu0 %966
      %v968 = vrcp.pop %v961
      %v969 = vrcp.pop %v964
      %v970 = vrcp.pop %v967
      %v971 = vmul.f32 %v954, %v968
      %v972 = vmul.f32 %v956, %v969
      %v973 = vmul.f32 %v958, %v970
      %974 = vrot.lane.b32.xlu0 %v379, 40
      %v975 = vpop.permute.xlu0 %974
      %976 = vrot.lane.b32.xlu0 %v381, 40
      %v977 = vpop.permute.xlu0 %976
      %978 = vrot.lane.b32.xlu0 %v384, 40
      %v979 = vpop.permute.xlu0 %978
      %v983 = vsel %vm445, %v971, 0
      %v986 = vsel %vm445, %v972, 0
      %v989 = vsel %vm445, %v973, 0
      %v991 = vsel %vm497, %v979, 0
      %993 = vmatpush.msra.mxu0 0.0
      %994 = vmatpush.msra.mxu0 0.0
      %995 = vmatpush.msra.mxu0 0.0
      %996 = vmatpush.msra.mxu0 0.0
      %997 = vmatpush.msra.mxu0 0.0
      %998 = vmatpush.msra.mxu0 0.0
      %999 = vmatpush.msra.mxu0 0.0
      %1000 = vmatpush.msra.mxu0 0.0
      %1001 = vmatpush.msra.mxu0 0.0
      %1002 = vmatpush.msra.mxu0 0.0
      %1003 = vmatpush.msra.mxu0 0.0
      %1004 = vmatpush.msra.mxu0 0.0
      %1005 = vmatpush.msra.mxu0 0.0
      %1006 = vmatpush.msra.mxu0 %v991
      %1007 = vmatpush.msra.mxu0 %v977
      %1008 = vmatpush.msra.mxu0 %v975
      %1009 = vmatmul.f32.gmra.mxu0 %v983
      %v1010 = vpop.f32.mrf.mxu0
      %v1011 = vadd.f32 0.0, %v1010
      %1012 = vmatmul.f32.gmra.mxu0 %v986
      %v1013 = vpop.f32.mrf.mxu0
      %v1014 = vadd.f32 0.0, %v1013
      %1015 = vmatmul.f32.gmra.mxu0 %v989
      %v1016 = vpop.f32.mrf.mxu0
      %v1017 = vadd.f32 0.0, %v1016
      %1018 = vdwg.mxu0
      %v1019 = vpack.c.bf16 %v1014, %v1011
      %v1020 = vpack.c.bf16 %v1017, %v1017
      %v1021 = vld [vmem:[%s4 + $0xc] sm:$0xf]
      %v1023 = vsel %vm403, %v1019, 0
      %v1026 = vsel %vm403, %v1020, 0
      %v1029 = vsel %vm535, %v1021, 0
      %1031 = vmatpush.bf16.msra.mxu0 0
      %1032 = vmatpush.bf16.msra.mxu0 0
      %1033 = vmatpush.bf16.msra.mxu0 0
      %1034 = vmatpush.bf16.msra.mxu0 0
      %1035 = vmatpush.bf16.msra.mxu0 0
      %1036 = vmatpush.bf16.msra.mxu0 0
      %1037 = vmatpush.bf16.msra.mxu0 0
      %1038 = vmatpush.bf16.msra.mxu0 %v1029
      %1039 = vmatmul.bf16.gmra.mxu0 %v1023
      %v1040 = vpop.f32.mrf.mxu0
      %v1041 = vadd.f32 0.0, %v1040
      %v1042 = vpop.f32.mrf.mxu0
      %v1043 = vadd.f32 0.0, %v1042
      %1044 = vmatmul.bf16.gmra.mxu0 %v1026
      %v1045 = vpop.f32.mrf.mxu0
      %v1046 = vadd.f32 0.0, %v1045
      %v1047 = vpop.f32.mrf.mxu0
      %1048 = vdwg.mxu0
      %v1049 = vadd.f32 %v885, %v1041
      %v1050 = vadd.f32 %v886, %v1043
      %v1051 = vadd.f32 %v887, %v1046
      %1052 = vst.msk [vmem:[%s251] sm:$0xff] %vm258, %v1049
      %1053 = vst.msk [vmem:[%s251 + $0x8] sm:$0xff] %vm258, %v1050
      %1054 = vst.msk [vmem:[%s251 + $0x10] sm:$0x1] %vm265, %v1051
      %p1055 = scmp.lt.s32.totalorder %s17, 1
      %s1056 = scalar_select %p1055, %s17, 1
      %s1057 = smul.addr %s1056, 3
      %s1058 = smul.addr %s1057, 8
      %s1059 = scalar_lea.vmem %s6, %s1058
      // Predicated region
      $region45: #{transformer_pose_forward.9} parent=43 // pred_check
        %p1060 = pneg %p166
      $region46: #{transformer_pose_forward.9} parent=43 // pred_check_branch
        %1062 = sbr.rel (%p1060) target = $region48
      $region47: #{transformer_pose_forward.9} parent=43 // pred_region
        _
      $region48: #{transformer_pose_forward.9} parent=43 // pred_fallthru
        _
    $region44: #{transformer_pose_forward.9} parent=5 // pred_fallthru
      _
    %p1063 = scmp.le.s32.totalorder 2, %s12
    // Predicated region
    $region49: #{transformer_pose_forward.9} parent=5 // pred_check
      %p1064 = pneg %p1063
    $region50: #{transformer_pose_forward.9} parent=5 // pred_check_branch
      %1066 = sbr.rel (%p1064) target = $region52
    $region51: #{transformer_pose_forward.9} parent=5 // pred_region
      %s1067 = ssub.s32 %s12, 2
      // Predicated region
      $region53: #{transformer_pose_forward.9} parent=51 // pred_check
        %p1068 = pneg %p172
      $region54: #{transformer_pose_forward.9} parent=51 // pred_check_branch
        %1070 = sbr.rel (%p1068) target = $region56
      $region55: #{transformer_pose_forward.9} parent=51 // pred_region
        %p1071 = scmp.lt.s32.totalorder %s18, 1
        %s1072 = scalar_select %p1071, %s18, 1
        %s1073 = smul.addr %s1072, 3
        %s1074 = smul.addr %s1073, 8
        %s1075 = scalar_lea.vmem %s6, %s1074
      $region56: #{transformer_pose_forward.9} parent=51 // pred_fallthru
        _
    $region52: #{transformer_pose_forward.9} parent=5 // pred_fallthru
      _
  $region6: #{transformer_pose_forward.9} parent=0 // loop_footer
    %s16 = sadd.s32 1, %s12
  $region7: #{transformer_pose_forward.9} parent=0 // loop_footer_branch
    %11 = sbr.rel target = $region3
  $region8: #{transformer_pose_forward.9} parent=0 // loop_exit
    _

// kernel: transformer_pose_forward.13
$region0: #{transformer_pose_forward.13}
  #allocation0 [shape = 'u32[]', space=smem, size = 0x4, offset = 0x4, fixed_abs, tag = 'smem constant byte address 0x4 - core index']
  #allocation1 [shape = 'u32[72,128]{1,0:T(1,128)}', space=vmem, size = 0x9000, scoped, tag = 'internal scratch']
  %s0 = inlined_call_operand.vmem [shape: f32[34,32], index: 0, kind: input, shape index: {}]
  %s1 = inlined_call_operand.vmem [shape: f32[1,32], index: 1, kind: input, shape index: {}]
  %s2 = inlined_call_operand.vmem [shape: f32[1,32], index: 2, kind: input, shape index: {}]
  %s3 = inlined_call_operand.vmem [shape: f32[34,32], index: 3, kind: output, shape index: {}]
  %s4 = sld [smem:[#allocation0]]
  $region22: #{transformer_pose_forward.13} parent=0
    _
  %s6 = ssub.s32 1, %s4
  %s7 = scalar_select 0, %s6, %s4
  // Predicated region
  $region2: #{transformer_pose_forward.13} parent=0 // pred_check
    _
  $region3: #{transformer_pose_forward.13} parent=0 // pred_check_branch
    %9 = sbr.rel (0) target = $region5
  $region4: #{transformer_pose_forward.13} parent=0 // pred_region
    _
  $region5: #{transformer_pose_forward.13} parent=0 // pred_fallthru
    _
  // Predicated region
  $region6: #{transformer_pose_forward.13} parent=0 // pred_check
    _
  $region7: #{transformer_pose_forward.13} parent=0 // pred_check_branch
    %11 = sbr.rel (0) target = $region9
  $region8: #{transformer_pose_forward.13} parent=0 // pred_region
    _
  $region9: #{transformer_pose_forward.13} parent=0 // pred_fallthru
    _
  // Predicated region
  $region10: #{transformer_pose_forward.13} parent=0 // pred_check
    _
  $region11: #{transformer_pose_forward.13} parent=0 // pred_check_branch
    %13 = sbr.rel (0) target = $region13
  $region12: #{transformer_pose_forward.13} parent=0 // pred_region
    _
  $region13: #{transformer_pose_forward.13} parent=0 // pred_fallthru
    _
  %v14 = vld [vmem:[%s0] sm:$0xff]
  %v15 = vld [vmem:[%s0 + $0x8] sm:$0xff]
  %v16 = vld [vmem:[%s0 + $0x10] sm:$0xff]
  %v17 = vld [vmem:[%s0 + $0x18] sm:$0xff]
  %v18 = vld [vmem:[%s0 + $0x20] sm:$0x3]
  %v19 = vld [vmem:[%s1] sm:$0x1]
  %v20 = vld [vmem:[%s2] sm:$0x1]
  %vm21 = vcmask 261120
  %v22 = vsel %vm21, %v14, 0.0
  %23 = vadd.xlane.f32.xlu0 %v22
  %v24 = vpop.xlane.xlu0 %23
  %v25 = vsel %vm21, %v15, 0.0
  %26 = vadd.xlane.f32.xlu0 %v25
  %v27 = vpop.xlane.xlu0 %26
  %v28 = vsel %vm21, %v16, 0.0
  %29 = vadd.xlane.f32.xlu0 %v28
  %v30 = vpop.xlane.xlu0 %29
  %v31 = vsel %vm21, %v17, 0.0
  %32 = vadd.xlane.f32.xlu0 %v31
  %v33 = vpop.xlane.xlu0 %32
  %vm34 = vcmask 254976
  %v35 = vsel %vm34, %v18, 0.0
  %36 = vadd.xlane.f32.xlu0 %v35
  %v37 = vpop.xlane.xlu0 %36
  %v38 = vrcp.pop 32.0
  %v39 = vmul.f32 32.0, %v38
  %v40 = vsub.f32 1.0, %v39
  %v41 = vmul.f32 %v38, %v40
  %v42 = vadd.f32 %v38, %v41
  %vm43 = vweird.f32 %v38
  %v44 = vsel %vm43, %v38, %v42
  %v45 = vmul.f32 %v24, %v44
  %v46 = vmul.f32 %v27, %v44
  %v47 = vmul.f32 %v30, %v44
  %v48 = vmul.f32 %v33, %v44
  %v49 = vmul.f32 %v37, %v44
  %v50 = vsub.f32 %v14, %v45
  %v51 = vsub.f32 %v15, %v46
  %v52 = vsub.f32 %v16, %v47
  %v53 = vsub.f32 %v17, %v48
  %v54 = vsub.f32 %v18, %v49
  %v55 = vmul.f32 %v50, %v50
  %v56 = vmul.f32 %v51, %v51
  %v57 = vmul.f32 %v52, %v52
  %v58 = vmul.f32 %v53, %v53
  %v59 = vmul.f32 %v54, %v54
  %v60 = vsel %vm21, %v55, 0.0
  %61 = vadd.xlane.f32.xlu0 %v60
  %v62 = vpop.xlane.xlu0 %61
  %v63 = vsel %vm21, %v56, 0.0
  %64 = vadd.xlane.f32.xlu0 %v63
  %v65 = vpop.xlane.xlu0 %64
  %v66 = vsel %vm21, %v57, 0.0
  %67 = vadd.xlane.f32.xlu0 %v66
  %v68 = vpop.xlane.xlu0 %67
  %v69 = vsel %vm21, %v58, 0.0
  %70 = vadd.xlane.f32.xlu0 %v69
  %v71 = vpop.xlane.xlu0 %70
  %v72 = vsel %vm34, %v59, 0.0
  %73 = vadd.xlane.f32.xlu0 %v72
  %v74 = vpop.xlane.xlu0 %73
  %v75 = vmul.f32 %v62, %v44
  %v76 = vmul.f32 %v65, %v44
  %v77 = vmul.f32 %v68, %v44
  %v78 = vmul.f32 %v71, %v44
  %v79 = vmul.f32 %v74, %v44
  %v80 = vadd.f32 %v75, 1e-05
  %v81 = vadd.f32 %v76, 1e-05
  %v82 = vadd.f32 %v77, 1e-05
  %v83 = vadd.f32 %v78, 1e-05
  %v84 = vadd.f32 %v79, 1e-05
  %v85 = vrsqrt.pop %v80
  %v86 = vmul.f32 %v85, %v80
  %v87 = vmul.f32 %v86, %v85
  %v88 = vmul.f32 0.5, %v87
  %v89 = vsub.f32 1.5, %v88
  %v90 = vmul.f32 %v85, %v89
  %vm91 = vweird.f32 %v80
  %vm92 = vweird.f32 %v85
  %vm93 = vmor %vm91, %vm92
  %v94 = vsel %vm93, %v85, %v90
  %v95 = vrsqrt.pop %v81
  %v96 = vmul.f32 %v95, %v81
  %v97 = vmul.f32 %v96, %v95
  %v98 = vmul.f32 0.5, %v97
  %v99 = vsub.f32 1.5, %v98
  %v100 = vmul.f32 %v95, %v99
  %vm101 = vweird.f32 %v81
  %vm102 = vweird.f32 %v95
  %vm103 = vmor %vm101, %vm102
  %v104 = vsel %vm103, %v95, %v100
  %v105 = vrsqrt.pop %v82
  %v106 = vmul.f32 %v105, %v82
  %v107 = vmul.f32 %v106, %v105
  %v108 = vmul.f32 0.5, %v107
  %v109 = vsub.f32 1.5, %v108
  %v110 = vmul.f32 %v105, %v109
  %vm111 = vweird.f32 %v82
  %vm112 = vweird.f32 %v105
  %vm113 = vmor %vm111, %vm112
  %v114 = vsel %vm113, %v105, %v110
  %v115 = vrsqrt.pop %v83
  %v116 = vmul.f32 %v115, %v83
  %v117 = vmul.f32 %v116, %v115
  %v118 = vmul.f32 0.5, %v117
  %v119 = vsub.f32 1.5, %v118
  %v120 = vmul.f32 %v115, %v119
  %vm121 = vweird.f32 %v83
  %vm122 = vweird.f32 %v115
  %vm123 = vmor %vm121, %vm122
  %v124 = vsel %vm123, %v115, %v120
  %v125 = vrsqrt.pop %v84
  %v126 = vmul.f32 %v125, %v84
  %v127 = vmul.f32 %v126, %v125
  %v128 = vmul.f32 0.5, %v127
  %v129 = vsub.f32 1.5, %v128
  %v130 = vmul.f32 %v125, %v129
  %vm131 = vweird.f32 %v84
  %vm132 = vweird.f32 %v125
  %vm133 = vmor %vm131, %vm132
  %v134 = vsel %vm133, %v125, %v130
  %v135 = vmul.f32 %v50, %v94
  %v136 = vmul.f32 %v51, %v104
  %v137 = vmul.f32 %v52, %v114
  %v138 = vmul.f32 %v53, %v124
  %v139 = vmul.f32 %v54, %v134
  %v141 = vperm.slane %v19, 0
  %v143 = vmul.f32 %v135, %v141
  %v144 = vmul.f32 %v136, %v141
  %v145 = vmul.f32 %v137, %v141
  %v146 = vmul.f32 %v138, %v141
  %v147 = vmul.f32 %v139, %v141
  %v149 = vperm.slane %v20, 0
  %v151 = vadd.f32 %v143, %v149
  %v152 = vadd.f32 %v144, %v149
  %v153 = vadd.f32 %v145, %v149
  %v154 = vadd.f32 %v146, %v149
  %v155 = vadd.f32 %v147, %v149
  %156 = vst.msk [vmem:[%s3] sm:$0xff] %vm21, %v151
  %157 = vst.msk [vmem:[%s3 + $0x8] sm:$0xff] %vm21, %v152
  %158 = vst.msk [vmem:[%s3 + $0x10] sm:$0xff] %vm21, %v153
  %159 = vst.msk [vmem:[%s3 + $0x18] sm:$0xff] %vm21, %v154
  %160 = vst.msk [vmem:[%s3 + $0x20] sm:$0x3] %vm34, %v155
  // Predicated region
  $region14: #{transformer_pose_forward.13} parent=0 // pred_check
    _
  $region15: #{transformer_pose_forward.13} parent=0 // pred_check_branch
    %162 = sbr.rel (0) target = $region17
  $region16: #{transformer_pose_forward.13} parent=0 // pred_region
    _
  $region17: #{transformer_pose_forward.13} parent=0 // pred_fallthru
    _
  // Predicated region
  $region18: #{transformer_pose_forward.13} parent=0 // pred_check
    _
  $region19: #{transformer_pose_forward.13} parent=0 // pred_check_branch
    %164 = sbr.rel (0) target = $region21
  $region20: #{transformer_pose_forward.13} parent=0 // pred_region
    _
  $region21: #{transformer_pose_forward.13} parent=0 // pred_fallthru
    _

// kernel: transformer_pose_forward.14
$region0: #{transformer_pose_forward.14}
  #allocation0 [shape = 'u32[]', space=smem, size = 0x4, offset = 0x4, fixed_abs, tag = 'smem constant byte address 0x4 - core index']
  #allocation1 [shape = 'u32[72,128]{1,0:T(1,128)}', space=vmem, size = 0x9000, scoped, tag = 'internal scratch']
  %s0 = inlined_call_operand.vmem [shape: f32[4,32,128], index: 0, kind: input, shape index: {}]
  %s1 = inlined_call_operand.vmem [shape: bf16[4,128,32], index: 1, kind: input, shape index: {}]
  %s2 = inlined_call_operand.vmem [shape: f32[4,1,32], index: 2, kind: input, shape index: {}]
  %s3 = inlined_call_operand.vmem [shape: f32[4,32,32], index: 3, kind: output, shape index: {}]
  %s4 = sld [smem:[#allocation0]]
  $region45: #{transformer_pose_forward.14} parent=0
    _
  %s6 = ssub.s32 1, %s4
  %s7 = scalar_select 0, %s6, %s4
  loop: start=0, step=1, limit=6
  $region2: #{transformer_pose_forward.14} parent=0 // loop_pre_header
    _
  $region3: #{transformer_pose_forward.14} parent=0 // loop_header
    %s9 = sphi 0, %s13
    %p10 = scmp.ge.s32.totalorder %s9, 6
    %s16 = sphi 0, %s28
    %s17 = sphi 0, %s24
    %s18 = sphi 0, %s16
    %s19 = sphi 0, %s17
    %s20 = sphi 0, %s18
    %s21 = sphi 0, %s19
    %s33 = sphi 0, %s35
    %s36 = sphi 0, %s33
    %s37 = sphi 0, %s36
    %s53 = sphi 0, %s37
    %s59 = sphi 0, %s61
    %s62 = sphi 0, %s59
    %s63 = sphi 0, %s62
    %s79 = sphi 0, %s63
    %s85 = sphi 0, %s87
    %s88 = sphi 0, %s85
    %s89 = sphi 0, %s88
    %s105 = sphi 0, %s89
    %s113 = sphi 0, %s115
    %s116 = sphi 0, %s113
    %s117 = sphi 0, %s116
    %s133 = sphi 0, %s117
  $region4: #{transformer_pose_forward.14} parent=0 // loop_header_branch
    %12 = sbr.rel (%p10) target = $region8
  $region5: #{transformer_pose_forward.14} parent=0 // loop_body
    %s14 = ssub.s32 %s9, 1
    %s15 = ssub.s32 %s9, 2
    %s22 = sadd.s32 1, %s17
    %p23 = scmp.ge.s32.totalorder %s22, 1
    %s24 = scalar_select %p23, 0, %s22
    %s25 = sadd.s32 1, %s16
    %s26 = scalar_select %p23, %s25, %s16
    %p27 = scmp.ge.s32.totalorder %s26, 4
    %s28 = scalar_select %p27, 0, %s26
    %s29 = ssub.s32 %s16, %s28
    %s30 = ssub.s32 %s17, %s24
    %s31 = sor.u32 %s29, %s30
    %p32 = scmp.eq.s32.totalorder %s31, 0
    %s34 = sadd.s32 %s33, 1
    %s35 = scalar_select %p32, %s33, %s34
    %p38 = pneg %p32
    %p39 = scmp.eq.s32.totalorder %s9, 3
    %p40 = por %p38, %p39
    %p41 = scmp.ne.s32.totalorder %s33, %s36
    %p42 = scmp.eq.s32.totalorder %s9, 0
    %p43 = por %p41, %p42
    %p44 = scmp.ne.s32.totalorder %s33, %s36
    %p45 = scmp.eq.s32.totalorder %s14, 3
    %p46 = por %p44, %p45
    %p47 = scmp.ne.s32.totalorder %s36, %s37
    %p48 = scmp.eq.s32.totalorder %s14, 0
    %p49 = por %p47, %p48
    %p50 = scmp.ne.s32.totalorder %s36, %s37
    %p51 = scmp.eq.s32.totalorder %s15, 3
    %p52 = por %p50, %p51
    %p54 = scmp.ne.s32.totalorder %s37, %s53
    %p55 = scmp.eq.s32.totalorder %s15, 0
    %p56 = por %p54, %p55
    %s57 = ssub.s32 %s16, %s28
    %p58 = scmp.eq.s32.totalorder %s57, 0
    %s60 = sadd.s32 %s59, 1
    %s61 = scalar_select %p58, %s59, %s60
    %p64 = pneg %p58
    %p65 = scmp.eq.s32.totalorder %s9, 3
    %p66 = por %p64, %p65
    %p67 = scmp.ne.s32.totalorder %s59, %s62
    %p68 = scmp.eq.s32.totalorder %s9, 0
    %p69 = por %p67, %p68
    %p70 = scmp.ne.s32.totalorder %s59, %s62
    %p71 = scmp.eq.s32.totalorder %s14, 3
    %p72 = por %p70, %p71
    %p73 = scmp.ne.s32.totalorder %s62, %s63
    %p74 = scmp.eq.s32.totalorder %s14, 0
    %p75 = por %p73, %p74
    %p76 = scmp.ne.s32.totalorder %s62, %s63
    %p77 = scmp.eq.s32.totalorder %s15, 3
    %p78 = por %p76, %p77
    %p80 = scmp.ne.s32.totalorder %s63, %s79
    %p81 = scmp.eq.s32.totalorder %s15, 0
    %p82 = por %p80, %p81
    %s83 = ssub.s32 %s16, %s28
    %p84 = scmp.eq.s32.totalorder %s83, 0
    %s86 = sadd.s32 %s85, 1
    %s87 = scalar_select %p84, %s85, %s86
    %p90 = pneg %p84
    %p91 = scmp.eq.s32.totalorder %s9, 3
    %p92 = por %p90, %p91
    %p93 = scmp.ne.s32.totalorder %s85, %s88
    %p94 = scmp.eq.s32.totalorder %s9, 0
    %p95 = por %p93, %p94
    %p96 = scmp.ne.s32.totalorder %s85, %s88
    %p97 = scmp.eq.s32.totalorder %s14, 3
    %p98 = por %p96, %p97
    %p99 = scmp.ne.s32.totalorder %s88, %s89
    %p100 = scmp.eq.s32.totalorder %s14, 0
    %p101 = por %p99, %p100
    %p102 = scmp.ne.s32.totalorder %s88, %s89
    %p103 = scmp.eq.s32.totalorder %s15, 3
    %p104 = por %p102, %p103
    %p106 = scmp.ne.s32.totalorder %s89, %s105
    %p107 = scmp.eq.s32.totalorder %s15, 0
    %p108 = por %p106, %p107
    %s109 = ssub.s32 %s16, %s28
    %s110 = ssub.s32 %s17, %s24
    %s111 = sor.u32 %s109, %s110
    %p112 = scmp.eq.s32.totalorder %s111, 0
    %s114 = sadd.s32 %s113, 1
    %s115 = scalar_select %p112, %s113, %s114
    %p118 = pneg %p112
    %p119 = scmp.eq.s32.totalorder %s9, 3
    %p120 = por %p118, %p119
    %p121 = scmp.ne.s32.totalorder %s113, %s116
    %p122 = scmp.eq.s32.totalorder %s9, 0
    %p123 = por %p121, %p122
    %p124 = scmp.ne.s32.totalorder %s113, %s116
    %p125 = scmp.eq.s32.totalorder %s14, 3
    %p126 = por %p124, %p125
    %p127 = scmp.ne.s32.totalorder %s116, %s117
    %p128 = scmp.eq.s32.totalorder %s14, 0
    %p129 = por %p127, %p128
    %p130 = scmp.ne.s32.totalorder %s116, %s117
    %p131 = scmp.eq.s32.totalorder %s15, 3
    %p132 = por %p130, %p131
    %p134 = scmp.ne.s32.totalorder %s117, %s133
    %p135 = scmp.eq.s32.totalorder %s15, 0
    %p136 = por %p134, %p135
    %p137 = scmp.le.s32.totalorder 1, %s9
    %p138 = scmp.lt.s32.totalorder %s9, 5
    %p139 = pnand %p137, %p138
    %p140 = pneg %p139
    // Predicated region
    $region9: #{transformer_pose_forward.14} parent=5 // pred_check
      _
    $region10: #{transformer_pose_forward.14} parent=5 // pred_check_branch
      %142 = sbr.rel (%p139) target = $region12
    $region11: #{transformer_pose_forward.14} parent=5 // pred_region
      %s143 = ssub.s32 %s9, 1
    $region12: #{transformer_pose_forward.14} parent=5 // pred_fallthru
      _
    %p144 = scmp.lt.s32.totalorder %s9, 4
    // Predicated region
    $region13: #{transformer_pose_forward.14} parent=5 // pred_check
      %p145 = pneg %p144
    $region14: #{transformer_pose_forward.14} parent=5 // pred_check_branch
      %147 = sbr.rel (%p145) target = $region16
    $region15: #{transformer_pose_forward.14} parent=5 // pred_region
      // Predicated region
      $region17: #{transformer_pose_forward.14} parent=15 // pred_check
        %p148 = pneg %p43
      $region18: #{transformer_pose_forward.14} parent=15 // pred_check_branch
        %150 = sbr.rel (%p148) target = $region20
      $region19: #{transformer_pose_forward.14} parent=15 // pred_region
        %s151 = smul.u32 4, %s17
        %p152 = scmp.lt.s32.totalorder %s16, 3
        %s153 = scalar_select %p152, %s16, 3
        %p154 = scmp.lt.s32.totalorder %s151, 3
        %s155 = scalar_select %p154, %s151, 3
        %s156 = smul.addr %s153, 4
        %s157 = sadd.s32 %s155, %s156
        %s158 = smul.addr %s157, 8
        %s159 = scalar_lea.vmem %s0, %s158
        %s160 = smul.u32 4, %s17
      $region20: #{transformer_pose_forward.14} parent=15 // pred_fallthru
        _
      // Predicated region
      $region21: #{transformer_pose_forward.14} parent=15 // pred_check
        %p161 = pneg %p69
      $region22: #{transformer_pose_forward.14} parent=15 // pred_check_branch
        %163 = sbr.rel (%p161) target = $region24
      $region23: #{transformer_pose_forward.14} parent=15 // pred_region
        %p164 = scmp.lt.s32.totalorder %s16, 3
        %s165 = scalar_select %p164, %s16, 3
        %s166 = smul.addr %s165, 16
        %s167 = smul.addr %s166, 4
        %s168 = scalar_lea.vmem %s1, %s167
      $region24: #{transformer_pose_forward.14} parent=15 // pred_fallthru
        _
      // Predicated region
      $region25: #{transformer_pose_forward.14} parent=15 // pred_check
        %p169 = pneg %p95
      $region26: #{transformer_pose_forward.14} parent=15 // pred_check_branch
        %171 = sbr.rel (%p169) target = $region28
      $region27: #{transformer_pose_forward.14} parent=15 // pred_region
        %p172 = scmp.lt.s32.totalorder %s16, 3
        %s173 = scalar_select %p172, %s16, 3
        %s174 = scalar_lea.vmem %s2, %s173
      $region28: #{transformer_pose_forward.14} parent=15 // pred_fallthru
        _
    $region16: #{transformer_pose_forward.14} parent=5 // pred_fallthru
      _
    %p175 = scmp.le.s32.totalorder 1, %s9
    %p176 = scmp.lt.s32.totalorder %s9, 5
    %p177 = pnand %p175, %p176
    %p178 = pneg %p177
    // Predicated region
    $region29: #{transformer_pose_forward.14} parent=5 // pred_check
      _
    $region30: #{transformer_pose_forward.14} parent=5 // pred_check_branch
      %180 = sbr.rel (%p177) target = $region32
    $region31: #{transformer_pose_forward.14} parent=5 // pred_region
      %s181 = ssub.s32 %s9, 1
      %s182 = smul.u32 4, %s19
      %p183 = scmp.lt.s32.totalorder %s18, 3
      %s184 = scalar_select %p183, %s18, 3
      %p185 = scmp.lt.s32.totalorder %s182, 3
      %s186 = scalar_select %p185, %s182, 3
      %s187 = smul.addr %s184, 4
      %s188 = sadd.s32 %s186, %s187
      %s189 = smul.addr %s188, 8
      %s190 = scalar_lea.vmem %s0, %s189
      %p191 = pneg %p49
      %p192 = pneg %p46
      %p193 = scmp.lt.s32.totalorder %s18, 3
      %s194 = scalar_select %p193, %s18, 3
      %s195 = smul.addr %s194, 16
      %s196 = smul.addr %s195, 4
      %s197 = scalar_lea.vmem %s1, %s196
      %p198 = pneg %p75
      %p199 = pneg %p72
      %p200 = scmp.lt.s32.totalorder %s18, 3
      %s201 = scalar_select %p200, %s18, 3
      %s202 = scalar_lea.vmem %s2, %s201
      %p203 = pneg %p101
      %p204 = pneg %p98
      %p205 = pneg %p129
      %p206 = pneg %p126
      %s207 = smul.u32 4, %s19
      %p208 = scmp.lt.s32.totalorder %s18, 3
      %s209 = scalar_select %p208, %s18, 3
      %p210 = scmp.lt.s32.totalorder %s207, 3
      %s211 = scalar_select %p210, %s207, 3
      %s212 = smul.addr %s209, 4
      %s213 = sadd.s32 %s211, %s212
      %s214 = smul.addr %s213, 8
      %s215 = scalar_lea.vmem %s3, %s214
      %s216 = smul.u32 4, %s19
      %p217 = scmp.lt.s32.totalorder %s18, 3
      %s218 = scalar_select %p217, %s18, 3
      %p219 = scmp.lt.s32.totalorder %s216, 3
      %s220 = scalar_select %p219, %s216, 3
      %s221 = smul.addr %s218, 4
      %s222 = sadd.s32 %s220, %s221
      %s223 = smul.addr %s222, 8
      %s224 = scalar_lea.vmem %s0, %s223
      %s225 = smul.u32 4, %s19
      %p226 = scmp.lt.s32.totalorder %s18, 3
      %s227 = scalar_select %p226, %s18, 3
      %s228 = smul.addr %s227, 16
      %s229 = smul.addr %s228, 4
      %s230 = scalar_lea.vmem %s1, %s229
      %p231 = scmp.lt.s32.totalorder %s18, 3
      %s232 = scalar_select %p231, %s18, 3
      %s233 = scalar_lea.vmem %s2, %s232
      %s234 = smul.u32 4, %s19
      %p235 = scmp.lt.s32.totalorder %s18, 3
      %s236 = scalar_select %p235, %s18, 3
      %p237 = scmp.lt.s32.totalorder %s234, 3
      %s238 = scalar_select %p237, %s234, 3
      %s239 = smul.addr %s236, 4
      %s240 = sadd.s32 %s238, %s239
      %s241 = smul.addr %s240, 8
      %s242 = scalar_lea.vmem %s3, %s241
      %s243 = smul.u32 4, %s19
      %v244 = vld [vmem:[%s224] sm:$0xff]
      %v245 = vld [vmem:[%s224 + $0x8] sm:$0xff]
      %v246 = vld [vmem:[%s224 + $0x10] sm:$0xff]
      %v247 = vld [vmem:[%s224 + $0x18] sm:$0xff]
      %v248 = vpack.c.bf16 %v245, %v244
      %v249 = vpack.c.bf16 %v247, %v246
      %v250 = vld [vmem:[%s230] sm:$0xf]
      %v251 = vld [vmem:[%s230 + $0x4] sm:$0xf]
      %v252 = vld [vmem:[%s230 + $0x8] sm:$0xf]
      %v253 = vld [vmem:[%s230 + $0xc] sm:$0xf]
      %v254 = vld [vmem:[%s230 + $0x10] sm:$0xf]
      %v255 = vld [vmem:[%s230 + $0x14] sm:$0xf]
      %v256 = vld [vmem:[%s230 + $0x18] sm:$0xf]
      %v257 = vld [vmem:[%s230 + $0x1c] sm:$0xf]
      %v258 = vld [vmem:[%s230 + $0x20] sm:$0xf]
      %v259 = vld [vmem:[%s230 + $0x24] sm:$0xf]
      %v260 = vld [vmem:[%s230 + $0x28] sm:$0xf]
      %v261 = vld [vmem:[%s230 + $0x2c] sm:$0xf]
      %v262 = vld [vmem:[%s230 + $0x30] sm:$0xf]
      %v263 = vld [vmem:[%s230 + $0x34] sm:$0xf]
      %v264 = vld [vmem:[%s230 + $0x38] sm:$0xf]
      %v265 = vld [vmem:[%s230 + $0x3c] sm:$0xf]
      %v266 = vld [vmem:[%s233] sm:$0x1]
      %v268 = vperm.slane %v266, 0
      %v286 = vunpack.c.l.b16 %v250
      %v287 = vunpack.c.l.b16 %v251
      %v288 = vunpack.c.l.b16 %v252
      %v289 = vunpack.c.l.b16 %v253
      %v290 = vunpack.c.l.b16 %v254
      %v291 = vunpack.c.l.b16 %v255
      %v292 = vunpack.c.l.b16 %v256
      %v293 = vunpack.c.l.b16 %v257
      %v294 = vunpack.c.l.b16 %v258
      %v295 = vunpack.c.l.b16 %v259
      %v296 = vunpack.c.l.b16 %v260
      %v297 = vunpack.c.l.b16 %v261
      %v298 = vunpack.c.l.b16 %v262
      %v299 = vunpack.c.l.b16 %v263
      %v300 = vunpack.c.l.b16 %v264
      %v301 = vunpack.c.l.b16 %v265
      %v302 = vpack.c.b16 %v287, %v286
      %v303 = vpack.c.b16 %v289, %v288
      %v304 = vpack.c.b16 %v291, %v290
      %v305 = vpack.c.b16 %v293, %v292
      %v306 = vpack.c.b16 %v295, %v294
      %v307 = vpack.c.b16 %v297, %v296
      %v308 = vpack.c.b16 %v299, %v298
      %v309 = vpack.c.b16 %v301, %v300
      %318 = vmatpush.bf16.msra.mxu0 %v309
      %319 = vmatpush.bf16.msra.mxu0 %v308
      %320 = vmatpush.bf16.msra.mxu0 %v307
      %321 = vmatpush.bf16.msra.mxu0 %v306
      %322 = vmatpush.bf16.msra.mxu0 %v305
      %323 = vmatpush.bf16.msra.mxu0 %v304
      %324 = vmatpush.bf16.msra.mxu0 %v303
      %325 = vmatpush.bf16.msra.mxu0 %v302
      %326 = vmatmul.bf16.gmra.mxu0 %v248
      %v327 = vpop.f32.mrf.mxu0
      %v328 = vadd.f32 %v268, %v327
      %v329 = vpop.f32.mrf.mxu0
      %v330 = vadd.f32 %v268, %v329
      %331 = vmatmul.bf16.gmra.mxu0 %v249
      %v332 = vpop.f32.mrf.mxu0
      %v333 = vadd.f32 %v268, %v332
      %v334 = vpop.f32.mrf.mxu0
      %v335 = vadd.f32 %v268, %v334
      %336 = vdwg.mxu0
      %v337 = vmax.f32 %v328, 0.0
      %v338 = vmax.f32 %v330, 0.0
      %v339 = vmax.f32 %v333, 0.0
      %v340 = vmax.f32 %v335, 0.0
      %vm341 = vcmask 261120
      %342 = vst.msk [vmem:[%s242] sm:$0xff] %vm341, %v337
      %343 = vst.msk [vmem:[%s242 + $0x8] sm:$0xff] %vm341, %v338
      %344 = vst.msk [vmem:[%s242 + $0x10] sm:$0xff] %vm341, %v339
      %345 = vst.msk [vmem:[%s242 + $0x18] sm:$0xff] %vm341, %v340
      %s346 = smul.u32 4, %s19
      %p347 = scmp.lt.s32.totalorder %s18, 3
      %s348 = scalar_select %p347, %s18, 3
      %p349 = scmp.lt.s32.totalorder %s346, 3
      %s350 = scalar_select %p349, %s346, 3
      %s351 = smul.addr %s348, 4
      %s352 = sadd.s32 %s350, %s351
      %s353 = smul.addr %s352, 8
      %s354 = scalar_lea.vmem %s3, %s353
      // Predicated region
      $region33: #{transformer_pose_forward.14} parent=31 // pred_check
        %p355 = pneg %p126
      $region34: #{transformer_pose_forward.14} parent=31 // pred_check_branch
        %357 = sbr.rel (%p355) target = $region36
      $region35: #{transformer_pose_forward.14} parent=31 // pred_region
        %s358 = smul.u32 4, %s19
      $region36: #{transformer_pose_forward.14} parent=31 // pred_fallthru
        _
    $region32: #{transformer_pose_forward.14} parent=5 // pred_fallthru
      _
    %p359 = scmp.le.s32.totalorder 2, %s9
    // Predicated region
    $region37: #{transformer_pose_forward.14} parent=5 // pred_check
      %p360 = pneg %p359
    $region38: #{transformer_pose_forward.14} parent=5 // pred_check_branch
      %362 = sbr.rel (%p360) target = $region40
    $region39: #{transformer_pose_forward.14} parent=5 // pred_region
      %s363 = ssub.s32 %s9, 2
      // Predicated region
      $region41: #{transformer_pose_forward.14} parent=39 // pred_check
        %p364 = pneg %p132
      $region42: #{transformer_pose_forward.14} parent=39 // pred_check_branch
        %366 = sbr.rel (%p364) target = $region44
      $region43: #{transformer_pose_forward.14} parent=39 // pred_region
        %s367 = smul.u32 4, %s21
        %p368 = scmp.lt.s32.totalorder %s20, 3
        %s369 = scalar_select %p368, %s20, 3
        %p370 = scmp.lt.s32.totalorder %s367, 3
        %s371 = scalar_select %p370, %s367, 3
        %s372 = smul.addr %s369, 4
        %s373 = sadd.s32 %s371, %s372
        %s374 = smul.addr %s373, 8
        %s375 = scalar_lea.vmem %s3, %s374
      $region44: #{transformer_pose_forward.14} parent=39 // pred_fallthru
        _
    $region40: #{transformer_pose_forward.14} parent=5 // pred_fallthru
      _
  $region6: #{transformer_pose_forward.14} parent=0 // loop_footer
    %s13 = sadd.s32 1, %s9
  $region7: #{transformer_pose_forward.14} parent=0 // loop_footer_branch
    %8 = sbr.rel target = $region3
  $region8: #{transformer_pose_forward.14} parent=0 // loop_exit
    _

// kernel: transformer_pose_forward.15
$region0: #{transformer_pose_forward.15}
  #allocation0 [shape = 'u32[]', space=smem, size = 0x4, offset = 0x4, fixed_abs, tag = 'smem constant byte address 0x4 - core index']
  #allocation1 [shape = 'u32[72,128]{1,0:T(1,128)}', space=vmem, size = 0x9000, scoped, tag = 'internal scratch']
  %s0 = inlined_call_operand.vmem [shape: f32[4,128,128], index: 0, kind: input, shape index: {}]
  %s1 = inlined_call_operand.vmem [shape: bf16[4,128,32], index: 1, kind: input, shape index: {}]
  %s2 = inlined_call_operand.vmem [shape: f32[4,1,32], index: 2, kind: input, shape index: {}]
  %s3 = inlined_call_operand.vmem [shape: f32[32,8], index: 3, kind: input, shape index: {}]
  %s4 = inlined_call_operand.vmem [shape: f32[1,8], index: 4, kind: input, shape index: {}]
  %s5 = inlined_call_operand.vmem [shape: f32[4,128,8], index: 5, kind: output, shape index: {}]
  %s6 = sld [smem:[#allocation0]]
  $region53: #{transformer_pose_forward.15} parent=0
    _
  %s8 = ssub.s32 1, %s6
  %s9 = scalar_select 0, %s8, %s6
  loop: start=0, step=1, limit=6
  $region2: #{transformer_pose_forward.15} parent=0 // loop_pre_header
    _
  $region3: #{transformer_pose_forward.15} parent=0 // loop_header
    %s11 = sphi 0, %s15
    %p12 = scmp.ge.s32.totalorder %s11, 6
    %s18 = sphi 0, %s30
    %s19 = sphi 0, %s26
    %s20 = sphi 0, %s18
    %s21 = sphi 0, %s19
    %s22 = sphi 0, %s20
    %s23 = sphi 0, %s21
    %s35 = sphi 0, %s37
    %s38 = sphi 0, %s35
    %s39 = sphi 0, %s38
    %s55 = sphi 0, %s39
    %s61 = sphi 0, %s63
    %s64 = sphi 0, %s61
    %s65 = sphi 0, %s64
    %s81 = sphi 0, %s65
    %s87 = sphi 0, %s89
    %s90 = sphi 0, %s87
    %s91 = sphi 0, %s90
    %s107 = sphi 0, %s91
    %s111 = sphi 0, %s111
    %s113 = sphi 0, %s111
    %s114 = sphi 0, %s113
    %s128 = sphi 0, %s114
    %s132 = sphi 0, %s132
    %s134 = sphi 0, %s132
    %s135 = sphi 0, %s134
    %s149 = sphi 0, %s135
    %s157 = sphi 0, %s159
    %s160 = sphi 0, %s157
    %s161 = sphi 0, %s160
    %s177 = sphi 0, %s161
  $region4: #{transformer_pose_forward.15} parent=0 // loop_header_branch
    %14 = sbr.rel (%p12) target = $region8
  $region5: #{transformer_pose_forward.15} parent=0 // loop_body
    %s16 = ssub.s32 %s11, 1
    %s17 = ssub.s32 %s11, 2
    %s24 = sadd.s32 1, %s19
    %p25 = scmp.ge.s32.totalorder %s24, 1
    %s26 = scalar_select %p25, 0, %s24
    %s27 = sadd.s32 1, %s18
    %s28 = scalar_select %p25, %s27, %s18
    %p29 = scmp.ge.s32.totalorder %s28, 4
    %s30 = scalar_select %p29, 0, %s28
    %s31 = ssub.s32 %s18, %s30
    %s32 = ssub.s32 %s19, %s26
    %s33 = sor.u32 %s31, %s32
    %p34 = scmp.eq.s32.totalorder %s33, 0
    %s36 = sadd.s32 %s35, 1
    %s37 = scalar_select %p34, %s35, %s36
    %p40 = pneg %p34
    %p41 = scmp.eq.s32.totalorder %s11, 3
    %p42 = por %p40, %p41
    %p43 = scmp.ne.s32.totalorder %s35, %s38
    %p44 = scmp.eq.s32.totalorder %s11, 0
    %p45 = por %p43, %p44
    %p46 = scmp.ne.s32.totalorder %s35, %s38
    %p47 = scmp.eq.s32.totalorder %s16, 3
    %p48 = por %p46, %p47
    %p49 = scmp.ne.s32.totalorder %s38, %s39
    %p50 = scmp.eq.s32.totalorder %s16, 0
    %p51 = por %p49, %p50
    %p52 = scmp.ne.s32.totalorder %s38, %s39
    %p53 = scmp.eq.s32.totalorder %s17, 3
    %p54 = por %p52, %p53
    %p56 = scmp.ne.s32.totalorder %s39, %s55
    %p57 = scmp.eq.s32.totalorder %s17, 0
    %p58 = por %p56, %p57
    %s59 = ssub.s32 %s18, %s30
    %p60 = scmp.eq.s32.totalorder %s59, 0
    %s62 = sadd.s32 %s61, 1
    %s63 = scalar_select %p60, %s61, %s62
    %p66 = pneg %p60
    %p67 = scmp.eq.s32.totalorder %s11, 3
    %p68 = por %p66, %p67
    %p69 = scmp.ne.s32.totalorder %s61, %s64
    %p70 = scmp.eq.s32.totalorder %s11, 0
    %p71 = por %p69, %p70
    %p72 = scmp.ne.s32.totalorder %s61, %s64
    %p73 = scmp.eq.s32.totalorder %s16, 3
    %p74 = por %p72, %p73
    %p75 = scmp.ne.s32.totalorder %s64, %s65
    %p76 = scmp.eq.s32.totalorder %s16, 0
    %p77 = por %p75, %p76
    %p78 = scmp.ne.s32.totalorder %s64, %s65
    %p79 = scmp.eq.s32.totalorder %s17, 3
    %p80 = por %p78, %p79
    %p82 = scmp.ne.s32.totalorder %s65, %s81
    %p83 = scmp.eq.s32.totalorder %s17, 0
    %p84 = por %p82, %p83
    %s85 = ssub.s32 %s18, %s30
    %p86 = scmp.eq.s32.totalorder %s85, 0
    %s88 = sadd.s32 %s87, 1
    %s89 = scalar_select %p86, %s87, %s88
    %p92 = pneg %p86
    %p93 = scmp.eq.s32.totalorder %s11, 3
    %p94 = por %p92, %p93
    %p95 = scmp.ne.s32.totalorder %s87, %s90
    %p96 = scmp.eq.s32.totalorder %s11, 0
    %p97 = por %p95, %p96
    %p98 = scmp.ne.s32.totalorder %s87, %s90
    %p99 = scmp.eq.s32.totalorder %s16, 3
    %p100 = por %p98, %p99
    %p101 = scmp.ne.s32.totalorder %s90, %s91
    %p102 = scmp.eq.s32.totalorder %s16, 0
    %p103 = por %p101, %p102
    %p104 = scmp.ne.s32.totalorder %s90, %s91
    %p105 = scmp.eq.s32.totalorder %s17, 3
    %p106 = por %p104, %p105
    %p108 = scmp.ne.s32.totalorder %s91, %s107
    %p109 = scmp.eq.s32.totalorder %s17, 0
    %p110 = por %p108, %p109
    %s112 = sadd.s32 %s111, 1
    %p115 = scmp.eq.s32.totalorder %s11, 3
    %p116 = scmp.ne.s32.totalorder %s111, %s113
    %p117 = scmp.eq.s32.totalorder %s11, 0
    %p118 = por %p116, %p117
    %p119 = scmp.ne.s32.totalorder %s111, %s113
    %p120 = scmp.eq.s32.totalorder %s16, 3
    %p121 = por %p119, %p120
    %p122 = scmp.ne.s32.totalorder %s113, %s114
    %p123 = scmp.eq.s32.totalorder %s16, 0
    %p124 = por %p122, %p123
    %p125 = scmp.ne.s32.totalorder %s113, %s114
    %p126 = scmp.eq.s32.totalorder %s17, 3
    %p127 = por %p125, %p126
    %p129 = scmp.ne.s32.totalorder %s114, %s128
    %p130 = scmp.eq.s32.totalorder %s17, 0
    %p131 = por %p129, %p130
    %s133 = sadd.s32 %s132, 1
    %p136 = scmp.eq.s32.totalorder %s11, 3
    %p137 = scmp.ne.s32.totalorder %s132, %s134
    %p138 = scmp.eq.s32.totalorder %s11, 0
    %p139 = por %p137, %p138
    %p140 = scmp.ne.s32.totalorder %s132, %s134
    %p141 = scmp.eq.s32.totalorder %s16, 3
    %p142 = por %p140, %p141
    %p143 = scmp.ne.s32.totalorder %s134, %s135
    %p144 = scmp.eq.s32.totalorder %s16, 0
    %p145 = por %p143, %p144
    %p146 = scmp.ne.s32.totalorder %s134, %s135
    %p147 = scmp.eq.s32.totalorder %s17, 3
    %p148 = por %p146, %p147
    %p150 = scmp.ne.s32.totalorder %s135, %s149
    %p151 = scmp.eq.s32.totalorder %s17, 0
    %p152 = por %p150, %p151
    %s153 = ssub.s32 %s18, %s30
    %s154 = ssub.s32 %s19, %s26
    %s155 = sor.u32 %s153, %s154
    %p156 = scmp.eq.s32.totalorder %s155, 0
    %s158 = sadd.s32 %s157, 1
    %s159 = scalar_select %p156, %s157, %s158
    %p162 = pneg %p156
    %p163 = scmp.eq.s32.totalorder %s11, 3
    %p164 = por %p162, %p163
    %p165 = scmp.ne.s32.totalorder %s157, %s160
    %p166 = scmp.eq.s32.totalorder %s11, 0
    %p167 = por %p165, %p166
    %p168 = scmp.ne.s32.totalorder %s157, %s160
    %p169 = scmp.eq.s32.totalorder %s16, 3
    %p170 = por %p168, %p169
    %p171 = scmp.ne.s32.totalorder %s160, %s161
    %p172 = scmp.eq.s32.totalorder %s16, 0
    %p173 = por %p171, %p172
    %p174 = scmp.ne.s32.totalorder %s160, %s161
    %p175 = scmp.eq.s32.totalorder %s17, 3
    %p176 = por %p174, %p175
    %p178 = scmp.ne.s32.totalorder %s161, %s177
    %p179 = scmp.eq.s32.totalorder %s17, 0
    %p180 = por %p178, %p179
    %p181 = scmp.le.s32.totalorder 1, %s11
    %p182 = scmp.lt.s32.totalorder %s11, 5
    %p183 = pnand %p181, %p182
    %p184 = pneg %p183
    // Predicated region
    $region9: #{transformer_pose_forward.15} parent=5 // pred_check
      _
    $region10: #{transformer_pose_forward.15} parent=5 // pred_check_branch
      %186 = sbr.rel (%p183) target = $region12
    $region11: #{transformer_pose_forward.15} parent=5 // pred_region
      %s187 = ssub.s32 %s11, 1
      // Predicated region
      $region13: #{transformer_pose_forward.15} parent=11 // pred_check
        %p188 = pneg %p124
      $region14: #{transformer_pose_forward.15} parent=11 // pred_check_branch
        %190 = sbr.rel (%p188) target = $region16
      $region15: #{transformer_pose_forward.15} parent=11 // pred_region
        _
      $region16: #{transformer_pose_forward.15} parent=11 // pred_fallthru
        _
      // Predicated region
      $region17: #{transformer_pose_forward.15} parent=11 // pred_check
        %p191 = pneg %p145
      $region18: #{transformer_pose_forward.15} parent=11 // pred_check_branch
        %193 = sbr.rel (%p191) target = $region20
      $region19: #{transformer_pose_forward.15} parent=11 // pred_region
        _
      $region20: #{transformer_pose_forward.15} parent=11 // pred_fallthru
        _
    $region12: #{transformer_pose_forward.15} parent=5 // pred_fallthru
      _
    %p194 = scmp.lt.s32.totalorder %s11, 4
    // Predicated region
    $region21: #{transformer_pose_forward.15} parent=5 // pred_check
      %p195 = pneg %p194
    $region22: #{transformer_pose_forward.15} parent=5 // pred_check_branch
      %197 = sbr.rel (%p195) target = $region24
    $region23: #{transformer_pose_forward.15} parent=5 // pred_region
      // Predicated region
      $region25: #{transformer_pose_forward.15} parent=23 // pred_check
        %p198 = pneg %p45
      $region26: #{transformer_pose_forward.15} parent=23 // pred_check_branch
        %200 = sbr.rel (%p198) target = $region28
      $region27: #{transformer_pose_forward.15} parent=23 // pred_region
        %s201 = smul.u32 16, %s19
        %p202 = scmp.lt.s32.totalorder %s18, 3
        %s203 = scalar_select %p202, %s18, 3
        %p204 = scmp.lt.s32.totalorder %s201, 15
        %s205 = scalar_select %p204, %s201, 15
        %s206 = smul.addr %s203, 16
        %s207 = sadd.s32 %s205, %s206
        %s208 = smul.addr %s207, 8
        %s209 = scalar_lea.vmem %s0, %s208
        %s210 = smul.u32 16, %s19
      $region28: #{transformer_pose_forward.15} parent=23 // pred_fallthru
        _
      // Predicated region
      $region29: #{transformer_pose_forward.15} parent=23 // pred_check
        %p211 = pneg %p71
      $region30: #{transformer_pose_forward.15} parent=23 // pred_check_branch
        %213 = sbr.rel (%p211) target = $region32
      $region31: #{transformer_pose_forward.15} parent=23 // pred_region
        %p214 = scmp.lt.s32.totalorder %s18, 3
        %s215 = scalar_select %p214, %s18, 3
        %s216 = smul.addr %s215, 16
        %s217 = smul.addr %s216, 4
        %s218 = scalar_lea.vmem %s1, %s217
      $region32: #{transformer_pose_forward.15} parent=23 // pred_fallthru
        _
      // Predicated region
      $region33: #{transformer_pose_forward.15} parent=23 // pred_check
        %p219 = pneg %p97
      $region34: #{transformer_pose_forward.15} parent=23 // pred_check_branch
        %221 = sbr.rel (%p219) target = $region36
      $region35: #{transformer_pose_forward.15} parent=23 // pred_region
        %p222 = scmp.lt.s32.totalorder %s18, 3
        %s223 = scalar_select %p222, %s18, 3
        %s224 = scalar_lea.vmem %s2, %s223
      $region36: #{transformer_pose_forward.15} parent=23 // pred_fallthru
        _
    $region24: #{transformer_pose_forward.15} parent=5 // pred_fallthru
      _
    %p225 = scmp.le.s32.totalorder 1, %s11
    %p226 = scmp.lt.s32.totalorder %s11, 5
    %p227 = pnand %p225, %p226
    %p228 = pneg %p227
    // Predicated region
    $region37: #{transformer_pose_forward.15} parent=5 // pred_check
      _
    $region38: #{transformer_pose_forward.15} parent=5 // pred_check_branch
      %230 = sbr.rel (%p227) target = $region40
    $region39: #{transformer_pose_forward.15} parent=5 // pred_region
      %s231 = ssub.s32 %s11, 1
      %s232 = smul.u32 16, %s21
      %p233 = scmp.lt.s32.totalorder %s20, 3
      %s234 = scalar_select %p233, %s20, 3
      %p235 = scmp.lt.s32.totalorder %s232, 15
      %s236 = scalar_select %p235, %s232, 15
      %s237 = smul.addr %s234, 16
      %s238 = sadd.s32 %s236, %s237
      %s239 = smul.addr %s238, 8
      %s240 = scalar_lea.vmem %s0, %s239
      %p241 = pneg %p51
      %p242 = pneg %p48
      %p243 = scmp.lt.s32.totalorder %s20, 3
      %s244 = scalar_select %p243, %s20, 3
      %s245 = smul.addr %s244, 16
      %s246 = smul.addr %s245, 4
      %s247 = scalar_lea.vmem %s1, %s246
      %p248 = pneg %p77
      %p249 = pneg %p74
      %p250 = scmp.lt.s32.totalorder %s20, 3
      %s251 = scalar_select %p250, %s20, 3
      %s252 = scalar_lea.vmem %s2, %s251
      %p253 = pneg %p103
      %p254 = pneg %p100
      %p255 = pneg %p124
      %p256 = pneg %p121
      %p257 = pneg %p145
      %p258 = pneg %p142
      %p259 = pneg %p173
      %p260 = pneg %p170
      %s261 = smul.u32 16, %s21
      %p262 = scmp.lt.s32.totalorder %s20, 3
      %s263 = scalar_select %p262, %s20, 3
      %p264 = scmp.lt.s32.totalorder %s261, 15
      %s265 = scalar_select %p264, %s261, 15
      %s266 = smul.addr %s263, 16
      %s267 = sadd.s32 %s265, %s266
      %s268 = smul.addr %s267, 8
      %s269 = scalar_lea.vmem %s5, %s268
      %s270 = smul.u32 16, %s21
      %p271 = scmp.lt.s32.totalorder %s20, 3
      %s272 = scalar_select %p271, %s20, 3
      %p273 = scmp.lt.s32.totalorder %s270, 15
      %s274 = scalar_select %p273, %s270, 15
      %s275 = smul.addr %s272, 16
      %s276 = sadd.s32 %s274, %s275
      %s277 = smul.addr %s276, 8
      %s278 = scalar_lea.vmem %s0, %s277
      %s279 = smul.u32 16, %s21
      %p280 = scmp.lt.s32.totalorder %s20, 3
      %s281 = scalar_select %p280, %s20, 3
      %s282 = smul.addr %s281, 16
      %s283 = smul.addr %s282, 4
      %s284 = scalar_lea.vmem %s1, %s283
      %p285 = scmp.lt.s32.totalorder %s20, 3
      %s286 = scalar_select %p285, %s20, 3
      %s287 = scalar_lea.vmem %s2, %s286
      %s288 = smul.u32 16, %s21
      %p289 = scmp.lt.s32.totalorder %s20, 3
      %s290 = scalar_select %p289, %s20, 3
      %p291 = scmp.lt.s32.totalorder %s288, 15
      %s292 = scalar_select %p291, %s288, 15
      %s293 = smul.addr %s290, 16
      %s294 = sadd.s32 %s292, %s293
      %s295 = smul.addr %s294, 8
      %s296 = scalar_lea.vmem %s5, %s295
      %s297 = smul.u32 16, %s21
      %v298 = vld [vmem:[%s278] sm:$0xff]
      %v299 = vld [vmem:[%s278 + $0x8] sm:$0xff]
      %v300 = vld [vmem:[%s278 + $0x10] sm:$0xff]
      %v301 = vld [vmem:[%s278 + $0x18] sm:$0xff]
      %v302 = vld [vmem:[%s278 + $0x20] sm:$0xff]
      %v303 = vld [vmem:[%s278 + $0x28] sm:$0xff]
      %v304 = vld [vmem:[%s278 + $0x30] sm:$0xff]
      %v305 = vld [vmem:[%s278 + $0x38] sm:$0xff]
      %v306 = vld [vmem:[%s278 + $0x40] sm:$0xff]
      %v307 = vld [vmem:[%s278 + $0x48] sm:$0xff]
      %v308 = vld [vmem:[%s278 + $0x50] sm:$0xff]
      %v309 = vld [vmem:[%s278 + $0x58] sm:$0xff]
      %v310 = vld [vmem:[%s278 + $0x60] sm:$0xff]
      %v311 = vld [vmem:[%s278 + $0x68] sm:$0xff]
      %v312 = vld [vmem:[%s278 + $0x70] sm:$0xff]
      %v313 = vld [vmem:[%s278 + $0x78] sm:$0xff]
      %v314 = vpack.c.bf16 %v299, %v298
      %v315 = vpack.c.bf16 %v301, %v300
      %v316 = vpack.c.bf16 %v303, %v302
      %v317 = vpack.c.bf16 %v305, %v304
      %v318 = vpack.c.bf16 %v307, %v306
      %v319 = vpack.c.bf16 %v309, %v308
      %v320 = vpack.c.bf16 %v311, %v310
      %v321 = vpack.c.bf16 %v313, %v312
      %v322 = vld [vmem:[%s284] sm:$0xf]
      %v323 = vld [vmem:[%s284 + $0x4] sm:$0xf]
      %v324 = vld [vmem:[%s284 + $0x8] sm:$0xf]
      %v325 = vld [vmem:[%s284 + $0xc] sm:$0xf]
      %v326 = vld [vmem:[%s284 + $0x10] sm:$0xf]
      %v327 = vld [vmem:[%s284 + $0x14] sm:$0xf]
      %v328 = vld [vmem:[%s284 + $0x18] sm:$0xf]
      %v329 = vld [vmem:[%s284 + $0x1c] sm:$0xf]
      %v330 = vld [vmem:[%s284 + $0x20] sm:$0xf]
      %v331 = vld [vmem:[%s284 + $0x24] sm:$0xf]
      %v332 = vld [vmem:[%s284 + $0x28] sm:$0xf]
      %v333 = vld [vmem:[%s284 + $0x2c] sm:$0xf]
      %v334 = vld [vmem:[%s284 + $0x30] sm:$0xf]
      %v335 = vld [vmem:[%s284 + $0x34] sm:$0xf]
      %v336 = vld [vmem:[%s284 + $0x38] sm:$0xf]
      %v337 = vld [vmem:[%s284 + $0x3c] sm:$0xf]
      %v338 = vld [vmem:[%s287] sm:$0x1]
      %v340 = vperm.slane %v338, 0
      %v358 = vunpack.c.l.b16 %v322
      %v359 = vunpack.c.l.b16 %v323
      %v360 = vunpack.c.l.b16 %v324
      %v361 = vunpack.c.l.b16 %v325
      %v362 = vunpack.c.l.b16 %v326
      %v363 = vunpack.c.l.b16 %v327
      %v364 = vunpack.c.l.b16 %v328
      %v365 = vunpack.c.l.b16 %v329
      %v366 = vunpack.c.l.b16 %v330
      %v367 = vunpack.c.l.b16 %v331
      %v368 = vunpack.c.l.b16 %v332
      %v369 = vunpack.c.l.b16 %v333
      %v370 = vunpack.c.l.b16 %v334
      %v371 = vunpack.c.l.b16 %v335
      %v372 = vunpack.c.l.b16 %v336
      %v373 = vunpack.c.l.b16 %v337
      %v374 = vpack.c.b16 %v359, %v358
      %v375 = vpack.c.b16 %v361, %v360
      %v376 = vpack.c.b16 %v363, %v362
      %v377 = vpack.c.b16 %v365, %v364
      %v378 = vpack.c.b16 %v367, %v366
      %v379 = vpack.c.b16 %v369, %v368
      %v380 = vpack.c.b16 %v371, %v370
      %v381 = vpack.c.b16 %v373, %v372
      %390 = vmatpush.bf16.msra.mxu0 %v381
      %391 = vmatpush.bf16.msra.mxu0 %v380
      %392 = vmatpush.bf16.msra.mxu0 %v379
      %393 = vmatpush.bf16.msra.mxu0 %v378
      %394 = vmatpush.bf16.msra.mxu0 %v377
      %395 = vmatpush.bf16.msra.mxu0 %v376
      %396 = vmatpush.bf16.msra.mxu0 %v375
      %397 = vmatpush.bf16.msra.mxu0 %v374
      %398 = vmatmul.bf16.gmra.mxu0 %v314
      %v399 = vpop.f32.mrf.mxu0
      %v400 = vadd.f32 %v340, %v399
      %v401 = vpop.f32.mrf.mxu0
      %v402 = vadd.f32 %v340, %v401
      %403 = vmatmul.bf16.gmra.mxu0 %v315
      %v404 = vpop.f32.mrf.mxu0
      %v405 = vadd.f32 %v340, %v404
      %v406 = vpop.f32.mrf.mxu0
      %v407 = vadd.f32 %v340, %v406
      %408 = vmatmul.bf16.gmra.mxu0 %v316
      %v409 = vpop.f32.mrf.mxu0
      %v410 = vadd.f32 %v340, %v409
      %v411 = vpop.f32.mrf.mxu0
      %v412 = vadd.f32 %v340, %v411
      %413 = vmatmul.bf16.gmra.mxu0 %v317
      %v414 = vpop.f32.mrf.mxu0
      %v415 = vadd.f32 %v340, %v414
      %v416 = vpop.f32.mrf.mxu0
      %v417 = vadd.f32 %v340, %v416
      %418 = vmatmul.bf16.gmra.mxu0 %v318
      %v419 = vpop.f32.mrf.mxu0
      %v420 = vadd.f32 %v340, %v419
      %v421 = vpop.f32.mrf.mxu0
      %v422 = vadd.f32 %v340, %v421
      %423 = vmatmul.bf16.gmra.mxu0 %v319
      %v424 = vpop.f32.mrf.mxu0
      %v425 = vadd.f32 %v340, %v424
      %v426 = vpop.f32.mrf.mxu0
      %v427 = vadd.f32 %v340, %v426
      %428 = vmatmul.bf16.gmra.mxu0 %v320
      %v429 = vpop.f32.mrf.mxu0
      %v430 = vadd.f32 %v340, %v429
      %v431 = vpop.f32.mrf.mxu0
      %v432 = vadd.f32 %v340, %v431
      %433 = vmatmul.bf16.gmra.mxu0 %v321
      %v434 = vpop.f32.mrf.mxu0
      %v435 = vadd.f32 %v340, %v434
      %v436 = vpop.f32.mrf.mxu0
      %v437 = vadd.f32 %v340, %v436
      %438 = vdwg.mxu0
      %v439 = vmax.f32 %v400, 0.0
      %v440 = vmax.f32 %v402, 0.0
      %v441 = vmax.f32 %v405, 0.0
      %v442 = vmax.f32 %v407, 0.0
      %v443 = vmax.f32 %v410, 0.0
      %v444 = vmax.f32 %v412, 0.0
      %v445 = vmax.f32 %v415, 0.0
      %v446 = vmax.f32 %v417, 0.0
      %v447 = vmax.f32 %v420, 0.0
      %v448 = vmax.f32 %v422, 0.0
      %v449 = vmax.f32 %v425, 0.0
      %v450 = vmax.f32 %v427, 0.0
      %v451 = vmax.f32 %v430, 0.0
      %v452 = vmax.f32 %v432, 0.0
      %v453 = vmax.f32 %v435, 0.0
      %v454 = vmax.f32 %v437, 0.0
      %v455 = vld [vmem:[%s3] sm:$0xff]
      %v456 = vld [vmem:[%s3 + $0x8] sm:$0xff]
      %v457 = vld [vmem:[%s3 + $0x10] sm:$0xff]
      %v458 = vld [vmem:[%s3 + $0x18] sm:$0xff]
      %v459 = vld [vmem:[%s4] sm:$0x1]
      %v461 = vperm.slane %v459, 0
      %vm463 = vcmask 261120
      %v465 = vsel %vm463, %v439, 0
      %v468 = vsel %vm463, %v440, 0
      %v471 = vsel %vm463, %v441, 0
      %v474 = vsel %vm463, %v442, 0
      %v477 = vsel %vm463, %v443, 0
      %v480 = vsel %vm463, %v444, 0
      %v483 = vsel %vm463, %v445, 0
      %v486 = vsel %vm463, %v446, 0
      %v489 = vsel %vm463, %v447, 0
      %v492 = vsel %vm463, %v448, 0
      %v495 = vsel %vm463, %v449, 0
      %v498 = vsel %vm463, %v450, 0
      %v501 = vsel %vm463, %v451, 0
      %v504 = vsel %vm463, %v452, 0
      %v507 = vsel %vm463, %v453, 0
      %v510 = vsel %vm463, %v454, 0
      %512 = vmatpush.msra.mxu0 0.0
      %513 = vmatpush.msra.mxu0 0.0
      %514 = vmatpush.msra.mxu0 0.0
      %515 = vmatpush.msra.mxu0 0.0
      %516 = vmatpush.msra.mxu0 0.0
      %517 = vmatpush.msra.mxu0 0.0
      %518 = vmatpush.msra.mxu0 0.0
      %519 = vmatpush.msra.mxu0 0.0
      %520 = vmatpush.msra.mxu0 0.0
      %521 = vmatpush.msra.mxu0 0.0
      %522 = vmatpush.msra.mxu0 0.0
      %523 = vmatpush.msra.mxu0 0.0
      %524 = vmatpush.msra.mxu0 %v458
      %525 = vmatpush.msra.mxu0 %v457
      %526 = vmatpush.msra.mxu0 %v456
      %527 = vmatpush.msra.mxu0 %v455
      %528 = vmatmul.f32.gmra.mxu0 %v465
      %v529 = vpop.f32.mrf.mxu0
      %v530 = vadd.f32 %v461, %v529
      %531 = vmatmul.f32.gmra.mxu0 %v468
      %v532 = vpop.f32.mrf.mxu0
      %v533 = vadd.f32 %v461, %v532
      %534 = vmatmul.f32.gmra.mxu0 %v471
      %v535 = vpop.f32.mrf.mxu0
      %v536 = vadd.f32 %v461, %v535
      %537 = vmatmul.f32.gmra.mxu0 %v474
      %v538 = vpop.f32.mrf.mxu0
      %v539 = vadd.f32 %v461, %v538
      %540 = vmatmul.f32.gmra.mxu0 %v477
      %v541 = vpop.f32.mrf.mxu0
      %v542 = vadd.f32 %v461, %v541
      %543 = vmatmul.f32.gmra.mxu0 %v480
      %v544 = vpop.f32.mrf.mxu0
      %v545 = vadd.f32 %v461, %v544
      %546 = vmatmul.f32.gmra.mxu0 %v483
      %v547 = vpop.f32.mrf.mxu0
      %v548 = vadd.f32 %v461, %v547
      %549 = vmatmul.f32.gmra.mxu0 %v486
      %v550 = vpop.f32.mrf.mxu0
      %v551 = vadd.f32 %v461, %v550
      %552 = vmatmul.f32.gmra.mxu0 %v489
      %v553 = vpop.f32.mrf.mxu0
      %v554 = vadd.f32 %v461, %v553
      %555 = vmatmul.f32.gmra.mxu0 %v492
      %v556 = vpop.f32.mrf.mxu0
      %v557 = vadd.f32 %v461, %v556
      %558 = vmatmul.f32.gmra.mxu0 %v495
      %v559 = vpop.f32.mrf.mxu0
      %v560 = vadd.f32 %v461, %v559
      %561 = vmatmul.f32.gmra.mxu0 %v498
      %v562 = vpop.f32.mrf.mxu0
      %v563 = vadd.f32 %v461, %v562
      %564 = vmatmul.f32.gmra.mxu0 %v501
      %v565 = vpop.f32.mrf.mxu0
      %v566 = vadd.f32 %v461, %v565
      %567 = vmatmul.f32.gmra.mxu0 %v504
      %v568 = vpop.f32.mrf.mxu0
      %v569 = vadd.f32 %v461, %v568
      %570 = vmatmul.f32.gmra.mxu0 %v507
      %v571 = vpop.f32.mrf.mxu0
      %v572 = vadd.f32 %v461, %v571
      %573 = vmatmul.f32.gmra.mxu0 %v510
      %v574 = vpop.f32.mrf.mxu0
      %v575 = vadd.f32 %v461, %v574
      %576 = vdwg.mxu0
      %vm577 = vcmask 64512
      %578 = vst.msk [vmem:[%s296] sm:$0xff] %vm577, %v530
      %579 = vst.msk [vmem:[%s296 + $0x8] sm:$0xff] %vm577, %v533
      %580 = vst.msk [vmem:[%s296 + $0x10] sm:$0xff] %vm577, %v536
      %581 = vst.msk [vmem:[%s296 + $0x18] sm:$0xff] %vm577, %v539
      %582 = vst.msk [vmem:[%s296 + $0x20] sm:$0xff] %vm577, %v542
      %583 = vst.msk [vmem:[%s296 + $0x28] sm:$0xff] %vm577, %v545
      %584 = vst.msk [vmem:[%s296 + $0x30] sm:$0xff] %vm577, %v548
      %585 = vst.msk [vmem:[%s296 + $0x38] sm:$0xff] %vm577, %v551
      %586 = vst.msk [vmem:[%s296 + $0x40] sm:$0xff] %vm577, %v554
      %587 = vst.msk [vmem:[%s296 + $0x48] sm:$0xff] %vm577, %v557
      %588 = vst.msk [vmem:[%s296 + $0x50] sm:$0xff] %vm577, %v560
      %589 = vst.msk [vmem:[%s296 + $0x58] sm:$0xff] %vm577, %v563
      %590 = vst.msk [vmem:[%s296 + $0x60] sm:$0xff] %vm577, %v566
      %591 = vst.msk [vmem:[%s296 + $0x68] sm:$0xff] %vm577, %v569
      %592 = vst.msk [vmem:[%s296 + $0x70] sm:$0xff] %vm577, %v572
      %593 = vst.msk [vmem:[%s296 + $0x78] sm:$0xff] %vm577, %v575
      %s594 = smul.u32 16, %s21
      %p595 = scmp.lt.s32.totalorder %s20, 3
      %s596 = scalar_select %p595, %s20, 3
      %p597 = scmp.lt.s32.totalorder %s594, 15
      %s598 = scalar_select %p597, %s594, 15
      %s599 = smul.addr %s596, 16
      %s600 = sadd.s32 %s598, %s599
      %s601 = smul.addr %s600, 8
      %s602 = scalar_lea.vmem %s5, %s601
      // Predicated region
      $region41: #{transformer_pose_forward.15} parent=39 // pred_check
        %p603 = pneg %p170
      $region42: #{transformer_pose_forward.15} parent=39 // pred_check_branch
        %605 = sbr.rel (%p603) target = $region44
      $region43: #{transformer_pose_forward.15} parent=39 // pred_region
        %s606 = smul.u32 16, %s21
      $region44: #{transformer_pose_forward.15} parent=39 // pred_fallthru
        _
    $region40: #{transformer_pose_forward.15} parent=5 // pred_fallthru
      _
    %p607 = scmp.le.s32.totalorder 2, %s11
    // Predicated region
    $region45: #{transformer_pose_forward.15} parent=5 // pred_check
      %p608 = pneg %p607
    $region46: #{transformer_pose_forward.15} parent=5 // pred_check_branch
      %610 = sbr.rel (%p608) target = $region48
    $region47: #{transformer_pose_forward.15} parent=5 // pred_region
      %s611 = ssub.s32 %s11, 2
      // Predicated region
      $region49: #{transformer_pose_forward.15} parent=47 // pred_check
        %p612 = pneg %p176
      $region50: #{transformer_pose_forward.15} parent=47 // pred_check_branch
        %614 = sbr.rel (%p612) target = $region52
      $region51: #{transformer_pose_forward.15} parent=47 // pred_region
        %s615 = smul.u32 16, %s23
        %p616 = scmp.lt.s32.totalorder %s22, 3
        %s617 = scalar_select %p616, %s22, 3
        %p618 = scmp.lt.s32.totalorder %s615, 15
        %s619 = scalar_select %p618, %s615, 15
        %s620 = smul.addr %s617, 16
        %s621 = sadd.s32 %s619, %s620
        %s622 = smul.addr %s621, 8
        %s623 = scalar_lea.vmem %s5, %s622
      $region52: #{transformer_pose_forward.15} parent=47 // pred_fallthru
        _
    $region48: #{transformer_pose_forward.15} parent=5 // pred_fallthru
      _
  $region6: #{transformer_pose_forward.15} parent=0 // loop_footer
    %s15 = sadd.s32 1, %s11
  $region7: #{transformer_pose_forward.15} parent=0 // loop_footer_branch
    %10 = sbr.rel target = $region3
  $region8: #{transformer_pose_forward.15} parent=0 // loop_exit
    _

</llo_original>
